<compile_context>
chip_gen: v5e
topology: v5e:2x2
jax: 0.10.0
libtpu: 0.0.40
codegen_flags: <defaults>
</compile_context>

<pallas_src>
import numpy as np
import jax
import jax.numpy as jnp
from jax import lax
from jax.experimental import pallas as pl
from jax.experimental.pallas import tpu as pltpu

CP = 128            # padded channel width -> lane-dense tiles everywhere
HIDDEN = 16         # real channel count of the synthetic Conv4 backbone
IN_CH = 3
N_BLOCKS = 4
H0 = W0 = 16        # kernel is specialized to 16x16 inputs (4 pools -> 1x1)
BN_EPS = 1e-5       # PyTorch BatchNorm2d default
MAX_IMGS = 8        # images per grid step (VMEM headroom, incl. v7x 64 MiB)


# ------------------------- trace-time constant prep ------------------------ #
def _choose_tiling(batch):
    """Images per grid step + number of steps (>= 2 steps so both v7x TCs work)."""
    imgs = min(MAX_IMGS, batch)
    while imgs > 1 and -(-batch // imgs) < 2:
        imgs //= 2
    return imgs, -(-batch // imgs)


def _make_pool_select(H, W, out_rows=None):
    """0/1 matrix S with S @ flat(H*W, C) -> flat(H/2*W/2, C).

    Picks the top-left corner of every 2x2 window (that corner holds the window
    max after the two pairwise roll-maxes done in the kernel).  `out_rows`
    optionally zero-pads the row count so downstream tiles keep >= 8 sublanes.
    """
    H2, W2 = H // 2, W // 2
    n = H2 * W2
    rows = n if out_rows is None else out_rows
    S = np.zeros((rows, H * W), np.float32)
    p2 = np.arange(n)
    src = 2 * (p2 // W2) * W + 2 * (p2 % W2)
    S[p2, src] = 1.0
    return jnp.asarray(S, jnp.bfloat16)


def _fold_block(blk):
    """Fold eval-mode BatchNorm into the conv weights/bias (PyTorch layout)."""
    w = blk["w"]                                           # (O, Cin, 3, 3)
    O, Cin = w.shape[0], w.shape[1]
    scale = blk["gamma"] / jnp.sqrt(blk["var"] + BN_EPS)
    bias = blk["beta"] + scale * (blk["b"] - blk["mean"])
    # tap t = kh*3 + kw  (dh = kh-1, dw = kw-1)
    w_taps = jnp.transpose(w, (2, 3, 1, 0)).reshape(9, Cin, O) * scale[None, None, :]
    return w_taps, bias


def prepare_constants(params):
    """Hoisted out of the per-call path: folded weights, biases, pool selectors."""
    blocks = params["blocks"]

    # block 0: im2col-packed single (CP, CP) matrix; lane = t*Cin + c
    w0_taps, b0 = _fold_block(blocks[0])                   # (9, Cin, O)
    nine_c, o0 = 9 * w0_taps.shape[1], w0_taps.shape[2]
    assert nine_c <= CP and o0 <= CP
    w0 = jnp.pad(w0_taps.reshape(nine_c, o0),
                 ((0, CP - nine_c), (0, CP - o0))).astype(jnp.bfloat16)

    wr, bs = [], [jnp.pad(b0, (0, CP - o0))]
    for blk in blocks[1:]:
        wt, bias = _fold_block(blk)
        wr.append(jnp.pad(wt, ((0, 0), (0, CP - wt.shape[1]), (0, CP - wt.shape[2]))))
        bs.append(jnp.pad(bias, (0, CP - bias.shape[0])))
    wr = jnp.stack(wr).astype(jnp.bfloat16)                # (3, 9, CP, CP)
    b_all = jnp.stack(bs).reshape(N_BLOCKS, 1, CP)         # (4, 1, CP) f32

    return {
        "w0": w0, "wr": wr, "b": b_all,
        "s1": _make_pool_select(H0, W0),                   # (64, 256)
        "s2": _make_pool_select(H0 // 2, W0 // 2),         # (16, 64)
        "s3": _make_pool_select(H0 // 4, W0 // 4, out_rows=8),  # (8, 16), padded
    }


def _im2col_pack(x_nchw):
    """(B, C, H, W) -> (B, H*W, 9*C): 3x3/pad=1 taps packed into the lane dim."""
    B, C, H, W = x_nchw.shape
    xp = jnp.pad(x_nchw, ((0, 0), (0, 0), (1, 1), (1, 1)))
    taps = []
    for dh in (-1, 0, 1):
        for dw in (-1, 0, 1):
            taps.append(xp[:, :, 1 + dh:1 + dh + H, 1 + dw:1 + dw + W])
    col = jnp.stack(taps, axis=1)                          # (B, 9, C, H, W)
    col = jnp.transpose(col, (0, 3, 4, 1, 2))              # (B, H, W, 9, C)
    return col.reshape(B, H * W, 9 * C)


# ------------------------------ Pallas kernel ------------------------------ #
def _build_conv4_kernel(h0, w0, imgs):
    dims = [(h0 >> s, w0 >> s) for s in range(N_BLOCKS)]   # (16,16)..(2,2)
    rpi = [h * w for (h, w) in dims]                       # rows per image
    rpi[-1] = max(8, rpi[-1])                              # last block padded to 8

    def kernel(x_ref, w0_ref, wr_ref, b_ref, s1_ref, s2_ref, s3_ref, o_ref):
        sel_refs = (s1_ref, s2_ref, s3_ref)

        # ---- block 0: 3x3 conv == ONE matmul (im2col packed into lanes) ----
        y = jnp.dot(x_ref[...], w0_ref[...], preferred_element_type=jnp.float32)
        y = jnp.maximum(y + b_ref[0], 0.0)                 # bias + ReLU (f32)

        for l in range(1, N_BLOCKS):
            # -- 2x2 / stride-2 maxpool of block l-1 output -------------------
            Hp, Wp = dims[l - 1]
            rows_p = imgs * rpi[l - 1]
            m1 = jnp.maximum(y, pltpu.roll(y, shift=rows_p - 1, axis=0))
            m2 = jnp.maximum(m1, pltpu.roll(m1, shift=rows_p - Wp, axis=0))
            m2 = m2.astype(jnp.bfloat16).reshape(imgs, rpi[l - 1], CP)
            x = lax.dot_general(sel_refs[l - 1][...], m2,  # batched 0/1 select
                                (((2,), (1,)), ((0,), (0,))),
                                preferred_element_type=jnp.float32)
            x = x.reshape(imgs * rpi[l], CP)               # (rows_l, CP) f32

            # -- 3x3 conv (pad=1): 9 shifted+masked bf16 matmuls, f32 accum ---
            H, W = dims[l]
            rows = imgs * rpi[l]
            log2w = W.bit_length() - 1
            p = lax.broadcasted_iota(jnp.int32, (rows, 1), 0)
            pm = p & (rpi[l] - 1)                          # per-image flat index
            hh = pm >> log2w
            ww = pm & (W - 1)
            acc = None
            for t in range(9):
                dh, dw = t // 3 - 1, t % 3 - 1
                s = dh * W + dw                            # flat shift of this tap
                xs = x if s == 0 else pltpu.roll(x, shift=(-s) % rows, axis=0)
                xs = xs.astype(jnp.bfloat16)               # MXU operand dtype only
                conds = []
                if dh < 0: conds.append(hh >= -dh)
                if dh > 0: conds.append(hh < H - dh)
                if dw < 0: conds.append(ww >= -dw)
                if dw > 0: conds.append(ww < W - dw)
                if conds:
                    valid = conds[0]
                    for c in conds[1:]:
                        valid = valid & c
                    xs = jnp.where(valid, xs, 0)           # bitwise select, no vmul
                mm = jnp.dot(xs, wr_ref[l - 1, t],
                             preferred_element_type=jnp.float32)
                acc = mm if acc is None else acc + mm
            y = jnp.maximum(acc + b_ref[l], 0.0)           # bias + ReLU (f32)

        # ---- last block: 2x2 -> 1x1 pool == per-image max over valid rows ----
        rows = imgs * rpi[-1]
        hw_valid = dims[-1][0] * dims[-1][1]
        p = lax.broadcasted_iota(jnp.int32, (rows, 1), 0)
        pm = p & (rpi[-1] - 1)
        y = jnp.where(pm < hw_valid, y, 0.0)               # y >= 0 -> zeroing safe
        o_ref[...] = jnp.max(y.reshape(imgs, rpi[-1], CP), axis=1
                             ).astype(o_ref.dtype)         # (imgs, CP) dense store

    return kernel


def conv4_forward_pallas(x_pk, consts, sel_b, imgs, num_steps):
    kernel = _build_conv4_kernel(H0, W0, imgs)
    return pl.pallas_call(
        kernel,
        out_shape=jax.ShapeDtypeStruct((num_steps, imgs, CP), jnp.float32),
        grid=(num_steps,),
        in_specs=[
            pl.BlockSpec((None, imgs * H0 * W0, CP), lambda i: (i, 0, 0)),  # images
            pl.BlockSpec(consts["w0"].shape, lambda i: (0, 0)),             # resident
            pl.BlockSpec(consts["wr"].shape, lambda i: (0, 0, 0, 0)),
            pl.BlockSpec(consts["b"].shape, lambda i: (0, 0, 0)),
            pl.BlockSpec(sel_b[0].shape, lambda i: (0, 0, 0)),              # selectors
            pl.BlockSpec(sel_b[1].shape, lambda i: (0, 0, 0)),
            pl.BlockSpec(sel_b[2].shape, lambda i: (0, 0, 0)),
        ],
        out_specs=pl.BlockSpec((None, imgs, CP), lambda i: (i, 0, 0)),
        compiler_params=pltpu.CompilerParams(
            dimension_semantics=("parallel",)),            # megacore / v7x 2 TCs
    )(x_pk, consts["w0"], consts["wr"], consts["b"], *sel_b)


# --------------------------------- wrapper --------------------------------- #
@jax.jit
def meta_template_forward(x_nchw, consts):
    """MetaTemplate.forward: out = self.feature.forward(x)."""
    B, C, H, W = x_nchw.shape
    # static asserts (correctness-review item): shape assumptions made explicit
    assert H == H0 and W == W0, "kernel is specialized to 16x16 inputs"
    assert 9 * C <= CP, "layer-0 im2col packing needs 9*C <= 128 lanes"

    imgs, num_steps = _choose_tiling(B)
    b_pad = num_steps * imgs

    col = _im2col_pack(x_nchw)                             # (B, H*W, 9*C) f32
    col = jnp.pad(col, ((0, b_pad - B), (0, 0), (0, CP - 9 * C)))
    x_pk = col.astype(jnp.bfloat16).reshape(num_steps, imgs * H * W, CP)

    # per-image pool selectors broadcast over the images of one grid step
    sel_b = tuple(jnp.broadcast_to(consts[k], (imgs,) + consts[k].shape)
                  for k in ("s1", "s2", "s3"))

    out = conv4_forward_pallas(x_pk, consts, sel_b, imgs, num_steps)
    # spatial is 1x1 after 4 pools: PyTorch flatten of (N, C, 1, 1) == channels.
    return out.reshape(b_pad, CP)[:B, :HIDDEN]


def init_params(key, in_ch=IN_CH, hidden=HIDDEN, n_blocks=N_BLOCKS):
    blocks = []
    c_in = in_ch
    for _ in range(n_blocks):
        key, kw, kb = jax.random.split(key, 3)
        fan_in = c_in * 9
        w = jax.random.normal(kw, (hidden, c_in, 3, 3), jnp.float32)
        w = w * (1.0 / jnp.sqrt(fan_in))
        bias = jax.random.normal(kb, (hidden,), jnp.float32) * 0.01
        blocks.append({
            "w": w,
            "b": bias,
            # BN in eval mode with deterministic synthetic running stats.
            # TODO(synk): PyTorch training-mode BN would use batch statistics.
            "gamma": jnp.ones((hidden,), jnp.float32),
            "beta": jnp.zeros((hidden,), jnp.float32),
            "mean": jnp.zeros((hidden,), jnp.float32),
            "var": jnp.ones((hidden,), jnp.float32),
        })
        c_in = hidden
    return {"blocks": blocks}


# NOTE: training loops (ADDA/DAN/PRODA), data loaders, tensorboard logging,
# CUDA/DataParallel plumbing and the abstract set_forward* methods are host /
# framework logic with no kernel equivalent and are intentionally not ported.

if __name__ == "__main__":
    key = jax.random.PRNGKey(0)
    kx, kp = jax.random.split(key)

    # small, forward-consistent shapes: batch=2, channels=3, spatial=16x16 (NCHW)
    x = jax.random.normal(kx, (2, IN_CH, H0, W0), jnp.float32)
    params = init_params(kp, in_ch=IN_CH, hidden=HIDDEN, n_blocks=N_BLOCKS)

    consts = prepare_constants(params)      # hoisted out of the per-call path
    feats = meta_template_forward(x, consts)                # (2, feat_dim=16)
    jax.block_until_ready(feats)
    assert feats.shape == (2, HIDDEN) and feats.dtype == jnp.float32
    print("KERNEL_OK")
</pallas_src>

<mosaic_0001>
module attributes {stable_mosaic.version = 11 : i64} {
  func.func @kernel(%arg0: i32, %arg1: memref<1x256x128xbf16, #tpu.memory_space<vmem>>, %arg2: memref<128x128xbf16, #tpu.memory_space<vmem>>, %arg3: memref<3x9x128x128xbf16, #tpu.memory_space<vmem>>, %arg4: memref<4x1x128xf32, #tpu.memory_space<vmem>>, %arg5: memref<1x64x256xbf16, #tpu.memory_space<vmem>>, %arg6: memref<1x16x64xbf16, #tpu.memory_space<vmem>>, %arg7: memref<1x8x16xbf16, #tpu.memory_space<vmem>>, %arg8: memref<1x1x128xf32, #tpu.memory_space<vmem>>) attributes {dimension_semantics = [#tpu.dimension_semantics<parallel>], iteration_bounds = array<i64: 2>, scalar_prefetch = 0 : i64, scratch_operands = 0 : i64, tpu.core_type = #tpu.core_type<tc>, window_params = [{transform_indices = @transform_0, window_bounds = array<i64: 1, 256, 128>}, {pipeline_mode = #tpu.pipeline_mode<synchronous>, transform_indices = @transform_1, window_bounds = array<i64: 128, 128>}, {pipeline_mode = #tpu.pipeline_mode<synchronous>, transform_indices = @transform_2, window_bounds = array<i64: 3, 9, 128, 128>}, {pipeline_mode = #tpu.pipeline_mode<synchronous>, transform_indices = @transform_3, window_bounds = array<i64: 4, 1, 128>}, {pipeline_mode = #tpu.pipeline_mode<synchronous>, transform_indices = @transform_4, window_bounds = array<i64: 1, 64, 256>}, {pipeline_mode = #tpu.pipeline_mode<synchronous>, transform_indices = @transform_5, window_bounds = array<i64: 1, 16, 64>}, {pipeline_mode = #tpu.pipeline_mode<synchronous>, transform_indices = @transform_6, window_bounds = array<i64: 1, 8, 16>}, {transform_indices = @transform_7, window_bounds = array<i64: 1, 1, 128>}]} {
    %c0 = arith.constant 0 : index
    %c0_0 = arith.constant 0 : index
    %c0_1 = arith.constant 0 : index
    %0 = vector.load %arg1[%c0, %c0_0, %c0_1] : memref<1x256x128xbf16, #tpu.memory_space<vmem>>, vector<1x256x128xbf16>
    %1 = vector.shape_cast %0 : vector<1x256x128xbf16> to vector<256x128xbf16>
    %c0_2 = arith.constant 0 : index
    %c0_3 = arith.constant 0 : index
    %2 = vector.load %arg2[%c0_2, %c0_3] : memref<128x128xbf16, #tpu.memory_space<vmem>>, vector<128x128xbf16>
    %cst = arith.constant dense<0.000000e+00> : vector<256x128xf32>
    %3 = tpu.matmul %1, %2, %cst {dimension_numbers = #tpu.dot_dimension_numbers<[1], [0], [0], [1], [0, 0, 1, 1], [], []>} : vector<256x128xbf16>, vector<128x128xbf16>, vector<256x128xf32> -> vector<256x128xf32>
    %c0_4 = arith.constant 0 : index
    %c0_5 = arith.constant 0 : index
    %c0_6 = arith.constant 0 : index
    %4 = vector.load %arg4[%c0_4, %c0_5, %c0_6] : memref<4x1x128xf32, #tpu.memory_space<vmem>>, vector<1x1x128xf32>
    %5 = vector.shape_cast %4 : vector<1x1x128xf32> to vector<1x128xf32>
    %6 = vector.broadcast %5 : vector<1x128xf32> to vector<256x128xf32>
    %7 = arith.addf %3, %6 : vector<256x128xf32>
    %cst_7 = arith.constant 0.000000e+00 : f32
    %8 = vector.broadcast %cst_7 : f32 to vector<256x128xf32>
    %9 = arith.maximumf %7, %8 : vector<256x128xf32>
    %c255_i32 = arith.constant 255 : i32
    %10 = tpu.dynamic_rotate %9 by %c255_i32 dim 0 : vector<256x128xf32>, i32 -> vector<256x128xf32>
    %11 = arith.maximumf %9, %10 : vector<256x128xf32>
    %c240_i32 = arith.constant 240 : i32
    %12 = tpu.dynamic_rotate %11 by %c240_i32 dim 0 : vector<256x128xf32>, i32 -> vector<256x128xf32>
    %13 = arith.maximumf %11, %12 : vector<256x128xf32>
    %14 = arith.truncf %13 : vector<256x128xf32> to vector<256x128xbf16>
    %15 = vector.shape_cast %14 : vector<256x128xbf16> to vector<1x256x128xbf16>
    %c0_8 = arith.constant 0 : index
    %c0_9 = arith.constant 0 : index
    %c0_10 = arith.constant 0 : index
    %16 = vector.load %arg5[%c0_8, %c0_9, %c0_10] : memref<1x64x256xbf16, #tpu.memory_space<vmem>>, vector<1x64x256xbf16>
    %cst_11 = arith.constant dense<0.000000e+00> : vector<1x64x128xf32>
    %17 = tpu.matmul %16, %15, %cst_11 {dimension_numbers = #tpu.dot_dimension_numbers<[2], [1], [1], [2], [0, 0, 0, 1, 1, 2], [0], [0]>} : vector<1x64x256xbf16>, vector<1x256x128xbf16>, vector<1x64x128xf32> -> vector<1x64x128xf32>
    %18 = vector.shape_cast %17 : vector<1x64x128xf32> to vector<64x128xf32>
    %19 = tpu.iota {dimensions = array<i32: 0>} : vector<64x1xi32>
    %c63_i32 = arith.constant 63 : i32
    %20 = vector.broadcast %c63_i32 : i32 to vector<64x1xi32>
    %21 = arith.andi %19, %20 : vector<64x1xi32>
    %c3_i32 = arith.constant 3 : i32
    %22 = vector.broadcast %c3_i32 : i32 to vector<64x1xi32>
    %23 = arith.shrsi %21, %22 : vector<64x1xi32>
    %c7_i32 = arith.constant 7 : i32
    %24 = vector.broadcast %c7_i32 : i32 to vector<64x1xi32>
    %25 = arith.andi %21, %24 : vector<64x1xi32>
    %c9_i32 = arith.constant 9 : i32
    %26 = tpu.dynamic_rotate %18 by %c9_i32 dim 0 : vector<64x128xf32>, i32 -> vector<64x128xf32>
    %27 = arith.truncf %26 : vector<64x128xf32> to vector<64x128xbf16>
    %c1_i32 = arith.constant 1 : i32
    %28 = vector.broadcast %c1_i32 : i32 to vector<64x1xi32>
    %29 = arith.cmpi sge, %23, %28 : vector<64x1xi32>
    %c1_i32_12 = arith.constant 1 : i32
    %30 = vector.broadcast %c1_i32_12 : i32 to vector<64x1xi32>
    %31 = arith.cmpi sge, %25, %30 : vector<64x1xi32>
    %32 = arith.andi %29, %31 : vector<64x1xi1>
    %c0_i32 = arith.constant 0 : i32
    %33 = arith.sitofp %c0_i32 : i32 to bf16
    %34 = vector.shape_cast %32 : vector<64x1xi1> to vector<64x1xi1>
    %35 = vector.broadcast %34 : vector<64x1xi1> to vector<64x128xi1>
    %36 = vector.broadcast %33 : bf16 to vector<64x128xbf16>
    %37 = arith.select %35, %27, %36 : vector<64x128xi1>, vector<64x128xbf16>
    %c0_13 = arith.constant 0 : index
    %c0_14 = arith.constant 0 : index
    %c0_15 = arith.constant 0 : index
    %c0_16 = arith.constant 0 : index
    %38 = vector.load %arg3[%c0_13, %c0_14, %c0_15, %c0_16] : memref<3x9x128x128xbf16, #tpu.memory_space<vmem>>, vector<1x1x128x128xbf16>
    %39 = vector.shape_cast %38 : vector<1x1x128x128xbf16> to vector<128x128xbf16>
    %cst_17 = arith.constant dense<0.000000e+00> : vector<64x128xf32>
    %40 = tpu.matmul %37, %39, %cst_17 {dimension_numbers = #tpu.dot_dimension_numbers<[1], [0], [0], [1], [0, 0, 1, 1], [], []>} : vector<64x128xbf16>, vector<128x128xbf16>, vector<64x128xf32> -> vector<64x128xf32>
    %c8_i32 = arith.constant 8 : i32
    %41 = tpu.dynamic_rotate %18 by %c8_i32 dim 0 : vector<64x128xf32>, i32 -> vector<64x128xf32>
    %42 = arith.truncf %41 : vector<64x128xf32> to vector<64x128xbf16>
    %c1_i32_18 = arith.constant 1 : i32
    %43 = vector.broadcast %c1_i32_18 : i32 to vector<64x1xi32>
    %44 = arith.cmpi sge, %23, %43 : vector<64x1xi32>
    %c0_i32_19 = arith.constant 0 : i32
    %45 = arith.sitofp %c0_i32_19 : i32 to bf16
    %46 = vector.shape_cast %44 : vector<64x1xi1> to vector<64x1xi1>
    %47 = vector.broadcast %46 : vector<64x1xi1> to vector<64x128xi1>
    %48 = vector.broadcast %45 : bf16 to vector<64x128xbf16>
    %49 = arith.select %47, %42, %48 : vector<64x128xi1>, vector<64x128xbf16>
    %c0_20 = arith.constant 0 : index
    %c1 = arith.constant 1 : index
    %c0_21 = arith.constant 0 : index
    %c0_22 = arith.constant 0 : index
    %50 = vector.load %arg3[%c0_20, %c1, %c0_21, %c0_22] : memref<3x9x128x128xbf16, #tpu.memory_space<vmem>>, vector<1x1x128x128xbf16>
    %51 = vector.shape_cast %50 : vector<1x1x128x128xbf16> to vector<128x128xbf16>
    %cst_23 = arith.constant dense<0.000000e+00> : vector<64x128xf32>
    %52 = tpu.matmul %49, %51, %cst_23 {dimension_numbers = #tpu.dot_dimension_numbers<[1], [0], [0], [1], [0, 0, 1, 1], [], []>} : vector<64x128xbf16>, vector<128x128xbf16>, vector<64x128xf32> -> vector<64x128xf32>
    %53 = arith.addf %40, %52 : vector<64x128xf32>
    %c7_i32_24 = arith.constant 7 : i32
    %54 = tpu.dynamic_rotate %18 by %c7_i32_24 dim 0 : vector<64x128xf32>, i32 -> vector<64x128xf32>
    %55 = arith.truncf %54 : vector<64x128xf32> to vector<64x128xbf16>
    %c1_i32_25 = arith.constant 1 : i32
    %56 = vector.broadcast %c1_i32_25 : i32 to vector<64x1xi32>
    %57 = arith.cmpi sge, %23, %56 : vector<64x1xi32>
    %c7_i32_26 = arith.constant 7 : i32
    %58 = vector.broadcast %c7_i32_26 : i32 to vector<64x1xi32>
    %59 = arith.cmpi slt, %25, %58 : vector<64x1xi32>
    %60 = arith.andi %57, %59 : vector<64x1xi1>
    %c0_i32_27 = arith.constant 0 : i32
    %61 = arith.sitofp %c0_i32_27 : i32 to bf16
    %62 = vector.shape_cast %60 : vector<64x1xi1> to vector<64x1xi1>
    %63 = vector.broadcast %62 : vector<64x1xi1> to vector<64x128xi1>
    %64 = vector.broadcast %61 : bf16 to vector<64x128xbf16>
    %65 = arith.select %63, %55, %64 : vector<64x128xi1>, vector<64x128xbf16>
    %c0_28 = arith.constant 0 : index
    %c2 = arith.constant 2 : index
    %c0_29 = arith.constant 0 : index
    %c0_30 = arith.constant 0 : index
    %66 = vector.load %arg3[%c0_28, %c2, %c0_29, %c0_30] : memref<3x9x128x128xbf16, #tpu.memory_space<vmem>>, vector<1x1x128x128xbf16>
    %67 = vector.shape_cast %66 : vector<1x1x128x128xbf16> to vector<128x128xbf16>
    %cst_31 = arith.constant dense<0.000000e+00> : vector<64x128xf32>
    %68 = tpu.matmul %65, %67, %cst_31 {dimension_numbers = #tpu.dot_dimension_numbers<[1], [0], [0], [1], [0, 0, 1, 1], [], []>} : vector<64x128xbf16>, vector<128x128xbf16>, vector<64x128xf32> -> vector<64x128xf32>
    %69 = arith.addf %53, %68 : vector<64x128xf32>
    %c1_i32_32 = arith.constant 1 : i32
    %70 = tpu.dynamic_rotate %18 by %c1_i32_32 dim 0 : vector<64x128xf32>, i32 -> vector<64x128xf32>
    %71 = arith.truncf %70 : vector<64x128xf32> to vector<64x128xbf16>
    %c1_i32_33 = arith.constant 1 : i32
    %72 = vector.broadcast %c1_i32_33 : i32 to vector<64x1xi32>
    %73 = arith.cmpi sge, %25, %72 : vector<64x1xi32>
    %c0_i32_34 = arith.constant 0 : i32
    %74 = arith.sitofp %c0_i32_34 : i32 to bf16
    %75 = vector.shape_cast %73 : vector<64x1xi1> to vector<64x1xi1>
    %76 = vector.broadcast %75 : vector<64x1xi1> to vector<64x128xi1>
    %77 = vector.broadcast %74 : bf16 to vector<64x128xbf16>
    %78 = arith.select %76, %71, %77 : vector<64x128xi1>, vector<64x128xbf16>
    %c0_35 = arith.constant 0 : index
    %c3 = arith.constant 3 : index
    %c0_36 = arith.constant 0 : index
    %c0_37 = arith.constant 0 : index
    %79 = vector.load %arg3[%c0_35, %c3, %c0_36, %c0_37] : memref<3x9x128x128xbf16, #tpu.memory_space<vmem>>, vector<1x1x128x128xbf16>
    %80 = vector.shape_cast %79 : vector<1x1x128x128xbf16> to vector<128x128xbf16>
    %cst_38 = arith.constant dense<0.000000e+00> : vector<64x128xf32>
    %81 = tpu.matmul %78, %80, %cst_38 {dimension_numbers = #tpu.dot_dimension_numbers<[1], [0], [0], [1], [0, 0, 1, 1], [], []>} : vector<64x128xbf16>, vector<128x128xbf16>, vector<64x128xf32> -> vector<64x128xf32>
    %82 = arith.addf %69, %81 : vector<64x128xf32>
    %83 = arith.truncf %18 : vector<64x128xf32> to vector<64x128xbf16>
    %c0_39 = arith.constant 0 : index
    %c4 = arith.constant 4 : index
    %c0_40 = arith.constant 0 : index
    %c0_41 = arith.constant 0 : index
    %84 = vector.load %arg3[%c0_39, %c4, %c0_40, %c0_41] : memref<3x9x128x128xbf16, #tpu.memory_space<vmem>>, vector<1x1x128x128xbf16>
    %85 = vector.shape_cast %84 : vector<1x1x128x128xbf16> to vector<128x128xbf16>
    %cst_42 = arith.constant dense<0.000000e+00> : vector<64x128xf32>
    %86 = tpu.matmul %83, %85, %cst_42 {dimension_numbers = #tpu.dot_dimension_numbers<[1], [0], [0], [1], [0, 0, 1, 1], [], []>} : vector<64x128xbf16>, vector<128x128xbf16>, vector<64x128xf32> -> vector<64x128xf32>
    %87 = arith.addf %82, %86 : vector<64x128xf32>
    %c63_i32_43 = arith.constant 63 : i32
    %88 = tpu.dynamic_rotate %18 by %c63_i32_43 dim 0 : vector<64x128xf32>, i32 -> vector<64x128xf32>
    %89 = arith.truncf %88 : vector<64x128xf32> to vector<64x128xbf16>
    %c7_i32_44 = arith.constant 7 : i32
    %90 = vector.broadcast %c7_i32_44 : i32 to vector<64x1xi32>
    %91 = arith.cmpi slt, %25, %90 : vector<64x1xi32>
    %c0_i32_45 = arith.constant 0 : i32
    %92 = arith.sitofp %c0_i32_45 : i32 to bf16
    %93 = vector.shape_cast %91 : vector<64x1xi1> to vector<64x1xi1>
    %94 = vector.broadcast %93 : vector<64x1xi1> to vector<64x128xi1>
    %95 = vector.broadcast %92 : bf16 to vector<64x128xbf16>
    %96 = arith.select %94, %89, %95 : vector<64x128xi1>, vector<64x128xbf16>
    %c0_46 = arith.constant 0 : index
    %c5 = arith.constant 5 : index
    %c0_47 = arith.constant 0 : index
    %c0_48 = arith.constant 0 : index
    %97 = vector.load %arg3[%c0_46, %c5, %c0_47, %c0_48] : memref<3x9x128x128xbf16, #tpu.memory_space<vmem>>, vector<1x1x128x128xbf16>
    %98 = vector.shape_cast %97 : vector<1x1x128x128xbf16> to vector<128x128xbf16>
    %cst_49 = arith.constant dense<0.000000e+00> : vector<64x128xf32>
    %99 = tpu.matmul %96, %98, %cst_49 {dimension_numbers = #tpu.dot_dimension_numbers<[1], [0], [0], [1], [0, 0, 1, 1], [], []>} : vector<64x128xbf16>, vector<128x128xbf16>, vector<64x128xf32> -> vector<64x128xf32>
    %100 = arith.addf %87, %99 : vector<64x128xf32>
    %c57_i32 = arith.constant 57 : i32
    %101 = tpu.dynamic_rotate %18 by %c57_i32 dim 0 : vector<64x128xf32>, i32 -> vector<64x128xf32>
    %102 = arith.truncf %101 : vector<64x128xf32> to vector<64x128xbf16>
    %c7_i32_50 = arith.constant 7 : i32
    %103 = vector.broadcast %c7_i32_50 : i32 to vector<64x1xi32>
    %104 = arith.cmpi slt, %23, %103 : vector<64x1xi32>
    %c1_i32_51 = arith.constant 1 : i32
    %105 = vector.broadcast %c1_i32_51 : i32 to vector<64x1xi32>
    %106 = arith.cmpi sge, %25, %105 : vector<64x1xi32>
    %107 = arith.andi %104, %106 : vector<64x1xi1>
    %c0_i32_52 = arith.constant 0 : i32
    %108 = arith.sitofp %c0_i32_52 : i32 to bf16
    %109 = vector.shape_cast %107 : vector<64x1xi1> to vector<64x1xi1>
    %110 = vector.broadcast %109 : vector<64x1xi1> to vector<64x128xi1>
    %111 = vector.broadcast %108 : bf16 to vector<64x128xbf16>
    %112 = arith.select %110, %102, %111 : vector<64x128xi1>, vector<64x128xbf16>
    %c0_53 = arith.constant 0 : index
    %c6 = arith.constant 6 : index
    %c0_54 = arith.constant 0 : index
    %c0_55 = arith.constant 0 : index
    %113 = vector.load %arg3[%c0_53, %c6, %c0_54, %c0_55] : memref<3x9x128x128xbf16, #tpu.memory_space<vmem>>, vector<1x1x128x128xbf16>
    %114 = vector.shape_cast %113 : vector<1x1x128x128xbf16> to vector<128x128xbf16>
    %cst_56 = arith.constant dense<0.000000e+00> : vector<64x128xf32>
    %115 = tpu.matmul %112, %114, %cst_56 {dimension_numbers = #tpu.dot_dimension_numbers<[1], [0], [0], [1], [0, 0, 1, 1], [], []>} : vector<64x128xbf16>, vector<128x128xbf16>, vector<64x128xf32> -> vector<64x128xf32>
    %116 = arith.addf %100, %115 : vector<64x128xf32>
    %c56_i32 = arith.constant 56 : i32
    %117 = tpu.dynamic_rotate %18 by %c56_i32 dim 0 : vector<64x128xf32>, i32 -> vector<64x128xf32>
    %118 = arith.truncf %117 : vector<64x128xf32> to vector<64x128xbf16>
    %c7_i32_57 = arith.constant 7 : i32
    %119 = vector.broadcast %c7_i32_57 : i32 to vector<64x1xi32>
    %120 = arith.cmpi slt, %23, %119 : vector<64x1xi32>
    %c0_i32_58 = arith.constant 0 : i32
    %121 = arith.sitofp %c0_i32_58 : i32 to bf16
    %122 = vector.shape_cast %120 : vector<64x1xi1> to vector<64x1xi1>
    %123 = vector.broadcast %122 : vector<64x1xi1> to vector<64x128xi1>
    %124 = vector.broadcast %121 : bf16 to vector<64x128xbf16>
    %125 = arith.select %123, %118, %124 : vector<64x128xi1>, vector<64x128xbf16>
    %c0_59 = arith.constant 0 : index
    %c7 = arith.constant 7 : index
    %c0_60 = arith.constant 0 : index
    %c0_61 = arith.constant 0 : index
    %126 = vector.load %arg3[%c0_59, %c7, %c0_60, %c0_61] : memref<3x9x128x128xbf16, #tpu.memory_space<vmem>>, vector<1x1x128x128xbf16>
    %127 = vector.shape_cast %126 : vector<1x1x128x128xbf16> to vector<128x128xbf16>
    %cst_62 = arith.constant dense<0.000000e+00> : vector<64x128xf32>
    %128 = tpu.matmul %125, %127, %cst_62 {dimension_numbers = #tpu.dot_dimension_numbers<[1], [0], [0], [1], [0, 0, 1, 1], [], []>} : vector<64x128xbf16>, vector<128x128xbf16>, vector<64x128xf32> -> vector<64x128xf32>
    %129 = arith.addf %116, %128 : vector<64x128xf32>
    %c55_i32 = arith.constant 55 : i32
    %130 = tpu.dynamic_rotate %18 by %c55_i32 dim 0 : vector<64x128xf32>, i32 -> vector<64x128xf32>
    %131 = arith.truncf %130 : vector<64x128xf32> to vector<64x128xbf16>
    %c7_i32_63 = arith.constant 7 : i32
    %132 = vector.broadcast %c7_i32_63 : i32 to vector<64x1xi32>
    %133 = arith.cmpi slt, %23, %132 : vector<64x1xi32>
    %c7_i32_64 = arith.constant 7 : i32
    %134 = vector.broadcast %c7_i32_64 : i32 to vector<64x1xi32>
    %135 = arith.cmpi slt, %25, %134 : vector<64x1xi32>
    %136 = arith.andi %133, %135 : vector<64x1xi1>
    %c0_i32_65 = arith.constant 0 : i32
    %137 = arith.sitofp %c0_i32_65 : i32 to bf16
    %138 = vector.shape_cast %136 : vector<64x1xi1> to vector<64x1xi1>
    %139 = vector.broadcast %138 : vector<64x1xi1> to vector<64x128xi1>
    %140 = vector.broadcast %137 : bf16 to vector<64x128xbf16>
    %141 = arith.select %139, %131, %140 : vector<64x128xi1>, vector<64x128xbf16>
    %c0_66 = arith.constant 0 : index
    %c8 = arith.constant 8 : index
    %c0_67 = arith.constant 0 : index
    %c0_68 = arith.constant 0 : index
    %142 = vector.load %arg3[%c0_66, %c8, %c0_67, %c0_68] : memref<3x9x128x128xbf16, #tpu.memory_space<vmem>>, vector<1x1x128x128xbf16>
    %143 = vector.shape_cast %142 : vector<1x1x128x128xbf16> to vector<128x128xbf16>
    %cst_69 = arith.constant dense<0.000000e+00> : vector<64x128xf32>
    %144 = tpu.matmul %141, %143, %cst_69 {dimension_numbers = #tpu.dot_dimension_numbers<[1], [0], [0], [1], [0, 0, 1, 1], [], []>} : vector<64x128xbf16>, vector<128x128xbf16>, vector<64x128xf32> -> vector<64x128xf32>
    %145 = arith.addf %129, %144 : vector<64x128xf32>
    %c1_70 = arith.constant 1 : index
    %c0_71 = arith.constant 0 : index
    %c0_72 = arith.constant 0 : index
    %146 = vector.load %arg4[%c1_70, %c0_71, %c0_72] : memref<4x1x128xf32, #tpu.memory_space<vmem>>, vector<1x1x128xf32>
    %147 = vector.shape_cast %146 : vector<1x1x128xf32> to vector<1x128xf32>
    %148 = vector.broadcast %147 : vector<1x128xf32> to vector<64x128xf32>
    %149 = arith.addf %145, %148 : vector<64x128xf32>
    %cst_73 = arith.constant 0.000000e+00 : f32
    %150 = vector.broadcast %cst_73 : f32 to vector<64x128xf32>
    %151 = arith.maximumf %149, %150 : vector<64x128xf32>
    %c63_i32_74 = arith.constant 63 : i32
    %152 = tpu.dynamic_rotate %151 by %c63_i32_74 dim 0 : vector<64x128xf32>, i32 -> vector<64x128xf32>
    %153 = arith.maximumf %151, %152 : vector<64x128xf32>
    %c56_i32_75 = arith.constant 56 : i32
    %154 = tpu.dynamic_rotate %153 by %c56_i32_75 dim 0 : vector<64x128xf32>, i32 -> vector<64x128xf32>
    %155 = arith.maximumf %153, %154 : vector<64x128xf32>
    %156 = arith.truncf %155 : vector<64x128xf32> to vector<64x128xbf16>
    %157 = vector.shape_cast %156 : vector<64x128xbf16> to vector<1x64x128xbf16>
    %c0_76 = arith.constant 0 : index
    %c0_77 = arith.constant 0 : index
    %c0_78 = arith.constant 0 : index
    %158 = vector.load %arg6[%c0_76, %c0_77, %c0_78] : memref<1x16x64xbf16, #tpu.memory_space<vmem>>, vector<1x16x64xbf16>
    %cst_79 = arith.constant dense<0.000000e+00> : vector<1x16x128xf32>
    %159 = tpu.matmul %158, %157, %cst_79 {dimension_numbers = #tpu.dot_dimension_numbers<[2], [1], [1], [2], [0, 0, 0, 1, 1, 2], [0], [0]>} : vector<1x16x64xbf16>, vector<1x64x128xbf16>, vector<1x16x128xf32> -> vector<1x16x128xf32>
    %160 = vector.shape_cast %159 : vector<1x16x128xf32> to vector<16x128xf32>
    %161 = tpu.iota {dimensions = array<i32: 0>} : vector<16x1xi32>
    %c15_i32 = arith.constant 15 : i32
    %162 = vector.broadcast %c15_i32 : i32 to vector<16x1xi32>
    %163 = arith.andi %161, %162 : vector<16x1xi32>
    %c2_i32 = arith.constant 2 : i32
    %164 = vector.broadcast %c2_i32 : i32 to vector<16x1xi32>
    %165 = arith.shrsi %163, %164 : vector<16x1xi32>
    %c3_i32_80 = arith.constant 3 : i32
    %166 = vector.broadcast %c3_i32_80 : i32 to vector<16x1xi32>
    %167 = arith.andi %163, %166 : vector<16x1xi32>
    %c5_i32 = arith.constant 5 : i32
    %168 = tpu.dynamic_rotate %160 by %c5_i32 dim 0 : vector<16x128xf32>, i32 -> vector<16x128xf32>
    %169 = arith.truncf %168 : vector<16x128xf32> to vector<16x128xbf16>
    %c1_i32_81 = arith.constant 1 : i32
    %170 = vector.broadcast %c1_i32_81 : i32 to vector<16x1xi32>
    %171 = arith.cmpi sge, %165, %170 : vector<16x1xi32>
    %c1_i32_82 = arith.constant 1 : i32
    %172 = vector.broadcast %c1_i32_82 : i32 to vector<16x1xi32>
    %173 = arith.cmpi sge, %167, %172 : vector<16x1xi32>
    %174 = arith.andi %171, %173 : vector<16x1xi1>
    %c0_i32_83 = arith.constant 0 : i32
    %175 = arith.sitofp %c0_i32_83 : i32 to bf16
    %176 = vector.shape_cast %174 : vector<16x1xi1> to vector<16x1xi1>
    %177 = vector.broadcast %176 : vector<16x1xi1> to vector<16x128xi1>
    %178 = vector.broadcast %175 : bf16 to vector<16x128xbf16>
    %179 = arith.select %177, %169, %178 : vector<16x128xi1>, vector<16x128xbf16>
    %c1_84 = arith.constant 1 : index
    %c0_85 = arith.constant 0 : index
    %c0_86 = arith.constant 0 : index
    %c0_87 = arith.constant 0 : index
    %180 = vector.load %arg3[%c1_84, %c0_85, %c0_86, %c0_87] : memref<3x9x128x128xbf16, #tpu.memory_space<vmem>>, vector<1x1x128x128xbf16>
    %181 = vector.shape_cast %180 : vector<1x1x128x128xbf16> to vector<128x128xbf16>
    %cst_88 = arith.constant dense<0.000000e+00> : vector<16x128xf32>
    %182 = tpu.matmul %179, %181, %cst_88 {dimension_numbers = #tpu.dot_dimension_numbers<[1], [0], [0], [1], [0, 0, 1, 1], [], []>} : vector<16x128xbf16>, vector<128x128xbf16>, vector<16x128xf32> -> vector<16x128xf32>
    %c4_i32 = arith.constant 4 : i32
    %183 = tpu.dynamic_rotate %160 by %c4_i32 dim 0 : vector<16x128xf32>, i32 -> vector<16x128xf32>
    %184 = arith.truncf %183 : vector<16x128xf32> to vector<16x128xbf16>
    %c1_i32_89 = arith.constant 1 : i32
    %185 = vector.broadcast %c1_i32_89 : i32 to vector<16x1xi32>
    %186 = arith.cmpi sge, %165, %185 : vector<16x1xi32>
    %c0_i32_90 = arith.constant 0 : i32
    %187 = arith.sitofp %c0_i32_90 : i32 to bf16
    %188 = vector.shape_cast %186 : vector<16x1xi1> to vector<16x1xi1>
    %189 = vector.broadcast %188 : vector<16x1xi1> to vector<16x128xi1>
    %190 = vector.broadcast %187 : bf16 to vector<16x128xbf16>
    %191 = arith.select %189, %184, %190 : vector<16x128xi1>, vector<16x128xbf16>
    %c1_91 = arith.constant 1 : index
    %c1_92 = arith.constant 1 : index
    %c0_93 = arith.constant 0 : index
    %c0_94 = arith.constant 0 : index
    %192 = vector.load %arg3[%c1_91, %c1_92, %c0_93, %c0_94] : memref<3x9x128x128xbf16, #tpu.memory_space<vmem>>, vector<1x1x128x128xbf16>
    %193 = vector.shape_cast %192 : vector<1x1x128x128xbf16> to vector<128x128xbf16>
    %cst_95 = arith.constant dense<0.000000e+00> : vector<16x128xf32>
    %194 = tpu.matmul %191, %193, %cst_95 {dimension_numbers = #tpu.dot_dimension_numbers<[1], [0], [0], [1], [0, 0, 1, 1], [], []>} : vector<16x128xbf16>, vector<128x128xbf16>, vector<16x128xf32> -> vector<16x128xf32>
    %195 = arith.addf %182, %194 : vector<16x128xf32>
    %c3_i32_96 = arith.constant 3 : i32
    %196 = tpu.dynamic_rotate %160 by %c3_i32_96 dim 0 : vector<16x128xf32>, i32 -> vector<16x128xf32>
    %197 = arith.truncf %196 : vector<16x128xf32> to vector<16x128xbf16>
    %c1_i32_97 = arith.constant 1 : i32
    %198 = vector.broadcast %c1_i32_97 : i32 to vector<16x1xi32>
    %199 = arith.cmpi sge, %165, %198 : vector<16x1xi32>
    %c3_i32_98 = arith.constant 3 : i32
    %200 = vector.broadcast %c3_i32_98 : i32 to vector<16x1xi32>
    %201 = arith.cmpi slt, %167, %200 : vector<16x1xi32>
    %202 = arith.andi %199, %201 : vector<16x1xi1>
    %c0_i32_99 = arith.constant 0 : i32
    %203 = arith.sitofp %c0_i32_99 : i32 to bf16
    %204 = vector.shape_cast %202 : vector<16x1xi1> to vector<16x1xi1>
    %205 = vector.broadcast %204 : vector<16x1xi1> to vector<16x128xi1>
    %206 = vector.broadcast %203 : bf16 to vector<16x128xbf16>
    %207 = arith.select %205, %197, %206 : vector<16x128xi1>, vector<16x128xbf16>
    %c1_100 = arith.constant 1 : index
    %c2_101 = arith.constant 2 : index
    %c0_102 = arith.constant 0 : index
    %c0_103 = arith.constant 0 : index
    %208 = vector.load %arg3[%c1_100, %c2_101, %c0_102, %c0_103] : memref<3x9x128x128xbf16, #tpu.memory_space<vmem>>, vector<1x1x128x128xbf16>
    %209 = vector.shape_cast %208 : vector<1x1x128x128xbf16> to vector<128x128xbf16>
    %cst_104 = arith.constant dense<0.000000e+00> : vector<16x128xf32>
    %210 = tpu.matmul %207, %209, %cst_104 {dimension_numbers = #tpu.dot_dimension_numbers<[1], [0], [0], [1], [0, 0, 1, 1], [], []>} : vector<16x128xbf16>, vector<128x128xbf16>, vector<16x128xf32> -> vector<16x128xf32>
    %211 = arith.addf %195, %210 : vector<16x128xf32>
    %c1_i32_105 = arith.constant 1 : i32
    %212 = tpu.dynamic_rotate %160 by %c1_i32_105 dim 0 : vector<16x128xf32>, i32 -> vector<16x128xf32>
    %213 = arith.truncf %212 : vector<16x128xf32> to vector<16x128xbf16>
    %c1_i32_106 = arith.constant 1 : i32
    %214 = vector.broadcast %c1_i32_106 : i32 to vector<16x1xi32>
    %215 = arith.cmpi sge, %167, %214 : vector<16x1xi32>
    %c0_i32_107 = arith.constant 0 : i32
    %216 = arith.sitofp %c0_i32_107 : i32 to bf16
    %217 = vector.shape_cast %215 : vector<16x1xi1> to vector<16x1xi1>
    %218 = vector.broadcast %217 : vector<16x1xi1> to vector<16x128xi1>
    %219 = vector.broadcast %216 : bf16 to vector<16x128xbf16>
    %220 = arith.select %218, %213, %219 : vector<16x128xi1>, vector<16x128xbf16>
    %c1_108 = arith.constant 1 : index
    %c3_109 = arith.constant 3 : index
    %c0_110 = arith.constant 0 : index
    %c0_111 = arith.constant 0 : index
    %221 = vector.load %arg3[%c1_108, %c3_109, %c0_110, %c0_111] : memref<3x9x128x128xbf16, #tpu.memory_space<vmem>>, vector<1x1x128x128xbf16>
    %222 = vector.shape_cast %221 : vector<1x1x128x128xbf16> to vector<128x128xbf16>
    %cst_112 = arith.constant dense<0.000000e+00> : vector<16x128xf32>
    %223 = tpu.matmul %220, %222, %cst_112 {dimension_numbers = #tpu.dot_dimension_numbers<[1], [0], [0], [1], [0, 0, 1, 1], [], []>} : vector<16x128xbf16>, vector<128x128xbf16>, vector<16x128xf32> -> vector<16x128xf32>
    %224 = arith.addf %211, %223 : vector<16x128xf32>
    %225 = arith.truncf %160 : vector<16x128xf32> to vector<16x128xbf16>
    %c1_113 = arith.constant 1 : index
    %c4_114 = arith.constant 4 : index
    %c0_115 = arith.constant 0 : index
    %c0_116 = arith.constant 0 : index
    %226 = vector.load %arg3[%c1_113, %c4_114, %c0_115, %c0_116] : memref<3x9x128x128xbf16, #tpu.memory_space<vmem>>, vector<1x1x128x128xbf16>
    %227 = vector.shape_cast %226 : vector<1x1x128x128xbf16> to vector<128x128xbf16>
    %cst_117 = arith.constant dense<0.000000e+00> : vector<16x128xf32>
    %228 = tpu.matmul %225, %227, %cst_117 {dimension_numbers = #tpu.dot_dimension_numbers<[1], [0], [0], [1], [0, 0, 1, 1], [], []>} : vector<16x128xbf16>, vector<128x128xbf16>, vector<16x128xf32> -> vector<16x128xf32>
    %229 = arith.addf %224, %228 : vector<16x128xf32>
    %c15_i32_118 = arith.constant 15 : i32
    %230 = tpu.dynamic_rotate %160 by %c15_i32_118 dim 0 : vector<16x128xf32>, i32 -> vector<16x128xf32>
    %231 = arith.truncf %230 : vector<16x128xf32> to vector<16x128xbf16>
    %c3_i32_119 = arith.constant 3 : i32
    %232 = vector.broadcast %c3_i32_119 : i32 to vector<16x1xi32>
    %233 = arith.cmpi slt, %167, %232 : vector<16x1xi32>
    %c0_i32_120 = arith.constant 0 : i32
    %234 = arith.sitofp %c0_i32_120 : i32 to bf16
    %235 = vector.shape_cast %233 : vector<16x1xi1> to vector<16x1xi1>
    %236 = vector.broadcast %235 : vector<16x1xi1> to vector<16x128xi1>
    %237 = vector.broadcast %234 : bf16 to vector<16x128xbf16>
    %238 = arith.select %236, %231, %237 : vector<16x128xi1>, vector<16x128xbf16>
    %c1_121 = arith.constant 1 : index
    %c5_122 = arith.constant 5 : index
    %c0_123 = arith.constant 0 : index
    %c0_124 = arith.constant 0 : index
    %239 = vector.load %arg3[%c1_121, %c5_122, %c0_123, %c0_124] : memref<3x9x128x128xbf16, #tpu.memory_space<vmem>>, vector<1x1x128x128xbf16>
    %240 = vector.shape_cast %239 : vector<1x1x128x128xbf16> to vector<128x128xbf16>
    %cst_125 = arith.constant dense<0.000000e+00> : vector<16x128xf32>
    %241 = tpu.matmul %238, %240, %cst_125 {dimension_numbers = #tpu.dot_dimension_numbers<[1], [0], [0], [1], [0, 0, 1, 1], [], []>} : vector<16x128xbf16>, vector<128x128xbf16>, vector<16x128xf32> -> vector<16x128xf32>
    %242 = arith.addf %229, %241 : vector<16x128xf32>
    %c13_i32 = arith.constant 13 : i32
    %243 = tpu.dynamic_rotate %160 by %c13_i32 dim 0 : vector<16x128xf32>, i32 -> vector<16x128xf32>
    %244 = arith.truncf %243 : vector<16x128xf32> to vector<16x128xbf16>
    %c3_i32_126 = arith.constant 3 : i32
    %245 = vector.broadcast %c3_i32_126 : i32 to vector<16x1xi32>
    %246 = arith.cmpi slt, %165, %245 : vector<16x1xi32>
    %c1_i32_127 = arith.constant 1 : i32
    %247 = vector.broadcast %c1_i32_127 : i32 to vector<16x1xi32>
    %248 = arith.cmpi sge, %167, %247 : vector<16x1xi32>
    %249 = arith.andi %246, %248 : vector<16x1xi1>
    %c0_i32_128 = arith.constant 0 : i32
    %250 = arith.sitofp %c0_i32_128 : i32 to bf16
    %251 = vector.shape_cast %249 : vector<16x1xi1> to vector<16x1xi1>
    %252 = vector.broadcast %251 : vector<16x1xi1> to vector<16x128xi1>
    %253 = vector.broadcast %250 : bf16 to vector<16x128xbf16>
    %254 = arith.select %252, %244, %253 : vector<16x128xi1>, vector<16x128xbf16>
    %c1_129 = arith.constant 1 : index
    %c6_130 = arith.constant 6 : index
    %c0_131 = arith.constant 0 : index
    %c0_132 = arith.constant 0 : index
    %255 = vector.load %arg3[%c1_129, %c6_130, %c0_131, %c0_132] : memref<3x9x128x128xbf16, #tpu.memory_space<vmem>>, vector<1x1x128x128xbf16>
    %256 = vector.shape_cast %255 : vector<1x1x128x128xbf16> to vector<128x128xbf16>
    %cst_133 = arith.constant dense<0.000000e+00> : vector<16x128xf32>
    %257 = tpu.matmul %254, %256, %cst_133 {dimension_numbers = #tpu.dot_dimension_numbers<[1], [0], [0], [1], [0, 0, 1, 1], [], []>} : vector<16x128xbf16>, vector<128x128xbf16>, vector<16x128xf32> -> vector<16x128xf32>
    %258 = arith.addf %242, %257 : vector<16x128xf32>
    %c12_i32 = arith.constant 12 : i32
    %259 = tpu.dynamic_rotate %160 by %c12_i32 dim 0 : vector<16x128xf32>, i32 -> vector<16x128xf32>
    %260 = arith.truncf %259 : vector<16x128xf32> to vector<16x128xbf16>
    %c3_i32_134 = arith.constant 3 : i32
    %261 = vector.broadcast %c3_i32_134 : i32 to vector<16x1xi32>
    %262 = arith.cmpi slt, %165, %261 : vector<16x1xi32>
    %c0_i32_135 = arith.constant 0 : i32
    %263 = arith.sitofp %c0_i32_135 : i32 to bf16
    %264 = vector.shape_cast %262 : vector<16x1xi1> to vector<16x1xi1>
    %265 = vector.broadcast %264 : vector<16x1xi1> to vector<16x128xi1>
    %266 = vector.broadcast %263 : bf16 to vector<16x128xbf16>
    %267 = arith.select %265, %260, %266 : vector<16x128xi1>, vector<16x128xbf16>
    %c1_136 = arith.constant 1 : index
    %c7_137 = arith.constant 7 : index
    %c0_138 = arith.constant 0 : index
    %c0_139 = arith.constant 0 : index
    %268 = vector.load %arg3[%c1_136, %c7_137, %c0_138, %c0_139] : memref<3x9x128x128xbf16, #tpu.memory_space<vmem>>, vector<1x1x128x128xbf16>
    %269 = vector.shape_cast %268 : vector<1x1x128x128xbf16> to vector<128x128xbf16>
    %cst_140 = arith.constant dense<0.000000e+00> : vector<16x128xf32>
    %270 = tpu.matmul %267, %269, %cst_140 {dimension_numbers = #tpu.dot_dimension_numbers<[1], [0], [0], [1], [0, 0, 1, 1], [], []>} : vector<16x128xbf16>, vector<128x128xbf16>, vector<16x128xf32> -> vector<16x128xf32>
    %271 = arith.addf %258, %270 : vector<16x128xf32>
    %c11_i32 = arith.constant 11 : i32
    %272 = tpu.dynamic_rotate %160 by %c11_i32 dim 0 : vector<16x128xf32>, i32 -> vector<16x128xf32>
    %273 = arith.truncf %272 : vector<16x128xf32> to vector<16x128xbf16>
    %c3_i32_141 = arith.constant 3 : i32
    %274 = vector.broadcast %c3_i32_141 : i32 to vector<16x1xi32>
    %275 = arith.cmpi slt, %165, %274 : vector<16x1xi32>
    %c3_i32_142 = arith.constant 3 : i32
    %276 = vector.broadcast %c3_i32_142 : i32 to vector<16x1xi32>
    %277 = arith.cmpi slt, %167, %276 : vector<16x1xi32>
    %278 = arith.andi %275, %277 : vector<16x1xi1>
    %c0_i32_143 = arith.constant 0 : i32
    %279 = arith.sitofp %c0_i32_143 : i32 to bf16
    %280 = vector.shape_cast %278 : vector<16x1xi1> to vector<16x1xi1>
    %281 = vector.broadcast %280 : vector<16x1xi1> to vector<16x128xi1>
    %282 = vector.broadcast %279 : bf16 to vector<16x128xbf16>
    %283 = arith.select %281, %273, %282 : vector<16x128xi1>, vector<16x128xbf16>
    %c1_144 = arith.constant 1 : index
    %c8_145 = arith.constant 8 : index
    %c0_146 = arith.constant 0 : index
    %c0_147 = arith.constant 0 : index
    %284 = vector.load %arg3[%c1_144, %c8_145, %c0_146, %c0_147] : memref<3x9x128x128xbf16, #tpu.memory_space<vmem>>, vector<1x1x128x128xbf16>
    %285 = vector.shape_cast %284 : vector<1x1x128x128xbf16> to vector<128x128xbf16>
    %cst_148 = arith.constant dense<0.000000e+00> : vector<16x128xf32>
    %286 = tpu.matmul %283, %285, %cst_148 {dimension_numbers = #tpu.dot_dimension_numbers<[1], [0], [0], [1], [0, 0, 1, 1], [], []>} : vector<16x128xbf16>, vector<128x128xbf16>, vector<16x128xf32> -> vector<16x128xf32>
    %287 = arith.addf %271, %286 : vector<16x128xf32>
    %c2_149 = arith.constant 2 : index
    %c0_150 = arith.constant 0 : index
    %c0_151 = arith.constant 0 : index
    %288 = vector.load %arg4[%c2_149, %c0_150, %c0_151] : memref<4x1x128xf32, #tpu.memory_space<vmem>>, vector<1x1x128xf32>
    %289 = vector.shape_cast %288 : vector<1x1x128xf32> to vector<1x128xf32>
    %290 = vector.broadcast %289 : vector<1x128xf32> to vector<16x128xf32>
    %291 = arith.addf %287, %290 : vector<16x128xf32>
    %cst_152 = arith.constant 0.000000e+00 : f32
    %292 = vector.broadcast %cst_152 : f32 to vector<16x128xf32>
    %293 = arith.maximumf %291, %292 : vector<16x128xf32>
    %c15_i32_153 = arith.constant 15 : i32
    %294 = tpu.dynamic_rotate %293 by %c15_i32_153 dim 0 : vector<16x128xf32>, i32 -> vector<16x128xf32>
    %295 = arith.maximumf %293, %294 : vector<16x128xf32>
    %c12_i32_154 = arith.constant 12 : i32
    %296 = tpu.dynamic_rotate %295 by %c12_i32_154 dim 0 : vector<16x128xf32>, i32 -> vector<16x128xf32>
    %297 = arith.maximumf %295, %296 : vector<16x128xf32>
    %298 = arith.truncf %297 : vector<16x128xf32> to vector<16x128xbf16>
    %299 = vector.shape_cast %298 : vector<16x128xbf16> to vector<1x16x128xbf16>
    %c0_155 = arith.constant 0 : index
    %c0_156 = arith.constant 0 : index
    %c0_157 = arith.constant 0 : index
    %300 = vector.load %arg7[%c0_155, %c0_156, %c0_157] : memref<1x8x16xbf16, #tpu.memory_space<vmem>>, vector<1x8x16xbf16>
    %cst_158 = arith.constant dense<0.000000e+00> : vector<1x8x128xf32>
    %301 = tpu.matmul %300, %299, %cst_158 {dimension_numbers = #tpu.dot_dimension_numbers<[2], [1], [1], [2], [0, 0, 0, 1, 1, 2], [0], [0]>} : vector<1x8x16xbf16>, vector<1x16x128xbf16>, vector<1x8x128xf32> -> vector<1x8x128xf32>
    %302 = vector.shape_cast %301 : vector<1x8x128xf32> to vector<8x128xf32>
    %303 = tpu.iota {dimensions = array<i32: 0>} : vector<8x1xi32>
    %c7_i32_159 = arith.constant 7 : i32
    %304 = vector.broadcast %c7_i32_159 : i32 to vector<8x1xi32>
    %305 = arith.andi %303, %304 : vector<8x1xi32>
    %c1_i32_160 = arith.constant 1 : i32
    %306 = vector.broadcast %c1_i32_160 : i32 to vector<8x1xi32>
    %307 = arith.shrsi %305, %306 : vector<8x1xi32>
    %c1_i32_161 = arith.constant 1 : i32
    %308 = vector.broadcast %c1_i32_161 : i32 to vector<8x1xi32>
    %309 = arith.andi %305, %308 : vector<8x1xi32>
    %c3_i32_162 = arith.constant 3 : i32
    %310 = tpu.dynamic_rotate %302 by %c3_i32_162 dim 0 : vector<8x128xf32>, i32 -> vector<8x128xf32>
    %311 = arith.truncf %310 : vector<8x128xf32> to vector<8x128xbf16>
    %c1_i32_163 = arith.constant 1 : i32
    %312 = vector.broadcast %c1_i32_163 : i32 to vector<8x1xi32>
    %313 = arith.cmpi sge, %307, %312 : vector<8x1xi32>
    %c1_i32_164 = arith.constant 1 : i32
    %314 = vector.broadcast %c1_i32_164 : i32 to vector<8x1xi32>
    %315 = arith.cmpi sge, %309, %314 : vector<8x1xi32>
    %316 = arith.andi %313, %315 : vector<8x1xi1>
    %c0_i32_165 = arith.constant 0 : i32
    %317 = arith.sitofp %c0_i32_165 : i32 to bf16
    %318 = vector.shape_cast %316 : vector<8x1xi1> to vector<8x1xi1>
    %319 = vector.broadcast %318 : vector<8x1xi1> to vector<8x128xi1>
    %320 = vector.broadcast %317 : bf16 to vector<8x128xbf16>
    %321 = arith.select %319, %311, %320 : vector<8x128xi1>, vector<8x128xbf16>
    %c2_166 = arith.constant 2 : index
    %c0_167 = arith.constant 0 : index
    %c0_168 = arith.constant 0 : index
    %c0_169 = arith.constant 0 : index
    %322 = vector.load %arg3[%c2_166, %c0_167, %c0_168, %c0_169] : memref<3x9x128x128xbf16, #tpu.memory_space<vmem>>, vector<1x1x128x128xbf16>
    %323 = vector.shape_cast %322 : vector<1x1x128x128xbf16> to vector<128x128xbf16>
    %cst_170 = arith.constant dense<0.000000e+00> : vector<8x128xf32>
    %324 = tpu.matmul %321, %323, %cst_170 {dimension_numbers = #tpu.dot_dimension_numbers<[1], [0], [0], [1], [0, 0, 1, 1], [], []>} : vector<8x128xbf16>, vector<128x128xbf16>, vector<8x128xf32> -> vector<8x128xf32>
    %c2_i32_171 = arith.constant 2 : i32
    %325 = tpu.dynamic_rotate %302 by %c2_i32_171 dim 0 : vector<8x128xf32>, i32 -> vector<8x128xf32>
    %326 = arith.truncf %325 : vector<8x128xf32> to vector<8x128xbf16>
    %c1_i32_172 = arith.constant 1 : i32
    %327 = vector.broadcast %c1_i32_172 : i32 to vector<8x1xi32>
    %328 = arith.cmpi sge, %307, %327 : vector<8x1xi32>
    %c0_i32_173 = arith.constant 0 : i32
    %329 = arith.sitofp %c0_i32_173 : i32 to bf16
    %330 = vector.shape_cast %328 : vector<8x1xi1> to vector<8x1xi1>
    %331 = vector.broadcast %330 : vector<8x1xi1> to vector<8x128xi1>
    %332 = vector.broadcast %329 : bf16 to vector<8x128xbf16>
    %333 = arith.select %331, %326, %332 : vector<8x128xi1>, vector<8x128xbf16>
    %c2_174 = arith.constant 2 : index
    %c1_175 = arith.constant 1 : index
    %c0_176 = arith.constant 0 : index
    %c0_177 = arith.constant 0 : index
    %334 = vector.load %arg3[%c2_174, %c1_175, %c0_176, %c0_177] : memref<3x9x128x128xbf16, #tpu.memory_space<vmem>>, vector<1x1x128x128xbf16>
    %335 = vector.shape_cast %334 : vector<1x1x128x128xbf16> to vector<128x128xbf16>
    %cst_178 = arith.constant dense<0.000000e+00> : vector<8x128xf32>
    %336 = tpu.matmul %333, %335, %cst_178 {dimension_numbers = #tpu.dot_dimension_numbers<[1], [0], [0], [1], [0, 0, 1, 1], [], []>} : vector<8x128xbf16>, vector<128x128xbf16>, vector<8x128xf32> -> vector<8x128xf32>
    %337 = arith.addf %324, %336 : vector<8x128xf32>
    %c1_i32_179 = arith.constant 1 : i32
    %338 = tpu.dynamic_rotate %302 by %c1_i32_179 dim 0 : vector<8x128xf32>, i32 -> vector<8x128xf32>
    %339 = arith.truncf %338 : vector<8x128xf32> to vector<8x128xbf16>
    %c1_i32_180 = arith.constant 1 : i32
    %340 = vector.broadcast %c1_i32_180 : i32 to vector<8x1xi32>
    %341 = arith.cmpi sge, %307, %340 : vector<8x1xi32>
    %c1_i32_181 = arith.constant 1 : i32
    %342 = vector.broadcast %c1_i32_181 : i32 to vector<8x1xi32>
    %343 = arith.cmpi slt, %309, %342 : vector<8x1xi32>
    %344 = arith.andi %341, %343 : vector<8x1xi1>
    %c0_i32_182 = arith.constant 0 : i32
    %345 = arith.sitofp %c0_i32_182 : i32 to bf16
    %346 = vector.shape_cast %344 : vector<8x1xi1> to vector<8x1xi1>
    %347 = vector.broadcast %346 : vector<8x1xi1> to vector<8x128xi1>
    %348 = vector.broadcast %345 : bf16 to vector<8x128xbf16>
    %349 = arith.select %347, %339, %348 : vector<8x128xi1>, vector<8x128xbf16>
    %c2_183 = arith.constant 2 : index
    %c2_184 = arith.constant 2 : index
    %c0_185 = arith.constant 0 : index
    %c0_186 = arith.constant 0 : index
    %350 = vector.load %arg3[%c2_183, %c2_184, %c0_185, %c0_186] : memref<3x9x128x128xbf16, #tpu.memory_space<vmem>>, vector<1x1x128x128xbf16>
    %351 = vector.shape_cast %350 : vector<1x1x128x128xbf16> to vector<128x128xbf16>
    %cst_187 = arith.constant dense<0.000000e+00> : vector<8x128xf32>
    %352 = tpu.matmul %349, %351, %cst_187 {dimension_numbers = #tpu.dot_dimension_numbers<[1], [0], [0], [1], [0, 0, 1, 1], [], []>} : vector<8x128xbf16>, vector<128x128xbf16>, vector<8x128xf32> -> vector<8x128xf32>
    %353 = arith.addf %337, %352 : vector<8x128xf32>
    %c1_i32_188 = arith.constant 1 : i32
    %354 = tpu.dynamic_rotate %302 by %c1_i32_188 dim 0 : vector<8x128xf32>, i32 -> vector<8x128xf32>
    %355 = arith.truncf %354 : vector<8x128xf32> to vector<8x128xbf16>
    %c1_i32_189 = arith.constant 1 : i32
    %356 = vector.broadcast %c1_i32_189 : i32 to vector<8x1xi32>
    %357 = arith.cmpi sge, %309, %356 : vector<8x1xi32>
    %c0_i32_190 = arith.constant 0 : i32
    %358 = arith.sitofp %c0_i32_190 : i32 to bf16
    %359 = vector.shape_cast %357 : vector<8x1xi1> to vector<8x1xi1>
    %360 = vector.broadcast %359 : vector<8x1xi1> to vector<8x128xi1>
    %361 = vector.broadcast %358 : bf16 to vector<8x128xbf16>
    %362 = arith.select %360, %355, %361 : vector<8x128xi1>, vector<8x128xbf16>
    %c2_191 = arith.constant 2 : index
    %c3_192 = arith.constant 3 : index
    %c0_193 = arith.constant 0 : index
    %c0_194 = arith.constant 0 : index
    %363 = vector.load %arg3[%c2_191, %c3_192, %c0_193, %c0_194] : memref<3x9x128x128xbf16, #tpu.memory_space<vmem>>, vector<1x1x128x128xbf16>
    %364 = vector.shape_cast %363 : vector<1x1x128x128xbf16> to vector<128x128xbf16>
    %cst_195 = arith.constant dense<0.000000e+00> : vector<8x128xf32>
    %365 = tpu.matmul %362, %364, %cst_195 {dimension_numbers = #tpu.dot_dimension_numbers<[1], [0], [0], [1], [0, 0, 1, 1], [], []>} : vector<8x128xbf16>, vector<128x128xbf16>, vector<8x128xf32> -> vector<8x128xf32>
    %366 = arith.addf %353, %365 : vector<8x128xf32>
    %367 = arith.truncf %302 : vector<8x128xf32> to vector<8x128xbf16>
    %c2_196 = arith.constant 2 : index
    %c4_197 = arith.constant 4 : index
    %c0_198 = arith.constant 0 : index
    %c0_199 = arith.constant 0 : index
    %368 = vector.load %arg3[%c2_196, %c4_197, %c0_198, %c0_199] : memref<3x9x128x128xbf16, #tpu.memory_space<vmem>>, vector<1x1x128x128xbf16>
    %369 = vector.shape_cast %368 : vector<1x1x128x128xbf16> to vector<128x128xbf16>
    %cst_200 = arith.constant dense<0.000000e+00> : vector<8x128xf32>
    %370 = tpu.matmul %367, %369, %cst_200 {dimension_numbers = #tpu.dot_dimension_numbers<[1], [0], [0], [1], [0, 0, 1, 1], [], []>} : vector<8x128xbf16>, vector<128x128xbf16>, vector<8x128xf32> -> vector<8x128xf32>
    %371 = arith.addf %366, %370 : vector<8x128xf32>
    %c7_i32_201 = arith.constant 7 : i32
    %372 = tpu.dynamic_rotate %302 by %c7_i32_201 dim 0 : vector<8x128xf32>, i32 -> vector<8x128xf32>
    %373 = arith.truncf %372 : vector<8x128xf32> to vector<8x128xbf16>
    %c1_i32_202 = arith.constant 1 : i32
    %374 = vector.broadcast %c1_i32_202 : i32 to vector<8x1xi32>
    %375 = arith.cmpi slt, %309, %374 : vector<8x1xi32>
    %c0_i32_203 = arith.constant 0 : i32
    %376 = arith.sitofp %c0_i32_203 : i32 to bf16
    %377 = vector.shape_cast %375 : vector<8x1xi1> to vector<8x1xi1>
    %378 = vector.broadcast %377 : vector<8x1xi1> to vector<8x128xi1>
    %379 = vector.broadcast %376 : bf16 to vector<8x128xbf16>
    %380 = arith.select %378, %373, %379 : vector<8x128xi1>, vector<8x128xbf16>
    %c2_204 = arith.constant 2 : index
    %c5_205 = arith.constant 5 : index
    %c0_206 = arith.constant 0 : index
    %c0_207 = arith.constant 0 : index
    %381 = vector.load %arg3[%c2_204, %c5_205, %c0_206, %c0_207] : memref<3x9x128x128xbf16, #tpu.memory_space<vmem>>, vector<1x1x128x128xbf16>
    %382 = vector.shape_cast %381 : vector<1x1x128x128xbf16> to vector<128x128xbf16>
    %cst_208 = arith.constant dense<0.000000e+00> : vector<8x128xf32>
    %383 = tpu.matmul %380, %382, %cst_208 {dimension_numbers = #tpu.dot_dimension_numbers<[1], [0], [0], [1], [0, 0, 1, 1], [], []>} : vector<8x128xbf16>, vector<128x128xbf16>, vector<8x128xf32> -> vector<8x128xf32>
    %384 = arith.addf %371, %383 : vector<8x128xf32>
    %c7_i32_209 = arith.constant 7 : i32
    %385 = tpu.dynamic_rotate %302 by %c7_i32_209 dim 0 : vector<8x128xf32>, i32 -> vector<8x128xf32>
    %386 = arith.truncf %385 : vector<8x128xf32> to vector<8x128xbf16>
    %c1_i32_210 = arith.constant 1 : i32
    %387 = vector.broadcast %c1_i32_210 : i32 to vector<8x1xi32>
    %388 = arith.cmpi slt, %307, %387 : vector<8x1xi32>
    %c1_i32_211 = arith.constant 1 : i32
    %389 = vector.broadcast %c1_i32_211 : i32 to vector<8x1xi32>
    %390 = arith.cmpi sge, %309, %389 : vector<8x1xi32>
    %391 = arith.andi %388, %390 : vector<8x1xi1>
    %c0_i32_212 = arith.constant 0 : i32
    %392 = arith.sitofp %c0_i32_212 : i32 to bf16
    %393 = vector.shape_cast %391 : vector<8x1xi1> to vector<8x1xi1>
    %394 = vector.broadcast %393 : vector<8x1xi1> to vector<8x128xi1>
    %395 = vector.broadcast %392 : bf16 to vector<8x128xbf16>
    %396 = arith.select %394, %386, %395 : vector<8x128xi1>, vector<8x128xbf16>
    %c2_213 = arith.constant 2 : index
    %c6_214 = arith.constant 6 : index
    %c0_215 = arith.constant 0 : index
    %c0_216 = arith.constant 0 : index
    %397 = vector.load %arg3[%c2_213, %c6_214, %c0_215, %c0_216] : memref<3x9x128x128xbf16, #tpu.memory_space<vmem>>, vector<1x1x128x128xbf16>
    %398 = vector.shape_cast %397 : vector<1x1x128x128xbf16> to vector<128x128xbf16>
    %cst_217 = arith.constant dense<0.000000e+00> : vector<8x128xf32>
    %399 = tpu.matmul %396, %398, %cst_217 {dimension_numbers = #tpu.dot_dimension_numbers<[1], [0], [0], [1], [0, 0, 1, 1], [], []>} : vector<8x128xbf16>, vector<128x128xbf16>, vector<8x128xf32> -> vector<8x128xf32>
    %400 = arith.addf %384, %399 : vector<8x128xf32>
    %c6_i32 = arith.constant 6 : i32
    %401 = tpu.dynamic_rotate %302 by %c6_i32 dim 0 : vector<8x128xf32>, i32 -> vector<8x128xf32>
    %402 = arith.truncf %401 : vector<8x128xf32> to vector<8x128xbf16>
    %c1_i32_218 = arith.constant 1 : i32
    %403 = vector.broadcast %c1_i32_218 : i32 to vector<8x1xi32>
    %404 = arith.cmpi slt, %307, %403 : vector<8x1xi32>
    %c0_i32_219 = arith.constant 0 : i32
    %405 = arith.sitofp %c0_i32_219 : i32 to bf16
    %406 = vector.shape_cast %404 : vector<8x1xi1> to vector<8x1xi1>
    %407 = vector.broadcast %406 : vector<8x1xi1> to vector<8x128xi1>
    %408 = vector.broadcast %405 : bf16 to vector<8x128xbf16>
    %409 = arith.select %407, %402, %408 : vector<8x128xi1>, vector<8x128xbf16>
    %c2_220 = arith.constant 2 : index
    %c7_221 = arith.constant 7 : index
    %c0_222 = arith.constant 0 : index
    %c0_223 = arith.constant 0 : index
    %410 = vector.load %arg3[%c2_220, %c7_221, %c0_222, %c0_223] : memref<3x9x128x128xbf16, #tpu.memory_space<vmem>>, vector<1x1x128x128xbf16>
    %411 = vector.shape_cast %410 : vector<1x1x128x128xbf16> to vector<128x128xbf16>
    %cst_224 = arith.constant dense<0.000000e+00> : vector<8x128xf32>
    %412 = tpu.matmul %409, %411, %cst_224 {dimension_numbers = #tpu.dot_dimension_numbers<[1], [0], [0], [1], [0, 0, 1, 1], [], []>} : vector<8x128xbf16>, vector<128x128xbf16>, vector<8x128xf32> -> vector<8x128xf32>
    %413 = arith.addf %400, %412 : vector<8x128xf32>
    %c5_i32_225 = arith.constant 5 : i32
    %414 = tpu.dynamic_rotate %302 by %c5_i32_225 dim 0 : vector<8x128xf32>, i32 -> vector<8x128xf32>
    %415 = arith.truncf %414 : vector<8x128xf32> to vector<8x128xbf16>
    %c1_i32_226 = arith.constant 1 : i32
    %416 = vector.broadcast %c1_i32_226 : i32 to vector<8x1xi32>
    %417 = arith.cmpi slt, %307, %416 : vector<8x1xi32>
    %c1_i32_227 = arith.constant 1 : i32
    %418 = vector.broadcast %c1_i32_227 : i32 to vector<8x1xi32>
    %419 = arith.cmpi slt, %309, %418 : vector<8x1xi32>
    %420 = arith.andi %417, %419 : vector<8x1xi1>
    %c0_i32_228 = arith.constant 0 : i32
    %421 = arith.sitofp %c0_i32_228 : i32 to bf16
    %422 = vector.shape_cast %420 : vector<8x1xi1> to vector<8x1xi1>
    %423 = vector.broadcast %422 : vector<8x1xi1> to vector<8x128xi1>
    %424 = vector.broadcast %421 : bf16 to vector<8x128xbf16>
    %425 = arith.select %423, %415, %424 : vector<8x128xi1>, vector<8x128xbf16>
    %c2_229 = arith.constant 2 : index
    %c8_230 = arith.constant 8 : index
    %c0_231 = arith.constant 0 : index
    %c0_232 = arith.constant 0 : index
    %426 = vector.load %arg3[%c2_229, %c8_230, %c0_231, %c0_232] : memref<3x9x128x128xbf16, #tpu.memory_space<vmem>>, vector<1x1x128x128xbf16>
    %427 = vector.shape_cast %426 : vector<1x1x128x128xbf16> to vector<128x128xbf16>
    %cst_233 = arith.constant dense<0.000000e+00> : vector<8x128xf32>
    %428 = tpu.matmul %425, %427, %cst_233 {dimension_numbers = #tpu.dot_dimension_numbers<[1], [0], [0], [1], [0, 0, 1, 1], [], []>} : vector<8x128xbf16>, vector<128x128xbf16>, vector<8x128xf32> -> vector<8x128xf32>
    %429 = arith.addf %413, %428 : vector<8x128xf32>
    %c3_234 = arith.constant 3 : index
    %c0_235 = arith.constant 0 : index
    %c0_236 = arith.constant 0 : index
    %430 = vector.load %arg4[%c3_234, %c0_235, %c0_236] : memref<4x1x128xf32, #tpu.memory_space<vmem>>, vector<1x1x128xf32>
    %431 = vector.shape_cast %430 : vector<1x1x128xf32> to vector<1x128xf32>
    %432 = vector.broadcast %431 : vector<1x128xf32> to vector<8x128xf32>
    %433 = arith.addf %429, %432 : vector<8x128xf32>
    %cst_237 = arith.constant 0.000000e+00 : f32
    %434 = vector.broadcast %cst_237 : f32 to vector<8x128xf32>
    %435 = arith.maximumf %433, %434 : vector<8x128xf32>
    %436 = tpu.iota {dimensions = array<i32: 0>} : vector<8x1xi32>
    %c7_i32_238 = arith.constant 7 : i32
    %437 = vector.broadcast %c7_i32_238 : i32 to vector<8x1xi32>
    %438 = arith.andi %436, %437 : vector<8x1xi32>
    %c4_i32_239 = arith.constant 4 : i32
    %439 = vector.broadcast %c4_i32_239 : i32 to vector<8x1xi32>
    %440 = arith.cmpi slt, %438, %439 : vector<8x1xi32>
    %cst_240 = arith.constant 0.000000e+00 : f32
    %441 = vector.shape_cast %440 : vector<8x1xi1> to vector<8x1xi1>
    %442 = vector.broadcast %441 : vector<8x1xi1> to vector<8x128xi1>
    %443 = vector.broadcast %cst_240 : f32 to vector<8x128xf32>
    %444 = arith.select %442, %435, %443 : vector<8x128xi1>, vector<8x128xf32>
    %445 = vector.shape_cast %444 : vector<8x128xf32> to vector<1x8x128xf32>
    %cst_241 = arith.constant dense<0xFF800000> : vector<1x128xf32>
    %446 = vector.multi_reduction <maximumf>, %445, %cst_241 [1] : vector<1x8x128xf32> to vector<1x128xf32>
    %c0_242 = arith.constant 0 : index
    %c0_243 = arith.constant 0 : index
    %c0_244 = arith.constant 0 : index
    %447 = vector.load %arg8[%c0_242, %c0_243, %c0_244] : memref<1x1x128xf32, #tpu.memory_space<vmem>>, vector<1x1x128xf32>
    %448 = vector.shape_cast %447 : vector<1x1x128xf32> to vector<1x128xf32>
    %449 = vector.shape_cast %446 : vector<1x128xf32> to vector<1x1x128xf32>
    tpu.vector_store %arg8[%c0_242, %c0_243, %c0_244], %449 {strides = array<i32>} : memref<1x1x128xf32, #tpu.memory_space<vmem>>, vector<1x1x128xf32>,
    return
  }
  func.func @transform_0(%arg0: i32) -> (i32, i32, i32) {
    %c0_i32 = arith.constant 0 : i32
    %c0_i32_0 = arith.constant 0 : i32
    %c0_i32_1 = arith.constant 0 : i32
    return %arg0, %c0_i32, %c0_i32_0 : i32, i32, i32
  }
  func.func @transform_1(%arg0: i32) -> (i32, i32) {
    %c0_i32 = arith.constant 0 : i32
    %c0_i32_0 = arith.constant 0 : i32
    %c0_i32_1 = arith.constant 0 : i32
    return %c0_i32, %c0_i32_0 : i32, i32
  }
  func.func @transform_2(%arg0: i32) -> (i32, i32, i32, i32) {
    %c0_i32 = arith.constant 0 : i32
    %c0_i32_0 = arith.constant 0 : i32
    %c0_i32_1 = arith.constant 0 : i32
    %c0_i32_2 = arith.constant 0 : i32
    %c0_i32_3 = arith.constant 0 : i32
    return %c0_i32, %c0_i32_0, %c0_i32_1, %c0_i32_2 : i32, i32, i32, i32
  }
  func.func @transform_3(%arg0: i32) -> (i32, i32, i32) {
    %c0_i32 = arith.constant 0 : i32
    %c0_i32_0 = arith.constant 0 : i32
    %c0_i32_1 = arith.constant 0 : i32
    %c0_i32_2 = arith.constant 0 : i32
    return %c0_i32, %c0_i32_0, %c0_i32_1 : i32, i32, i32
  }
  func.func @transform_4(%arg0: i32) -> (i32, i32, i32) {
    %c0_i32 = arith.constant 0 : i32
    %c0_i32_0 = arith.constant 0 : i32
    %c0_i32_1 = arith.constant 0 : i32
    %c0_i32_2 = arith.constant 0 : i32
    return %c0_i32, %c0_i32_0, %c0_i32_1 : i32, i32, i32
  }
  func.func @transform_5(%arg0: i32) -> (i32, i32, i32) {
    %c0_i32 = arith.constant 0 : i32
    %c0_i32_0 = arith.constant 0 : i32
    %c0_i32_1 = arith.constant 0 : i32
    %c0_i32_2 = arith.constant 0 : i32
    return %c0_i32, %c0_i32_0, %c0_i32_1 : i32, i32, i32
  }
  func.func @transform_6(%arg0: i32) -> (i32, i32, i32) {
    %c0_i32 = arith.constant 0 : i32
    %c0_i32_0 = arith.constant 0 : i32
    %c0_i32_1 = arith.constant 0 : i32
    %c0_i32_2 = arith.constant 0 : i32
    return %c0_i32, %c0_i32_0, %c0_i32_1 : i32, i32, i32
  }
  func.func @transform_7(%arg0: i32) -> (i32, i32, i32) {
    %c0_i32 = arith.constant 0 : i32
    %c0_i32_0 = arith.constant 0 : i32
    %c0_i32_1 = arith.constant 0 : i32
    return %arg0, %c0_i32, %c0_i32_0 : i32, i32, i32
  }
}

</mosaic_0001>

<llo_original>
// kernel: meta_template_forward.1
$region0: #{meta_template_forward.1}
  #allocation0 [shape = 'u32[]', space=smem, size = 0x4, offset = 0x4, fixed_abs, tag = 'smem constant byte address 0x4 - core index']
  #allocation1 [shape = 'u32[72,128]{1,0:T(1,128)}', space=vmem, size = 0x9000, scoped, tag = 'internal scratch']
  %s0 = inlined_call_operand.vmem [shape: bf16[2,256,128], index: 0, kind: input, shape index: {}]
  %s1 = inlined_call_operand.vmem [shape: bf16[128,128], index: 1, kind: input, shape index: {}]
  %s2 = inlined_call_operand.vmem [shape: bf16[3,9,128,128], index: 2, kind: input, shape index: {}]
  %s3 = inlined_call_operand.vmem [shape: f32[4,1,128], index: 3, kind: input, shape index: {}]
  %s4 = inlined_call_operand.vmem [shape: bf16[1,64,256], index: 4, kind: input, shape index: {}]
  %s5 = inlined_call_operand.vmem [shape: bf16[1,16,64], index: 5, kind: input, shape index: {}]
  %s6 = inlined_call_operand.vmem [shape: bf16[1,8,16], index: 6, kind: input, shape index: {}]
  %s7 = inlined_call_operand.hbm [shape: f32[2,1,128], index: 7, kind: output, shape index: {}]
  %s8 = sld [smem:[#allocation0]]
  $region61: #{meta_template_forward.1} parent=0
    _
  %s10 = ssub.s32 1, %s8
  %s11 = scalar_select 0, %s10, %s8
  $region1: #{meta_template_forward.1} parent=0
    #allocation2 [shape = 'u8[1024]{0}', space=vmem, size = 0x400, scoped, tag = 'output window, operand 0']
    #allocation3 [shape = 's32[2]{0}', space=sflag, size = 0x8, scoped, tag = 'scoped memory for meta_template_forward.1']
    %12 = vsyncpa [#allocation3], 0
    %s13 = scalar_lea.sflag [#allocation3], 1
    %14 = vsyncpa %s13, 0
    loop: start=0, step=1, limit=4
    $region2: #{meta_template_forward.1} parent=1 // loop_pre_header
      _
    $region3: #{meta_template_forward.1} parent=1 // loop_header
      %s16 = sphi 0, %s20
      %p17 = scmp.ge.s32.totalorder %s16, 4
      %s26 = sphi 0, %s28
      %s29 = sphi 0, %s26
      %s30 = sphi 0, %s29
      %s46 = sphi 0, %s30
      %s50 = sphi 0, %s50
      %s52 = sphi 0, %s50
      %s53 = sphi 0, %s52
      %s67 = sphi 0, %s53
      %s71 = sphi 0, %s71
      %s73 = sphi 0, %s71
      %s74 = sphi 0, %s73
      %s88 = sphi 0, %s74
      %s92 = sphi 0, %s92
      %s94 = sphi 0, %s92
      %s95 = sphi 0, %s94
      %s109 = sphi 0, %s95
      %s113 = sphi 0, %s113
      %s115 = sphi 0, %s113
      %s116 = sphi 0, %s115
      %s130 = sphi 0, %s116
      %s134 = sphi 0, %s134
      %s136 = sphi 0, %s134
      %s137 = sphi 0, %s136
      %s151 = sphi 0, %s137
      %s155 = sphi 0, %s155
      %s157 = sphi 0, %s155
      %s158 = sphi 0, %s157
      %s172 = sphi 0, %s158
      %s178 = sphi 0, %s180
      %s181 = sphi 0, %s178
      %s182 = sphi 0, %s181
      %s198 = sphi 0, %s182
    $region4: #{meta_template_forward.1} parent=1 // loop_header_branch
      %19 = sbr.rel (%p17) target = $region8
    $region5: #{meta_template_forward.1} parent=1 // loop_body
      %s21 = ssub.s32 %s16, 1
      %s22 = ssub.s32 %s16, 2
      %s23 = sadd.s32 %s16, 1
      %s24 = ssub.s32 %s16, %s23
      %p25 = scmp.eq.s32.totalorder %s24, 0
      %s27 = sadd.s32 %s26, 1
      %s28 = scalar_select %p25, %s26, %s27
      %p31 = pneg %p25
      %p32 = scmp.eq.s32.totalorder %s16, 1
      %p33 = por %p31, %p32
      %p34 = scmp.ne.s32.totalorder %s26, %s29
      %p35 = scmp.eq.s32.totalorder %s16, 0
      %p36 = por %p34, %p35
      %p37 = scmp.ne.s32.totalorder %s26, %s29
      %p38 = scmp.eq.s32.totalorder %s21, 1
      %p39 = por %p37, %p38
      %p40 = scmp.ne.s32.totalorder %s29, %s30
      %p41 = scmp.eq.s32.totalorder %s21, 0
      %p42 = por %p40, %p41
      %p43 = scmp.ne.s32.totalorder %s29, %s30
      %p44 = scmp.eq.s32.totalorder %s22, 1
      %p45 = por %p43, %p44
      %p47 = scmp.ne.s32.totalorder %s30, %s46
      %p48 = scmp.eq.s32.totalorder %s22, 0
      %p49 = por %p47, %p48
      %s51 = sadd.s32 %s50, 1
      %p54 = scmp.eq.s32.totalorder %s16, 1
      %p55 = scmp.ne.s32.totalorder %s50, %s52
      %p56 = scmp.eq.s32.totalorder %s16, 0
      %p57 = por %p55, %p56
      %p58 = scmp.ne.s32.totalorder %s50, %s52
      %p59 = scmp.eq.s32.totalorder %s21, 1
      %p60 = por %p58, %p59
      %p61 = scmp.ne.s32.totalorder %s52, %s53
      %p62 = scmp.eq.s32.totalorder %s21, 0
      %p63 = por %p61, %p62
      %p64 = scmp.ne.s32.totalorder %s52, %s53
      %p65 = scmp.eq.s32.totalorder %s22, 1
      %p66 = por %p64, %p65
      %p68 = scmp.ne.s32.totalorder %s53, %s67
      %p69 = scmp.eq.s32.totalorder %s22, 0
      %p70 = por %p68, %p69
      %s72 = sadd.s32 %s71, 1
      %p75 = scmp.eq.s32.totalorder %s16, 1
      %p76 = scmp.ne.s32.totalorder %s71, %s73
      %p77 = scmp.eq.s32.totalorder %s16, 0
      %p78 = por %p76, %p77
      %p79 = scmp.ne.s32.totalorder %s71, %s73
      %p80 = scmp.eq.s32.totalorder %s21, 1
      %p81 = por %p79, %p80
      %p82 = scmp.ne.s32.totalorder %s73, %s74
      %p83 = scmp.eq.s32.totalorder %s21, 0
      %p84 = por %p82, %p83
      %p85 = scmp.ne.s32.totalorder %s73, %s74
      %p86 = scmp.eq.s32.totalorder %s22, 1
      %p87 = por %p85, %p86
      %p89 = scmp.ne.s32.totalorder %s74, %s88
      %p90 = scmp.eq.s32.totalorder %s22, 0
      %p91 = por %p89, %p90
      %s93 = sadd.s32 %s92, 1
      %p96 = scmp.eq.s32.totalorder %s16, 1
      %p97 = scmp.ne.s32.totalorder %s92, %s94
      %p98 = scmp.eq.s32.totalorder %s16, 0
      %p99 = por %p97, %p98
      %p100 = scmp.ne.s32.totalorder %s92, %s94
      %p101 = scmp.eq.s32.totalorder %s21, 1
      %p102 = por %p100, %p101
      %p103 = scmp.ne.s32.totalorder %s94, %s95
      %p104 = scmp.eq.s32.totalorder %s21, 0
      %p105 = por %p103, %p104
      %p106 = scmp.ne.s32.totalorder %s94, %s95
      %p107 = scmp.eq.s32.totalorder %s22, 1
      %p108 = por %p106, %p107
      %p110 = scmp.ne.s32.totalorder %s95, %s109
      %p111 = scmp.eq.s32.totalorder %s22, 0
      %p112 = por %p110, %p111
      %s114 = sadd.s32 %s113, 1
      %p117 = scmp.eq.s32.totalorder %s16, 1
      %p118 = scmp.ne.s32.totalorder %s113, %s115
      %p119 = scmp.eq.s32.totalorder %s16, 0
      %p120 = por %p118, %p119
      %p121 = scmp.ne.s32.totalorder %s113, %s115
      %p122 = scmp.eq.s32.totalorder %s21, 1
      %p123 = por %p121, %p122
      %p124 = scmp.ne.s32.totalorder %s115, %s116
      %p125 = scmp.eq.s32.totalorder %s21, 0
      %p126 = por %p124, %p125
      %p127 = scmp.ne.s32.totalorder %s115, %s116
      %p128 = scmp.eq.s32.totalorder %s22, 1
      %p129 = por %p127, %p128
      %p131 = scmp.ne.s32.totalorder %s116, %s130
      %p132 = scmp.eq.s32.totalorder %s22, 0
      %p133 = por %p131, %p132
      %s135 = sadd.s32 %s134, 1
      %p138 = scmp.eq.s32.totalorder %s16, 1
      %p139 = scmp.ne.s32.totalorder %s134, %s136
      %p140 = scmp.eq.s32.totalorder %s16, 0
      %p141 = por %p139, %p140
      %p142 = scmp.ne.s32.totalorder %s134, %s136
      %p143 = scmp.eq.s32.totalorder %s21, 1
      %p144 = por %p142, %p143
      %p145 = scmp.ne.s32.totalorder %s136, %s137
      %p146 = scmp.eq.s32.totalorder %s21, 0
      %p147 = por %p145, %p146
      %p148 = scmp.ne.s32.totalorder %s136, %s137
      %p149 = scmp.eq.s32.totalorder %s22, 1
      %p150 = por %p148, %p149
      %p152 = scmp.ne.s32.totalorder %s137, %s151
      %p153 = scmp.eq.s32.totalorder %s22, 0
      %p154 = por %p152, %p153
      %s156 = sadd.s32 %s155, 1
      %p159 = scmp.eq.s32.totalorder %s16, 1
      %p160 = scmp.ne.s32.totalorder %s155, %s157
      %p161 = scmp.eq.s32.totalorder %s16, 0
      %p162 = por %p160, %p161
      %p163 = scmp.ne.s32.totalorder %s155, %s157
      %p164 = scmp.eq.s32.totalorder %s21, 1
      %p165 = por %p163, %p164
      %p166 = scmp.ne.s32.totalorder %s157, %s158
      %p167 = scmp.eq.s32.totalorder %s21, 0
      %p168 = por %p166, %p167
      %p169 = scmp.ne.s32.totalorder %s157, %s158
      %p170 = scmp.eq.s32.totalorder %s22, 1
      %p171 = por %p169, %p170
      %p173 = scmp.ne.s32.totalorder %s158, %s172
      %p174 = scmp.eq.s32.totalorder %s22, 0
      %p175 = por %p173, %p174
      %s176 = ssub.s32 %s16, %s23
      %p177 = scmp.eq.s32.totalorder %s176, 0
      %s179 = sadd.s32 %s178, 1
      %s180 = scalar_select %p177, %s178, %s179
      %p183 = pneg %p177
      %p184 = scmp.eq.s32.totalorder %s16, 1
      %p185 = por %p183, %p184
      %p186 = scmp.ne.s32.totalorder %s178, %s181
      %p187 = scmp.eq.s32.totalorder %s16, 0
      %p188 = por %p186, %p187
      %p189 = scmp.ne.s32.totalorder %s178, %s181
      %p190 = scmp.eq.s32.totalorder %s21, 1
      %p191 = por %p189, %p190
      %p192 = scmp.ne.s32.totalorder %s181, %s182
      %p193 = scmp.eq.s32.totalorder %s21, 0
      %p194 = por %p192, %p193
      %p195 = scmp.ne.s32.totalorder %s181, %s182
      %p196 = scmp.eq.s32.totalorder %s22, 1
      %p197 = por %p195, %p196
      %p199 = scmp.ne.s32.totalorder %s182, %s198
      %p200 = scmp.eq.s32.totalorder %s22, 0
      %p201 = por %p199, %p200
      %p202 = scmp.le.s32.totalorder 1, %s16
      %p203 = scmp.lt.s32.totalorder %s16, 3
      %p204 = pnand %p202, %p203
      %p205 = pneg %p204
      // Predicated region
      $region9: #{meta_template_forward.1} parent=5 // pred_check
        _
      $region10: #{meta_template_forward.1} parent=5 // pred_check_branch
        %207 = sbr.rel (%p204) target = $region12
      $region11: #{meta_template_forward.1} parent=5 // pred_region
        %s208 = ssub.s32 %s16, 1
        // Predicated region
        $region13: #{meta_template_forward.1} parent=11 // pred_check
          %p209 = pneg %p63
        $region14: #{meta_template_forward.1} parent=11 // pred_check_branch
          %211 = sbr.rel (%p209) target = $region16
        $region15: #{meta_template_forward.1} parent=11 // pred_region
          _
        $region16: #{meta_template_forward.1} parent=11 // pred_fallthru
          _
        // Predicated region
        $region17: #{meta_template_forward.1} parent=11 // pred_check
          %p212 = pneg %p84
        $region18: #{meta_template_forward.1} parent=11 // pred_check_branch
          %214 = sbr.rel (%p212) target = $region20
        $region19: #{meta_template_forward.1} parent=11 // pred_region
          _
        $region20: #{meta_template_forward.1} parent=11 // pred_fallthru
          _
        // Predicated region
        $region21: #{meta_template_forward.1} parent=11 // pred_check
          %p215 = pneg %p105
        $region22: #{meta_template_forward.1} parent=11 // pred_check_branch
          %217 = sbr.rel (%p215) target = $region24
        $region23: #{meta_template_forward.1} parent=11 // pred_region
          _
        $region24: #{meta_template_forward.1} parent=11 // pred_fallthru
          _
        // Predicated region
        $region25: #{meta_template_forward.1} parent=11 // pred_check
          %p218 = pneg %p126
        $region26: #{meta_template_forward.1} parent=11 // pred_check_branch
          %220 = sbr.rel (%p218) target = $region28
        $region27: #{meta_template_forward.1} parent=11 // pred_region
          _
        $region28: #{meta_template_forward.1} parent=11 // pred_fallthru
          _
        // Predicated region
        $region29: #{meta_template_forward.1} parent=11 // pred_check
          %p221 = pneg %p147
        $region30: #{meta_template_forward.1} parent=11 // pred_check_branch
          %223 = sbr.rel (%p221) target = $region32
        $region31: #{meta_template_forward.1} parent=11 // pred_region
          _
        $region32: #{meta_template_forward.1} parent=11 // pred_fallthru
          _
        // Predicated region
        $region33: #{meta_template_forward.1} parent=11 // pred_check
          %p224 = pneg %p168
        $region34: #{meta_template_forward.1} parent=11 // pred_check_branch
          %226 = sbr.rel (%p224) target = $region36
        $region35: #{meta_template_forward.1} parent=11 // pred_region
          _
        $region36: #{meta_template_forward.1} parent=11 // pred_fallthru
          _
      $region12: #{meta_template_forward.1} parent=5 // pred_fallthru
        _
      %p227 = scmp.lt.s32.totalorder %s16, 2
      // Predicated region
      $region37: #{meta_template_forward.1} parent=5 // pred_check
        %p228 = pneg %p227
      $region38: #{meta_template_forward.1} parent=5 // pred_check_branch
        %230 = sbr.rel (%p228) target = $region40
      $region39: #{meta_template_forward.1} parent=5 // pred_region
        // Predicated region
        $region41: #{meta_template_forward.1} parent=39 // pred_check
          %p231 = pneg %p36
        $region42: #{meta_template_forward.1} parent=39 // pred_check_branch
          %233 = sbr.rel (%p231) target = $region44
        $region43: #{meta_template_forward.1} parent=39 // pred_region
          %p234 = scmp.lt.s32.totalorder %s16, 1
          %s235 = scalar_select %p234, %s16, 1
          %s236 = smul.addr %s235, 32
          %s237 = smul.addr %s236, 4
          %s238 = scalar_lea.vmem %s0, %s237
        $region44: #{meta_template_forward.1} parent=39 // pred_fallthru
          _
      $region40: #{meta_template_forward.1} parent=5 // pred_fallthru
        _
      %p239 = scmp.le.s32.totalorder 1, %s16
      %p240 = scmp.lt.s32.totalorder %s16, 3
      %p241 = pnand %p239, %p240
      %p242 = pneg %p241
      // Predicated region
      $region45: #{meta_template_forward.1} parent=5 // pred_check
        _
      $region46: #{meta_template_forward.1} parent=5 // pred_check_branch
        %244 = sbr.rel (%p241) target = $region48
      $region47: #{meta_template_forward.1} parent=5 // pred_region
        %s245 = ssub.s32 %s16, 1
        %p246 = scmp.lt.s32.totalorder %s21, 1
        %s247 = scalar_select %p246, %s21, 1
        %s248 = smul.addr %s247, 32
        %s249 = smul.addr %s248, 4
        %s250 = scalar_lea.vmem %s0, %s249
        %p251 = pneg %p42
        %p252 = pneg %p39
        %p253 = pneg %p63
        %p254 = pneg %p60
        %p255 = pneg %p84
        %p256 = pneg %p81
        %p257 = pneg %p105
        %p258 = pneg %p102
        %p259 = pneg %p126
        %p260 = pneg %p123
        %p261 = pneg %p147
        %p262 = pneg %p144
        %p263 = pneg %p168
        %p264 = pneg %p165
        %p265 = pneg %p194
        %p266 = pneg %p191
        %s267 = sand.u32 %s181, 1
        %s268 = scalar_lea.sflag [#allocation3], %s267
        %s269 = sand.u32 %s181, 1
        %s270 = scalar_lea.vmem [#allocation2], %s269
        %p271 = scmp.lt.s32.totalorder %s21, 1
        %s272 = scalar_select %p271, %s21, 1
        %s273 = smul.addr %s272, 32
        %s274 = smul.addr %s273, 4
        %s275 = scalar_lea.vmem %s0, %s274
        %v277 = vld [vmem:[%s275] sm:$0xf]
        %v278 = vld [vmem:[%s275 + $0x4] sm:$0xf]
        %v279 = vld [vmem:[%s275 + $0x8] sm:$0xf]
        %v280 = vld [vmem:[%s275 + $0xc] sm:$0xf]
        %v281 = vld [vmem:[%s275 + $0x10] sm:$0xf]
        %v282 = vld [vmem:[%s275 + $0x14] sm:$0xf]
        %v283 = vld [vmem:[%s275 + $0x18] sm:$0xf]
        %v284 = vld [vmem:[%s275 + $0x1c] sm:$0xf]
        %v285 = vld [vmem:[%s275 + $0x20] sm:$0xf]
        %v286 = vld [vmem:[%s275 + $0x24] sm:$0xf]
        %v287 = vld [vmem:[%s275 + $0x28] sm:$0xf]
        %v288 = vld [vmem:[%s275 + $0x2c] sm:$0xf]
        %v289 = vld [vmem:[%s275 + $0x30] sm:$0xf]
        %v290 = vld [vmem:[%s275 + $0x34] sm:$0xf]
        %v291 = vld [vmem:[%s275 + $0x38] sm:$0xf]
        %v292 = vld [vmem:[%s275 + $0x3c] sm:$0xf]
        %v293 = vld [vmem:[%s275 + $0x40] sm:$0xf]
        %v294 = vld [vmem:[%s275 + $0x44] sm:$0xf]
        %v295 = vld [vmem:[%s275 + $0x48] sm:$0xf]
        %v296 = vld [vmem:[%s275 + $0x4c] sm:$0xf]
        %v297 = vld [vmem:[%s275 + $0x50] sm:$0xf]
        %v298 = vld [vmem:[%s275 + $0x54] sm:$0xf]
        %v299 = vld [vmem:[%s275 + $0x58] sm:$0xf]
        %v300 = vld [vmem:[%s275 + $0x5c] sm:$0xf]
        %v301 = vld [vmem:[%s275 + $0x60] sm:$0xf]
        %v302 = vld [vmem:[%s275 + $0x64] sm:$0xf]
        %v303 = vld [vmem:[%s275 + $0x68] sm:$0xf]
        %v304 = vld [vmem:[%s275 + $0x6c] sm:$0xf]
        %v305 = vld [vmem:[%s275 + $0x70] sm:$0xf]
        %v306 = vld [vmem:[%s275 + $0x74] sm:$0xf]
        %v307 = vld [vmem:[%s275 + $0x78] sm:$0xf]
        %v308 = vld [vmem:[%s275 + $0x7c] sm:$0xf]
        %v309 = vld [vmem:[%s1] sm:$0xf]
        %v310 = vld [vmem:[%s1 + $0x4] sm:$0xf]
        %v311 = vld [vmem:[%s1 + $0x8] sm:$0xf]
        %v312 = vld [vmem:[%s1 + $0xc] sm:$0xf]
        %v313 = vld [vmem:[%s1 + $0x10] sm:$0xf]
        %v314 = vld [vmem:[%s1 + $0x14] sm:$0xf]
        %v315 = vld [vmem:[%s1 + $0x18] sm:$0xf]
        %v316 = vld [vmem:[%s1 + $0x1c] sm:$0xf]
        %v317 = vld [vmem:[%s1 + $0x20] sm:$0xf]
        %v318 = vld [vmem:[%s1 + $0x24] sm:$0xf]
        %v319 = vld [vmem:[%s1 + $0x28] sm:$0xf]
        %v320 = vld [vmem:[%s1 + $0x2c] sm:$0xf]
        %v321 = vld [vmem:[%s1 + $0x30] sm:$0xf]
        %v322 = vld [vmem:[%s1 + $0x34] sm:$0xf]
        %v323 = vld [vmem:[%s1 + $0x38] sm:$0xf]
        %v324 = vld [vmem:[%s1 + $0x3c] sm:$0xf]
        %v325 = vld [vmem:[%s3] sm:$0x1]
        %v327 = vperm.slane %v325, 0
        %v361 = vunpack.c.l.b16 %v277
        %v362 = vunpack.c.l.b16 %v278
        %v363 = vunpack.c.l.b16 %v279
        %v364 = vunpack.c.l.b16 %v280
        %v365 = vunpack.c.l.b16 %v281
        %v366 = vunpack.c.l.b16 %v282
        %v367 = vunpack.c.l.b16 %v283
        %v368 = vunpack.c.l.b16 %v284
        %v369 = vunpack.c.l.b16 %v285
        %v370 = vunpack.c.l.b16 %v286
        %v371 = vunpack.c.l.b16 %v287
        %v372 = vunpack.c.l.b16 %v288
        %v373 = vunpack.c.l.b16 %v289
        %v374 = vunpack.c.l.b16 %v290
        %v375 = vunpack.c.l.b16 %v291
        %v376 = vunpack.c.l.b16 %v292
        %v377 = vunpack.c.l.b16 %v293
        %v378 = vunpack.c.l.b16 %v294
        %v379 = vunpack.c.l.b16 %v295
        %v380 = vunpack.c.l.b16 %v296
        %v381 = vunpack.c.l.b16 %v297
        %v382 = vunpack.c.l.b16 %v298
        %v383 = vunpack.c.l.b16 %v299
        %v384 = vunpack.c.l.b16 %v300
        %v385 = vunpack.c.l.b16 %v301
        %v386 = vunpack.c.l.b16 %v302
        %v387 = vunpack.c.l.b16 %v303
        %v388 = vunpack.c.l.b16 %v304
        %v389 = vunpack.c.l.b16 %v305
        %v390 = vunpack.c.l.b16 %v306
        %v391 = vunpack.c.l.b16 %v307
        %v392 = vunpack.c.l.b16 %v308
        %v393 = vpack.c.b16 %v362, %v361
        %v394 = vpack.c.b16 %v364, %v363
        %v395 = vpack.c.b16 %v366, %v365
        %v396 = vpack.c.b16 %v368, %v367
        %v397 = vpack.c.b16 %v370, %v369
        %v398 = vpack.c.b16 %v372, %v371
        %v399 = vpack.c.b16 %v374, %v373
        %v400 = vpack.c.b16 %v376, %v375
        %v401 = vpack.c.b16 %v378, %v377
        %v402 = vpack.c.b16 %v380, %v379
        %v403 = vpack.c.b16 %v382, %v381
        %v404 = vpack.c.b16 %v384, %v383
        %v405 = vpack.c.b16 %v386, %v385
        %v406 = vpack.c.b16 %v388, %v387
        %v407 = vpack.c.b16 %v390, %v389
        %v408 = vpack.c.b16 %v392, %v391
        %v441 = vunpack.c.l.b16 %v309
        %v442 = vunpack.c.l.b16 %v310
        %v443 = vunpack.c.l.b16 %v311
        %v444 = vunpack.c.l.b16 %v312
        %v445 = vunpack.c.l.b16 %v313
        %v446 = vunpack.c.l.b16 %v314
        %v447 = vunpack.c.l.b16 %v315
        %v448 = vunpack.c.l.b16 %v316
        %v449 = vunpack.c.l.b16 %v317
        %v450 = vunpack.c.l.b16 %v318
        %v451 = vunpack.c.l.b16 %v319
        %v452 = vunpack.c.l.b16 %v320
        %v453 = vunpack.c.l.b16 %v321
        %v454 = vunpack.c.l.b16 %v322
        %v455 = vunpack.c.l.b16 %v323
        %v456 = vunpack.c.l.b16 %v324
        %v457 = vpack.c.b16 %v442, %v441
        %v458 = vpack.c.b16 %v444, %v443
        %v459 = vpack.c.b16 %v446, %v445
        %v460 = vpack.c.b16 %v448, %v447
        %v461 = vpack.c.b16 %v450, %v449
        %v462 = vpack.c.b16 %v452, %v451
        %v463 = vpack.c.b16 %v454, %v453
        %v464 = vpack.c.b16 %v456, %v455
        %473 = vmatpush.bf16.msra.mxu0 %v464
        %474 = vmatpush.bf16.msra.mxu0 %v463
        %475 = vmatpush.bf16.msra.mxu0 %v462
        %476 = vmatpush.bf16.msra.mxu0 %v461
        %477 = vmatpush.bf16.msra.mxu0 %v460
        %478 = vmatpush.bf16.msra.mxu0 %v459
        %479 = vmatpush.bf16.msra.mxu0 %v458
        %480 = vmatpush.bf16.msra.mxu0 %v457
        %481 = vmatmul.bf16.gmra.mxu0 %v393
        %v482 = vpop.f32.mrf.mxu0
        %v483 = vadd.f32 %v327, %v482
        %v484 = vpop.f32.mrf.mxu0
        %v485 = vadd.f32 %v327, %v484
        %486 = vmatmul.bf16.gmra.mxu0 %v394
        %v487 = vpop.f32.mrf.mxu0
        %v488 = vadd.f32 %v327, %v487
        %v489 = vpop.f32.mrf.mxu0
        %v490 = vadd.f32 %v327, %v489
        %491 = vmatmul.bf16.gmra.mxu0 %v395
        %v492 = vpop.f32.mrf.mxu0
        %v493 = vadd.f32 %v327, %v492
        %v494 = vpop.f32.mrf.mxu0
        %v495 = vadd.f32 %v327, %v494
        %496 = vmatmul.bf16.gmra.mxu0 %v396
        %v497 = vpop.f32.mrf.mxu0
        %v498 = vadd.f32 %v327, %v497
        %v499 = vpop.f32.mrf.mxu0
        %v500 = vadd.f32 %v327, %v499
        %501 = vmatmul.bf16.gmra.mxu0 %v397
        %v502 = vpop.f32.mrf.mxu0
        %v503 = vadd.f32 %v327, %v502
        %v504 = vpop.f32.mrf.mxu0
        %v505 = vadd.f32 %v327, %v504
        %506 = vmatmul.bf16.gmra.mxu0 %v398
        %v507 = vpop.f32.mrf.mxu0
        %v508 = vadd.f32 %v327, %v507
        %v509 = vpop.f32.mrf.mxu0
        %v510 = vadd.f32 %v327, %v509
        %511 = vmatmul.bf16.gmra.mxu0 %v399
        %v512 = vpop.f32.mrf.mxu0
        %v513 = vadd.f32 %v327, %v512
        %v514 = vpop.f32.mrf.mxu0
        %v515 = vadd.f32 %v327, %v514
        %516 = vmatmul.bf16.gmra.mxu0 %v400
        %v517 = vpop.f32.mrf.mxu0
        %v518 = vadd.f32 %v327, %v517
        %v519 = vpop.f32.mrf.mxu0
        %v520 = vadd.f32 %v327, %v519
        %521 = vmatmul.bf16.gmra.mxu0 %v401
        %v522 = vpop.f32.mrf.mxu0
        %v523 = vadd.f32 %v327, %v522
        %v524 = vpop.f32.mrf.mxu0
        %v525 = vadd.f32 %v327, %v524
        %526 = vmatmul.bf16.gmra.mxu0 %v402
        %v527 = vpop.f32.mrf.mxu0
        %v528 = vadd.f32 %v327, %v527
        %v529 = vpop.f32.mrf.mxu0
        %v530 = vadd.f32 %v327, %v529
        %531 = vmatmul.bf16.gmra.mxu0 %v403
        %v532 = vpop.f32.mrf.mxu0
        %v533 = vadd.f32 %v327, %v532
        %v534 = vpop.f32.mrf.mxu0
        %v535 = vadd.f32 %v327, %v534
        %536 = vmatmul.bf16.gmra.mxu0 %v404
        %v537 = vpop.f32.mrf.mxu0
        %v538 = vadd.f32 %v327, %v537
        %v539 = vpop.f32.mrf.mxu0
        %v540 = vadd.f32 %v327, %v539
        %541 = vmatmul.bf16.gmra.mxu0 %v405
        %v542 = vpop.f32.mrf.mxu0
        %v543 = vadd.f32 %v327, %v542
        %v544 = vpop.f32.mrf.mxu0
        %v545 = vadd.f32 %v327, %v544
        %546 = vmatmul.bf16.gmra.mxu0 %v406
        %v547 = vpop.f32.mrf.mxu0
        %v548 = vadd.f32 %v327, %v547
        %v549 = vpop.f32.mrf.mxu0
        %v550 = vadd.f32 %v327, %v549
        %551 = vmatmul.bf16.gmra.mxu0 %v407
        %v552 = vpop.f32.mrf.mxu0
        %v553 = vadd.f32 %v327, %v552
        %v554 = vpop.f32.mrf.mxu0
        %v555 = vadd.f32 %v327, %v554
        %556 = vmatmul.bf16.gmra.mxu0 %v408
        %v557 = vpop.f32.mrf.mxu0
        %v558 = vadd.f32 %v327, %v557
        %v559 = vpop.f32.mrf.mxu0
        %v560 = vadd.f32 %v327, %v559
        %561 = vdwg.mxu0
        %v562 = vmax.f32 %v483, 0.0
        %v563 = vmax.f32 %v485, 0.0
        %v564 = vmax.f32 %v488, 0.0
        %v565 = vmax.f32 %v490, 0.0
        %v566 = vmax.f32 %v493, 0.0
        %v567 = vmax.f32 %v495, 0.0
        %v568 = vmax.f32 %v498, 0.0
        %v569 = vmax.f32 %v500, 0.0
        %v570 = vmax.f32 %v503, 0.0
        %v571 = vmax.f32 %v505, 0.0
        %v572 = vmax.f32 %v508, 0.0
        %v573 = vmax.f32 %v510, 0.0
        %v574 = vmax.f32 %v513, 0.0
        %v575 = vmax.f32 %v515, 0.0
        %v576 = vmax.f32 %v518, 0.0
        %v577 = vmax.f32 %v520, 0.0
        %v578 = vmax.f32 %v523, 0.0
        %v579 = vmax.f32 %v525, 0.0
        %v580 = vmax.f32 %v528, 0.0
        %v581 = vmax.f32 %v530, 0.0
        %v582 = vmax.f32 %v533, 0.0
        %v583 = vmax.f32 %v535, 0.0
        %v584 = vmax.f32 %v538, 0.0
        %v585 = vmax.f32 %v540, 0.0
        %v586 = vmax.f32 %v543, 0.0
        %v587 = vmax.f32 %v545, 0.0
        %v588 = vmax.f32 %v548, 0.0
        %v589 = vmax.f32 %v550, 0.0
        %v590 = vmax.f32 %v553, 0.0
        %v591 = vmax.f32 %v555, 0.0
        %v592 = vmax.f32 %v558, 0.0
        %v593 = vmax.f32 %v560, 0.0
        %v594 = vrot.slane %v562, 1
        %v595 = vrot.slane %v563, 1
        %v596 = vrot.slane %v564, 1
        %v597 = vrot.slane %v565, 1
        %v598 = vrot.slane %v566, 1
        %v599 = vrot.slane %v567, 1
        %v600 = vrot.slane %v568, 1
        %v601 = vrot.slane %v569, 1
        %v602 = vrot.slane %v570, 1
        %v603 = vrot.slane %v571, 1
        %v604 = vrot.slane %v572, 1
        %v605 = vrot.slane %v573, 1
        %v606 = vrot.slane %v574, 1
        %v607 = vrot.slane %v575, 1
        %v608 = vrot.slane %v576, 1
        %v609 = vrot.slane %v577, 1
        %v610 = vrot.slane %v578, 1
        %v611 = vrot.slane %v579, 1
        %v612 = vrot.slane %v580, 1
        %v613 = vrot.slane %v581, 1
        %v614 = vrot.slane %v582, 1
        %v615 = vrot.slane %v583, 1
        %v616 = vrot.slane %v584, 1
        %v617 = vrot.slane %v585, 1
        %v618 = vrot.slane %v586, 1
        %v619 = vrot.slane %v587, 1
        %v620 = vrot.slane %v588, 1
        %v621 = vrot.slane %v589, 1
        %v622 = vrot.slane %v590, 1
        %v623 = vrot.slane %v591, 1
        %v624 = vrot.slane %v592, 1
        %v625 = vrot.slane %v593, 1
        %v626 = vlaneseq
        %v627 = vshrl.u32 %v626, 7
        %vm628 = vcmp.lt.s32.totalorder %v627, 7
        %v629 = vsel %vm628, %v624, %v625
        %v630 = vsel %vm628, %v623, %v624
        %v631 = vsel %vm628, %v622, %v623
        %v632 = vsel %vm628, %v621, %v622
        %v633 = vsel %vm628, %v620, %v621
        %v634 = vsel %vm628, %v619, %v620
        %v635 = vsel %vm628, %v618, %v619
        %v636 = vsel %vm628, %v617, %v618
        %v637 = vsel %vm628, %v616, %v617
        %v638 = vsel %vm628, %v615, %v616
        %v639 = vsel %vm628, %v614, %v615
        %v640 = vsel %vm628, %v613, %v614
        %v641 = vsel %vm628, %v612, %v613
        %v642 = vsel %vm628, %v611, %v612
        %v643 = vsel %vm628, %v610, %v611
        %v644 = vsel %vm628, %v609, %v610
        %v645 = vsel %vm628, %v608, %v609
        %v646 = vsel %vm628, %v607, %v608
        %v647 = vsel %vm628, %v606, %v607
        %v648 = vsel %vm628, %v605, %v606
        %v649 = vsel %vm628, %v604, %v605
        %v650 = vsel %vm628, %v603, %v604
        %v651 = vsel %vm628, %v602, %v603
        %v652 = vsel %vm628, %v601, %v602
        %v653 = vsel %vm628, %v600, %v601
        %v654 = vsel %vm628, %v599, %v600
        %v655 = vsel %vm628, %v598, %v599
        %v656 = vsel %vm628, %v597, %v598
        %v657 = vsel %vm628, %v596, %v597
        %v658 = vsel %vm628, %v595, %v596
        %v659 = vsel %vm628, %v594, %v595
        %v660 = vsel %vm628, %v625, %v594
        %v661 = vmax.f32 %v562, %v659
        %v662 = vmax.f32 %v563, %v658
        %v663 = vmax.f32 %v564, %v657
        %v664 = vmax.f32 %v565, %v656
        %v665 = vmax.f32 %v566, %v655
        %v666 = vmax.f32 %v567, %v654
        %v667 = vmax.f32 %v568, %v653
        %v668 = vmax.f32 %v569, %v652
        %v669 = vmax.f32 %v570, %v651
        %v670 = vmax.f32 %v571, %v650
        %v671 = vmax.f32 %v572, %v649
        %v672 = vmax.f32 %v573, %v648
        %v673 = vmax.f32 %v574, %v647
        %v674 = vmax.f32 %v575, %v646
        %v675 = vmax.f32 %v576, %v645
        %v676 = vmax.f32 %v577, %v644
        %v677 = vmax.f32 %v578, %v643
        %v678 = vmax.f32 %v579, %v642
        %v679 = vmax.f32 %v580, %v641
        %v680 = vmax.f32 %v581, %v640
        %v681 = vmax.f32 %v582, %v639
        %v682 = vmax.f32 %v583, %v638
        %v683 = vmax.f32 %v584, %v637
        %v684 = vmax.f32 %v585, %v636
        %v685 = vmax.f32 %v586, %v635
        %v686 = vmax.f32 %v587, %v634
        %v687 = vmax.f32 %v588, %v633
        %v688 = vmax.f32 %v589, %v632
        %v689 = vmax.f32 %v590, %v631
        %v690 = vmax.f32 %v591, %v630
        %v691 = vmax.f32 %v592, %v629
        %v692 = vmax.f32 %v593, %v660
        %v693 = vmax.f32 %v661, %v663
        %v694 = vmax.f32 %v662, %v664
        %v695 = vmax.f32 %v663, %v665
        %v696 = vmax.f32 %v664, %v666
        %v697 = vmax.f32 %v665, %v667
        %v698 = vmax.f32 %v666, %v668
        %v699 = vmax.f32 %v667, %v669
        %v700 = vmax.f32 %v668, %v670
        %v701 = vmax.f32 %v669, %v671
        %v702 = vmax.f32 %v670, %v672
        %v703 = vmax.f32 %v671, %v673
        %v704 = vmax.f32 %v672, %v674
        %v705 = vmax.f32 %v673, %v675
        %v706 = vmax.f32 %v674, %v676
        %v707 = vmax.f32 %v675, %v677
        %v708 = vmax.f32 %v676, %v678
        %v709 = vmax.f32 %v677, %v679
        %v710 = vmax.f32 %v678, %v680
        %v711 = vmax.f32 %v679, %v681
        %v712 = vmax.f32 %v680, %v682
        %v713 = vmax.f32 %v681, %v683
        %v714 = vmax.f32 %v682, %v684
        %v715 = vmax.f32 %v683, %v685
        %v716 = vmax.f32 %v684, %v686
        %v717 = vmax.f32 %v685, %v687
        %v718 = vmax.f32 %v686, %v688
        %v719 = vmax.f32 %v687, %v689
        %v720 = vmax.f32 %v688, %v690
        %v721 = vmax.f32 %v689, %v691
        %v722 = vmax.f32 %v690, %v692
        %v723 = vmax.f32 %v691, %v661
        %v724 = vmax.f32 %v692, %v662
        %v725 = vpack.c.bf16 %v693, %v693
        %v726 = vpack.c.bf16 %v694, %v694
        %v727 = vpack.c.bf16 %v695, %v695
        %v728 = vpack.c.bf16 %v696, %v696
        %v729 = vpack.c.bf16 %v697, %v697
        %v730 = vpack.c.bf16 %v698, %v698
        %v731 = vpack.c.bf16 %v699, %v699
        %v732 = vpack.c.bf16 %v700, %v700
        %v733 = vpack.c.bf16 %v701, %v701
        %v734 = vpack.c.bf16 %v702, %v702
        %v735 = vpack.c.bf16 %v703, %v703
        %v736 = vpack.c.bf16 %v704, %v704
        %v737 = vpack.c.bf16 %v705, %v705
        %v738 = vpack.c.bf16 %v706, %v706
        %v739 = vpack.c.bf16 %v707, %v707
        %v740 = vpack.c.bf16 %v708, %v708
        %v741 = vpack.c.bf16 %v709, %v709
        %v742 = vpack.c.bf16 %v710, %v710
        %v743 = vpack.c.bf16 %v711, %v711
        %v744 = vpack.c.bf16 %v712, %v712
        %v745 = vpack.c.bf16 %v713, %v713
        %v746 = vpack.c.bf16 %v714, %v714
        %v747 = vpack.c.bf16 %v715, %v715
        %v748 = vpack.c.bf16 %v716, %v716
        %v749 = vpack.c.bf16 %v717, %v717
        %v750 = vpack.c.bf16 %v718, %v718
        %v751 = vpack.c.bf16 %v719, %v719
        %v752 = vpack.c.bf16 %v720, %v720
        %v753 = vpack.c.bf16 %v721, %v721
        %v754 = vpack.c.bf16 %v722, %v722
        %v755 = vpack.c.bf16 %v723, %v723
        %v756 = vpack.c.bf16 %v724, %v724
        %v757 = vld [vmem:[%s4] sm:$0xff]
        %v758 = vld [vmem:[%s4 + $0x8] sm:$0xff]
        %v759 = vld [vmem:[%s4 + $0x10] sm:$0xff]
        %v760 = vld [vmem:[%s4 + $0x18] sm:$0xff]
        %v761 = vld [vmem:[%s4 + $0x20] sm:$0xff]
        %v762 = vld [vmem:[%s4 + $0x28] sm:$0xff]
        %v763 = vld [vmem:[%s4 + $0x30] sm:$0xff]
        %v764 = vld [vmem:[%s4 + $0x38] sm:$0xff]
        %v773 = vunpack.c.l.b16 %v757
        %v774 = vunpack.c.h.b16 %v757
        %v775 = vunpack.c.l.b16 %v758
        %v776 = vunpack.c.h.b16 %v758
        %v777 = vunpack.c.l.b16 %v759
        %v778 = vunpack.c.h.b16 %v759
        %v779 = vunpack.c.l.b16 %v760
        %v780 = vunpack.c.h.b16 %v760
        %v781 = vunpack.c.l.b16 %v761
        %v782 = vunpack.c.h.b16 %v761
        %v783 = vunpack.c.l.b16 %v762
        %v784 = vunpack.c.h.b16 %v762
        %v785 = vunpack.c.l.b16 %v763
        %v786 = vunpack.c.h.b16 %v763
        %v787 = vunpack.c.l.b16 %v764
        %v788 = vunpack.c.h.b16 %v764
        %v789 = vpack.c.b16 %v775, %v773
        %v790 = vpack.c.b16 %v776, %v774
        %v791 = vpack.c.b16 %v779, %v777
        %v792 = vpack.c.b16 %v780, %v778
        %v793 = vpack.c.b16 %v783, %v781
        %v794 = vpack.c.b16 %v784, %v782
        %v795 = vpack.c.b16 %v787, %v785
        %v796 = vpack.c.b16 %v788, %v786
        %v837 = vunpack.c.l.b16 %v725
        %v838 = vunpack.c.l.b16 %v726
        %v839 = vunpack.c.l.b16 %v727
        %v840 = vunpack.c.l.b16 %v728
        %v841 = vunpack.c.l.b16 %v729
        %v842 = vunpack.c.l.b16 %v730
        %v843 = vunpack.c.l.b16 %v731
        %v844 = vunpack.c.l.b16 %v732
        %v845 = vunpack.c.l.b16 %v733
        %v846 = vunpack.c.l.b16 %v734
        %v847 = vunpack.c.l.b16 %v735
        %v848 = vunpack.c.l.b16 %v736
        %v849 = vunpack.c.l.b16 %v737
        %v850 = vunpack.c.l.b16 %v738
        %v851 = vunpack.c.l.b16 %v739
        %v852 = vunpack.c.l.b16 %v740
        %v853 = vunpack.c.l.b16 %v741
        %v854 = vunpack.c.l.b16 %v742
        %v855 = vunpack.c.l.b16 %v743
        %v856 = vunpack.c.l.b16 %v744
        %v857 = vunpack.c.l.b16 %v745
        %v858 = vunpack.c.l.b16 %v746
        %v859 = vunpack.c.l.b16 %v747
        %v860 = vunpack.c.l.b16 %v748
        %v861 = vunpack.c.l.b16 %v749
        %v862 = vunpack.c.l.b16 %v750
        %v863 = vunpack.c.l.b16 %v751
        %v864 = vunpack.c.l.b16 %v752
        %v865 = vunpack.c.l.b16 %v753
        %v866 = vunpack.c.l.b16 %v754
        %v867 = vunpack.c.l.b16 %v755
        %v868 = vunpack.c.l.b16 %v756
        %v869 = vpack.c.b16 %v838, %v837
        %v870 = vpack.c.b16 %v840, %v839
        %v871 = vpack.c.b16 %v842, %v841
        %v872 = vpack.c.b16 %v844, %v843
        %v873 = vpack.c.b16 %v846, %v845
        %v874 = vpack.c.b16 %v848, %v847
        %v875 = vpack.c.b16 %v850, %v849
        %v876 = vpack.c.b16 %v852, %v851
        %v877 = vpack.c.b16 %v854, %v853
        %v878 = vpack.c.b16 %v856, %v855
        %v879 = vpack.c.b16 %v858, %v857
        %v880 = vpack.c.b16 %v860, %v859
        %v881 = vpack.c.b16 %v862, %v861
        %v882 = vpack.c.b16 %v864, %v863
        %v883 = vpack.c.b16 %v866, %v865
        %v884 = vpack.c.b16 %v868, %v867
        %901 = vmatpush.bf16.msra.mxu0 %v876
        %902 = vmatpush.bf16.msra.mxu0 %v875
        %903 = vmatpush.bf16.msra.mxu0 %v874
        %904 = vmatpush.bf16.msra.mxu0 %v873
        %905 = vmatpush.bf16.msra.mxu0 %v872
        %906 = vmatpush.bf16.msra.mxu0 %v871
        %907 = vmatpush.bf16.msra.mxu0 %v870
        %908 = vmatpush.bf16.msra.mxu0 %v869
        %909 = vmatmul.bf16.gmra.mxu0 %v789
        %v910 = vpop.f32.mrf.mxu0
        %v911 = vadd.f32 0.0, %v910
        %v912 = vpop.f32.mrf.mxu0
        %v913 = vadd.f32 0.0, %v912
        %914 = vmatmul.bf16.gmra.mxu0 %v791
        %v915 = vpop.f32.mrf.mxu0
        %v916 = vadd.f32 0.0, %v915
        %v917 = vpop.f32.mrf.mxu0
        %v918 = vadd.f32 0.0, %v917
        %919 = vmatmul.bf16.gmra.mxu0 %v793
        %v920 = vpop.f32.mrf.mxu0
        %v921 = vadd.f32 0.0, %v920
        %v922 = vpop.f32.mrf.mxu0
        %v923 = vadd.f32 0.0, %v922
        %924 = vmatmul.bf16.gmra.mxu0 %v795
        %v925 = vpop.f32.mrf.mxu0
        %v926 = vadd.f32 0.0, %v925
        %v927 = vpop.f32.mrf.mxu0
        %v928 = vadd.f32 0.0, %v927
        %929 = vdwg.mxu0
        %930 = vmatpush.bf16.msra.mxu0 %v884
        %931 = vmatpush.bf16.msra.mxu0 %v883
        %932 = vmatpush.bf16.msra.mxu0 %v882
        %933 = vmatpush.bf16.msra.mxu0 %v881
        %934 = vmatpush.bf16.msra.mxu0 %v880
        %935 = vmatpush.bf16.msra.mxu0 %v879
        %936 = vmatpush.bf16.msra.mxu0 %v878
        %937 = vmatpush.bf16.msra.mxu0 %v877
        %938 = vmatmul.bf16.gmra.mxu0 %v790
        %v939 = vpop.f32.mrf.mxu0
        %v940 = vadd.f32 %v911, %v939
        %v941 = vpop.f32.mrf.mxu0
        %v942 = vadd.f32 %v913, %v941
        %943 = vmatmul.bf16.gmra.mxu0 %v792
        %v944 = vpop.f32.mrf.mxu0
        %v945 = vadd.f32 %v916, %v944
        %v946 = vpop.f32.mrf.mxu0
        %v947 = vadd.f32 %v918, %v946
        %948 = vmatmul.bf16.gmra.mxu0 %v794
        %v949 = vpop.f32.mrf.mxu0
        %v950 = vadd.f32 %v921, %v949
        %v951 = vpop.f32.mrf.mxu0
        %v952 = vadd.f32 %v923, %v951
        %953 = vmatmul.bf16.gmra.mxu0 %v796
        %v954 = vpop.f32.mrf.mxu0
        %v955 = vadd.f32 %v926, %v954
        %v956 = vpop.f32.mrf.mxu0
        %v957 = vadd.f32 %v928, %v956
        %958 = vdwg.mxu0
        %v959 = vadd.s32 %v627, 8
        %v960 = vadd.s32 %v627, 16
        %v961 = vadd.s32 %v627, 24
        %v962 = vadd.s32 %v627, 32
        %v963 = vadd.s32 %v627, 40
        %v964 = vadd.s32 %v627, 48
        %v965 = vadd.s32 %v627, 56
        %v966 = vand.u32 %v627, 63
        %v967 = vand.u32 %v959, 63
        %v968 = vand.u32 %v960, 63
        %v969 = vand.u32 %v961, 63
        %v970 = vand.u32 %v962, 63
        %v971 = vand.u32 %v963, 63
        %v972 = vand.u32 %v964, 63
        %v973 = vand.u32 %v965, 63
        %v974 = vshra.s32 %v966, 3
        %v975 = vshra.s32 %v967, 3
        %v976 = vshra.s32 %v968, 3
        %v977 = vshra.s32 %v969, 3
        %v978 = vshra.s32 %v970, 3
        %v979 = vshra.s32 %v971, 3
        %v980 = vshra.s32 %v972, 3
        %v981 = vshra.s32 %v973, 3
        %v982 = vand.u32 %v966, 7
        %v983 = vand.u32 %v967, 7
        %v984 = vand.u32 %v968, 7
        %v985 = vand.u32 %v969, 7
        %v986 = vand.u32 %v970, 7
        %v987 = vand.u32 %v971, 7
        %v988 = vand.u32 %v972, 7
        %v989 = vand.u32 %v973, 7
        %v990 = vrot.slane %v940, 7
        %v991 = vrot.slane %v942, 7
        %v992 = vrot.slane %v945, 7
        %v993 = vrot.slane %v947, 7
        %v994 = vrot.slane %v950, 7
        %v995 = vrot.slane %v952, 7
        %v996 = vrot.slane %v955, 7
        %v997 = vrot.slane %v957, 7
        %vm998 = vcmp.lt.s32.totalorder %v627, 1
        %v999 = vsel %vm998, %v996, %v997
        %v1000 = vsel %vm998, %v995, %v996
        %v1001 = vsel %vm998, %v994, %v995
        %v1002 = vsel %vm998, %v993, %v994
        %v1003 = vsel %vm998, %v992, %v993
        %v1004 = vsel %vm998, %v991, %v992
        %v1005 = vsel %vm998, %v990, %v991
        %v1006 = vsel %vm998, %v997, %v990
        %v1007 = vpack.c.bf16 %v999, %v999
        %v1008 = vpack.c.bf16 %v1006, %v1006
        %v1009 = vpack.c.bf16 %v1005, %v1005
        %v1010 = vpack.c.bf16 %v1004, %v1004
        %v1011 = vpack.c.bf16 %v1003, %v1003
        %v1012 = vpack.c.bf16 %v1002, %v1002
        %v1013 = vpack.c.bf16 %v1001, %v1001
        %v1014 = vpack.c.bf16 %v1000, %v1000
        %vm1015 = vcmp.ge.s32.totalorder %v974, 1
        %vm1016 = vcmp.ge.s32.totalorder %v975, 1
        %vm1017 = vcmp.ge.s32.totalorder %v976, 1
        %vm1018 = vcmp.ge.s32.totalorder %v977, 1
        %vm1019 = vcmp.ge.s32.totalorder %v978, 1
        %vm1020 = vcmp.ge.s32.totalorder %v979, 1
        %vm1021 = vcmp.ge.s32.totalorder %v980, 1
        %vm1022 = vcmp.ge.s32.totalorder %v981, 1
        %vm1023 = vcmp.ge.s32.totalorder %v982, 1
        %vm1024 = vcmp.ge.s32.totalorder %v983, 1
        %vm1025 = vcmp.ge.s32.totalorder %v984, 1
        %vm1026 = vcmp.ge.s32.totalorder %v985, 1
        %vm1027 = vcmp.ge.s32.totalorder %v986, 1
        %vm1028 = vcmp.ge.s32.totalorder %v987, 1
        %vm1029 = vcmp.ge.s32.totalorder %v988, 1
        %vm1030 = vcmp.ge.s32.totalorder %v989, 1
        %vm1031 = vmand %vm1015, %vm1023
        %vm1032 = vmand %vm1016, %vm1024
        %vm1033 = vmand %vm1017, %vm1025
        %vm1034 = vmand %vm1018, %vm1026
        %vm1035 = vmand %vm1019, %vm1027
        %vm1036 = vmand %vm1020, %vm1028
        %vm1037 = vmand %vm1021, %vm1029
        %vm1038 = vmand %vm1022, %vm1030
        %v1039 = vsel %vm1031, 1, 0
        %v1040 = vsel %vm1032, 1, 0
        %v1041 = vsel %vm1033, 1, 0
        %v1042 = vsel %vm1034, 1, 0
        %v1043 = vsel %vm1035, 1, 0
        %v1044 = vsel %vm1036, 1, 0
        %v1045 = vsel %vm1037, 1, 0
        %v1046 = vsel %vm1038, 1, 0
        %vm1047 = vcmp.eq.s32.totalorder %v1039, 1
        %vm1048 = vcmp.eq.s32.totalorder %v1040, 1
        %vm1049 = vcmp.eq.s32.totalorder %v1041, 1
        %vm1050 = vcmp.eq.s32.totalorder %v1042, 1
        %vm1051 = vcmp.eq.s32.totalorder %v1043, 1
        %vm1052 = vcmp.eq.s32.totalorder %v1044, 1
        %vm1053 = vcmp.eq.s32.totalorder %v1045, 1
        %vm1054 = vcmp.eq.s32.totalorder %v1046, 1
        %vm1055 = vmpackc.low %vm1047, %vm1047
        %vm1056 = vmpackc.low %vm1048, %vm1048
        %vm1057 = vmpackc.low %vm1049, %vm1049
        %vm1058 = vmpackc.low %vm1050, %vm1050
        %vm1059 = vmpackc.low %vm1051, %vm1051
        %vm1060 = vmpackc.low %vm1052, %vm1052
        %vm1061 = vmpackc.low %vm1053, %vm1053
        %vm1062 = vmpackc.low %vm1054, %vm1054
        %v1063 = vsel %vm1055, %v1007, 0
        %v1064 = vsel %vm1056, %v1008, 0
        %v1065 = vsel %vm1057, %v1009, 0
        %v1066 = vsel %vm1058, %v1010, 0
        %v1067 = vsel %vm1059, %v1011, 0
        %v1068 = vsel %vm1060, %v1012, 0
        %v1069 = vsel %vm1061, %v1013, 0
        %v1070 = vsel %vm1062, %v1014, 0
        %v1071 = vld [vmem:[%s2] sm:$0xf]
        %v1072 = vld [vmem:[%s2 + $0x4] sm:$0xf]
        %v1073 = vld [vmem:[%s2 + $0x8] sm:$0xf]
        %v1074 = vld [vmem:[%s2 + $0xc] sm:$0xf]
        %v1075 = vld [vmem:[%s2 + $0x10] sm:$0xf]
        %v1076 = vld [vmem:[%s2 + $0x14] sm:$0xf]
        %v1077 = vld [vmem:[%s2 + $0x18] sm:$0xf]
        %v1078 = vld [vmem:[%s2 + $0x1c] sm:$0xf]
        %v1079 = vld [vmem:[%s2 + $0x20] sm:$0xf]
        %v1080 = vld [vmem:[%s2 + $0x24] sm:$0xf]
        %v1081 = vld [vmem:[%s2 + $0x28] sm:$0xf]
        %v1082 = vld [vmem:[%s2 + $0x2c] sm:$0xf]
        %v1083 = vld [vmem:[%s2 + $0x30] sm:$0xf]
        %v1084 = vld [vmem:[%s2 + $0x34] sm:$0xf]
        %v1085 = vld [vmem:[%s2 + $0x38] sm:$0xf]
        %v1086 = vld [vmem:[%s2 + $0x3c] sm:$0xf]
        %v1087 = vpack.c.bf16 %v957, %v957
        %v1088 = vpack.c.bf16 %v940, %v940
        %v1089 = vpack.c.bf16 %v942, %v942
        %v1090 = vpack.c.bf16 %v945, %v945
        %v1091 = vpack.c.bf16 %v947, %v947
        %v1092 = vpack.c.bf16 %v950, %v950
        %v1093 = vpack.c.bf16 %v952, %v952
        %v1094 = vpack.c.bf16 %v955, %v955
        %v1095 = vsel %vm1015, 1, 0
        %v1096 = vsel %vm1016, 1, 0
        %v1097 = vsel %vm1017, 1, 0
        %v1098 = vsel %vm1018, 1, 0
        %v1099 = vsel %vm1019, 1, 0
        %v1100 = vsel %vm1020, 1, 0
        %v1101 = vsel %vm1021, 1, 0
        %v1102 = vsel %vm1022, 1, 0
        %vm1103 = vcmp.eq.s32.totalorder %v1095, 1
        %vm1104 = vcmp.eq.s32.totalorder %v1096, 1
        %vm1105 = vcmp.eq.s32.totalorder %v1097, 1
        %vm1106 = vcmp.eq.s32.totalorder %v1098, 1
        %vm1107 = vcmp.eq.s32.totalorder %v1099, 1
        %vm1108 = vcmp.eq.s32.totalorder %v1100, 1
        %vm1109 = vcmp.eq.s32.totalorder %v1101, 1
        %vm1110 = vcmp.eq.s32.totalorder %v1102, 1
        %vm1111 = vmpackc.low %vm1103, %vm1103
        %vm1112 = vmpackc.low %vm1104, %vm1104
        %vm1113 = vmpackc.low %vm1105, %vm1105
        %vm1114 = vmpackc.low %vm1106, %vm1106
        %vm1115 = vmpackc.low %vm1107, %vm1107
        %vm1116 = vmpackc.low %vm1108, %vm1108
        %vm1117 = vmpackc.low %vm1109, %vm1109
        %vm1118 = vmpackc.low %vm1110, %vm1110
        %v1119 = vsel %vm1111, %v1087, 0
        %v1120 = vsel %vm1112, %v1088, 0
        %v1121 = vsel %vm1113, %v1089, 0
        %v1122 = vsel %vm1114, %v1090, 0
        %v1123 = vsel %vm1115, %v1091, 0
        %v1124 = vsel %vm1116, %v1092, 0
        %v1125 = vsel %vm1117, %v1093, 0
        %v1126 = vsel %vm1118, %v1094, 0
        %s1127 = scalar_lea.vmem %s2, 64
        %v1128 = vld [vmem:[%s1127] sm:$0xf]
        %v1129 = vld [vmem:[%s1127 + $0x4] sm:$0xf]
        %v1130 = vld [vmem:[%s1127 + $0x8] sm:$0xf]
        %v1131 = vld [vmem:[%s1127 + $0xc] sm:$0xf]
        %v1132 = vld [vmem:[%s1127 + $0x10] sm:$0xf]
        %v1133 = vld [vmem:[%s1127 + $0x14] sm:$0xf]
        %v1134 = vld [vmem:[%s1127 + $0x18] sm:$0xf]
        %v1135 = vld [vmem:[%s1127 + $0x1c] sm:$0xf]
        %v1136 = vld [vmem:[%s1127 + $0x20] sm:$0xf]
        %v1137 = vld [vmem:[%s1127 + $0x24] sm:$0xf]
        %v1138 = vld [vmem:[%s1127 + $0x28] sm:$0xf]
        %v1139 = vld [vmem:[%s1127 + $0x2c] sm:$0xf]
        %v1140 = vld [vmem:[%s1127 + $0x30] sm:$0xf]
        %v1141 = vld [vmem:[%s1127 + $0x34] sm:$0xf]
        %v1142 = vld [vmem:[%s1127 + $0x38] sm:$0xf]
        %v1143 = vld [vmem:[%s1127 + $0x3c] sm:$0xf]
        %v1152 = vunpack.c.l.b16 %v1119
        %v1153 = vunpack.c.l.b16 %v1120
        %v1154 = vunpack.c.l.b16 %v1121
        %v1155 = vunpack.c.l.b16 %v1122
        %v1156 = vunpack.c.l.b16 %v1123
        %v1157 = vunpack.c.l.b16 %v1124
        %v1158 = vunpack.c.l.b16 %v1125
        %v1159 = vunpack.c.l.b16 %v1126
        %v1160 = vpack.c.b16 %v1153, %v1152
        %v1161 = vpack.c.b16 %v1155, %v1154
        %v1162 = vpack.c.b16 %v1157, %v1156
        %v1163 = vpack.c.b16 %v1159, %v1158
        %v1184 = vunpack.c.l.b16 %v1128
        %v1185 = vunpack.c.l.b16 %v1129
        %v1186 = vunpack.c.l.b16 %v1130
        %v1187 = vunpack.c.l.b16 %v1131
        %v1188 = vunpack.c.l.b16 %v1132
        %v1189 = vunpack.c.l.b16 %v1133
        %v1190 = vunpack.c.l.b16 %v1134
        %v1191 = vunpack.c.l.b16 %v1135
        %v1192 = vunpack.c.l.b16 %v1136
        %v1193 = vunpack.c.l.b16 %v1137
        %v1194 = vunpack.c.l.b16 %v1138
        %v1195 = vunpack.c.l.b16 %v1139
        %v1196 = vunpack.c.l.b16 %v1140
        %v1197 = vunpack.c.l.b16 %v1141
        %v1198 = vunpack.c.l.b16 %v1142
        %v1199 = vunpack.c.l.b16 %v1143
        %v1200 = vpack.c.b16 %v1185, %v1184
        %v1201 = vpack.c.b16 %v1187, %v1186
        %v1202 = vpack.c.b16 %v1189, %v1188
        %v1203 = vpack.c.b16 %v1191, %v1190
        %v1204 = vpack.c.b16 %v1193, %v1192
        %v1205 = vpack.c.b16 %v1195, %v1194
        %v1206 = vpack.c.b16 %v1197, %v1196
        %v1207 = vpack.c.b16 %v1199, %v1198
        %1216 = vmatpush.bf16.msra.mxu0 %v1207
        %1217 = vmatpush.bf16.msra.mxu0 %v1206
        %1218 = vmatpush.bf16.msra.mxu0 %v1205
        %1219 = vmatpush.bf16.msra.mxu0 %v1204
        %1220 = vmatpush.bf16.msra.mxu0 %v1203
        %1221 = vmatpush.bf16.msra.mxu0 %v1202
        %1222 = vmatpush.bf16.msra.mxu0 %v1201
        %1223 = vmatpush.bf16.msra.mxu0 %v1200
        %1224 = vmatmul.bf16.gmra.mxu0 %v1160
        %v1225 = vpop.f32.mrf.mxu0
        %v1226 = vadd.f32 0.0, %v1225
        %v1227 = vpop.f32.mrf.mxu0
        %v1228 = vadd.f32 0.0, %v1227
        %1229 = vmatmul.bf16.gmra.mxu0 %v1161
        %v1230 = vpop.f32.mrf.mxu0
        %v1231 = vadd.f32 0.0, %v1230
        %v1232 = vpop.f32.mrf.mxu0
        %v1233 = vadd.f32 0.0, %v1232
        %1234 = vmatmul.bf16.gmra.mxu0 %v1162
        %v1235 = vpop.f32.mrf.mxu0
        %v1236 = vadd.f32 0.0, %v1235
        %v1237 = vpop.f32.mrf.mxu0
        %v1238 = vadd.f32 0.0, %v1237
        %1239 = vmatmul.bf16.gmra.mxu0 %v1163
        %v1240 = vpop.f32.mrf.mxu0
        %v1241 = vadd.f32 0.0, %v1240
        %v1242 = vpop.f32.mrf.mxu0
        %v1243 = vadd.f32 0.0, %v1242
        %1244 = vdwg.mxu0
        %v1253 = vunpack.c.l.b16 %v1063
        %v1254 = vunpack.c.l.b16 %v1064
        %v1255 = vunpack.c.l.b16 %v1065
        %v1256 = vunpack.c.l.b16 %v1066
        %v1257 = vunpack.c.l.b16 %v1067
        %v1258 = vunpack.c.l.b16 %v1068
        %v1259 = vunpack.c.l.b16 %v1069
        %v1260 = vunpack.c.l.b16 %v1070
        %v1261 = vpack.c.b16 %v1254, %v1253
        %v1262 = vpack.c.b16 %v1256, %v1255
        %v1263 = vpack.c.b16 %v1258, %v1257
        %v1264 = vpack.c.b16 %v1260, %v1259
        %v1285 = vunpack.c.l.b16 %v1071
        %v1286 = vunpack.c.l.b16 %v1072
        %v1287 = vunpack.c.l.b16 %v1073
        %v1288 = vunpack.c.l.b16 %v1074
        %v1289 = vunpack.c.l.b16 %v1075
        %v1290 = vunpack.c.l.b16 %v1076
        %v1291 = vunpack.c.l.b16 %v1077
        %v1292 = vunpack.c.l.b16 %v1078
        %v1293 = vunpack.c.l.b16 %v1079
        %v1294 = vunpack.c.l.b16 %v1080
        %v1295 = vunpack.c.l.b16 %v1081
        %v1296 = vunpack.c.l.b16 %v1082
        %v1297 = vunpack.c.l.b16 %v1083
        %v1298 = vunpack.c.l.b16 %v1084
        %v1299 = vunpack.c.l.b16 %v1085
        %v1300 = vunpack.c.l.b16 %v1086
        %v1301 = vpack.c.b16 %v1286, %v1285
        %v1302 = vpack.c.b16 %v1288, %v1287
        %v1303 = vpack.c.b16 %v1290, %v1289
        %v1304 = vpack.c.b16 %v1292, %v1291
        %v1305 = vpack.c.b16 %v1294, %v1293
        %v1306 = vpack.c.b16 %v1296, %v1295
        %v1307 = vpack.c.b16 %v1298, %v1297
        %v1308 = vpack.c.b16 %v1300, %v1299
        %1317 = vmatpush.bf16.msra.mxu0 %v1308
        %1318 = vmatpush.bf16.msra.mxu0 %v1307
        %1319 = vmatpush.bf16.msra.mxu0 %v1306
        %1320 = vmatpush.bf16.msra.mxu0 %v1305
        %1321 = vmatpush.bf16.msra.mxu0 %v1304
        %1322 = vmatpush.bf16.msra.mxu0 %v1303
        %1323 = vmatpush.bf16.msra.mxu0 %v1302
        %1324 = vmatpush.bf16.msra.mxu0 %v1301
        %1325 = vmatmul.bf16.gmra.mxu0 %v1261
        %v1326 = vpop.f32.mrf.mxu0
        %v1327 = vadd.f32 %v1226, %v1326
        %v1328 = vpop.f32.mrf.mxu0
        %v1329 = vadd.f32 %v1228, %v1328
        %1330 = vmatmul.bf16.gmra.mxu0 %v1262
        %v1331 = vpop.f32.mrf.mxu0
        %v1332 = vadd.f32 %v1231, %v1331
        %v1333 = vpop.f32.mrf.mxu0
        %v1334 = vadd.f32 %v1233, %v1333
        %1335 = vmatmul.bf16.gmra.mxu0 %v1263
        %v1336 = vpop.f32.mrf.mxu0
        %v1337 = vadd.f32 %v1236, %v1336
        %v1338 = vpop.f32.mrf.mxu0
        %v1339 = vadd.f32 %v1238, %v1338
        %1340 = vmatmul.bf16.gmra.mxu0 %v1264
        %v1341 = vpop.f32.mrf.mxu0
        %v1342 = vadd.f32 %v1241, %v1341
        %v1343 = vpop.f32.mrf.mxu0
        %v1344 = vadd.f32 %v1243, %v1343
        %1345 = vdwg.mxu0
        %v1346 = vrot.slane %v940, 1
        %v1347 = vrot.slane %v942, 1
        %v1348 = vrot.slane %v945, 1
        %v1349 = vrot.slane %v947, 1
        %v1350 = vrot.slane %v950, 1
        %v1351 = vrot.slane %v952, 1
        %v1352 = vrot.slane %v955, 1
        %v1353 = vrot.slane %v957, 1
        %v1354 = vsel %vm628, %v1352, %v1353
        %v1355 = vsel %vm628, %v1351, %v1352
        %v1356 = vsel %vm628, %v1350, %v1351
        %v1357 = vsel %vm628, %v1349, %v1350
        %v1358 = vsel %vm628, %v1348, %v1349
        %v1359 = vsel %vm628, %v1347, %v1348
        %v1360 = vsel %vm628, %v1346, %v1347
        %v1361 = vsel %vm628, %v1353, %v1346
        %v1362 = vpack.c.bf16 %v1361, %v1361
        %v1363 = vpack.c.bf16 %v1360, %v1360
        %v1364 = vpack.c.bf16 %v1359, %v1359
        %v1365 = vpack.c.bf16 %v1358, %v1358
        %v1366 = vpack.c.bf16 %v1357, %v1357
        %v1367 = vpack.c.bf16 %v1356, %v1356
        %v1368 = vpack.c.bf16 %v1355, %v1355
        %v1369 = vpack.c.bf16 %v1354, %v1354
        %vm1370 = vcmp.lt.s32.totalorder %v982, 7
        %vm1371 = vcmp.lt.s32.totalorder %v983, 7
        %vm1372 = vcmp.lt.s32.totalorder %v984, 7
        %vm1373 = vcmp.lt.s32.totalorder %v985, 7
        %vm1374 = vcmp.lt.s32.totalorder %v986, 7
        %vm1375 = vcmp.lt.s32.totalorder %v987, 7
        %vm1376 = vcmp.lt.s32.totalorder %v988, 7
        %vm1377 = vcmp.lt.s32.totalorder %v989, 7
        %vm1378 = vmand %vm1015, %vm1370
        %vm1379 = vmand %vm1016, %vm1371
        %vm1380 = vmand %vm1017, %vm1372
        %vm1381 = vmand %vm1018, %vm1373
        %vm1382 = vmand %vm1019, %vm1374
        %vm1383 = vmand %vm1020, %vm1375
        %vm1384 = vmand %vm1021, %vm1376
        %vm1385 = vmand %vm1022, %vm1377
        %v1386 = vsel %vm1378, 1, 0
        %v1387 = vsel %vm1379, 1, 0
        %v1388 = vsel %vm1380, 1, 0
        %v1389 = vsel %vm1381, 1, 0
        %v1390 = vsel %vm1382, 1, 0
        %v1391 = vsel %vm1383, 1, 0
        %v1392 = vsel %vm1384, 1, 0
        %v1393 = vsel %vm1385, 1, 0
        %vm1394 = vcmp.eq.s32.totalorder %v1386, 1
        %vm1395 = vcmp.eq.s32.totalorder %v1387, 1
        %vm1396 = vcmp.eq.s32.totalorder %v1388, 1
        %vm1397 = vcmp.eq.s32.totalorder %v1389, 1
        %vm1398 = vcmp.eq.s32.totalorder %v1390, 1
        %vm1399 = vcmp.eq.s32.totalorder %v1391, 1
        %vm1400 = vcmp.eq.s32.totalorder %v1392, 1
        %vm1401 = vcmp.eq.s32.totalorder %v1393, 1
        %vm1402 = vmpackc.low %vm1394, %vm1394
        %vm1403 = vmpackc.low %vm1395, %vm1395
        %vm1404 = vmpackc.low %vm1396, %vm1396
        %vm1405 = vmpackc.low %vm1397, %vm1397
        %vm1406 = vmpackc.low %vm1398, %vm1398
        %vm1407 = vmpackc.low %vm1399, %vm1399
        %vm1408 = vmpackc.low %vm1400, %vm1400
        %vm1409 = vmpackc.low %vm1401, %vm1401
        %v1410 = vsel %vm1402, %v1362, 0
        %v1411 = vsel %vm1403, %v1363, 0
        %v1412 = vsel %vm1404, %v1364, 0
        %v1413 = vsel %vm1405, %v1365, 0
        %v1414 = vsel %vm1406, %v1366, 0
        %v1415 = vsel %vm1407, %v1367, 0
        %v1416 = vsel %vm1408, %v1368, 0
        %v1417 = vsel %vm1409, %v1369, 0
        %s1418 = scalar_lea.vmem %s2, 128
        %v1419 = vld [vmem:[%s1418] sm:$0xf]
        %v1420 = vld [vmem:[%s1418 + $0x4] sm:$0xf]
        %v1421 = vld [vmem:[%s1418 + $0x8] sm:$0xf]
        %v1422 = vld [vmem:[%s1418 + $0xc] sm:$0xf]
        %v1423 = vld [vmem:[%s1418 + $0x10] sm:$0xf]
        %v1424 = vld [vmem:[%s1418 + $0x14] sm:$0xf]
        %v1425 = vld [vmem:[%s1418 + $0x18] sm:$0xf]
        %v1426 = vld [vmem:[%s1418 + $0x1c] sm:$0xf]
        %v1427 = vld [vmem:[%s1418 + $0x20] sm:$0xf]
        %v1428 = vld [vmem:[%s1418 + $0x24] sm:$0xf]
        %v1429 = vld [vmem:[%s1418 + $0x28] sm:$0xf]
        %v1430 = vld [vmem:[%s1418 + $0x2c] sm:$0xf]
        %v1431 = vld [vmem:[%s1418 + $0x30] sm:$0xf]
        %v1432 = vld [vmem:[%s1418 + $0x34] sm:$0xf]
        %v1433 = vld [vmem:[%s1418 + $0x38] sm:$0xf]
        %v1434 = vld [vmem:[%s1418 + $0x3c] sm:$0xf]
        %v1443 = vunpack.c.l.b16 %v1410
        %v1444 = vunpack.c.l.b16 %v1411
        %v1445 = vunpack.c.l.b16 %v1412
        %v1446 = vunpack.c.l.b16 %v1413
        %v1447 = vunpack.c.l.b16 %v1414
        %v1448 = vunpack.c.l.b16 %v1415
        %v1449 = vunpack.c.l.b16 %v1416
        %v1450 = vunpack.c.l.b16 %v1417
        %v1451 = vpack.c.b16 %v1444, %v1443
        %v1452 = vpack.c.b16 %v1446, %v1445
        %v1453 = vpack.c.b16 %v1448, %v1447
        %v1454 = vpack.c.b16 %v1450, %v1449
        %v1475 = vunpack.c.l.b16 %v1419
        %v1476 = vunpack.c.l.b16 %v1420
        %v1477 = vunpack.c.l.b16 %v1421
        %v1478 = vunpack.c.l.b16 %v1422
        %v1479 = vunpack.c.l.b16 %v1423
        %v1480 = vunpack.c.l.b16 %v1424
        %v1481 = vunpack.c.l.b16 %v1425
        %v1482 = vunpack.c.l.b16 %v1426
        %v1483 = vunpack.c.l.b16 %v1427
        %v1484 = vunpack.c.l.b16 %v1428
        %v1485 = vunpack.c.l.b16 %v1429
        %v1486 = vunpack.c.l.b16 %v1430
        %v1487 = vunpack.c.l.b16 %v1431
        %v1488 = vunpack.c.l.b16 %v1432
        %v1489 = vunpack.c.l.b16 %v1433
        %v1490 = vunpack.c.l.b16 %v1434
        %v1491 = vpack.c.b16 %v1476, %v1475
        %v1492 = vpack.c.b16 %v1478, %v1477
        %v1493 = vpack.c.b16 %v1480, %v1479
        %v1494 = vpack.c.b16 %v1482, %v1481
        %v1495 = vpack.c.b16 %v1484, %v1483
        %v1496 = vpack.c.b16 %v1486, %v1485
        %v1497 = vpack.c.b16 %v1488, %v1487
        %v1498 = vpack.c.b16 %v1490, %v1489
        %1507 = vmatpush.bf16.msra.mxu0 %v1498
        %1508 = vmatpush.bf16.msra.mxu0 %v1497
        %1509 = vmatpush.bf16.msra.mxu0 %v1496
        %1510 = vmatpush.bf16.msra.mxu0 %v1495
        %1511 = vmatpush.bf16.msra.mxu0 %v1494
        %1512 = vmatpush.bf16.msra.mxu0 %v1493
        %1513 = vmatpush.bf16.msra.mxu0 %v1492
        %1514 = vmatpush.bf16.msra.mxu0 %v1491
        %1515 = vmatmul.bf16.gmra.mxu0 %v1451
        %v1516 = vpop.f32.mrf.mxu0
        %v1517 = vadd.f32 0.0, %v1516
        %v1518 = vpop.f32.mrf.mxu0
        %v1519 = vadd.f32 0.0, %v1518
        %1520 = vmatmul.bf16.gmra.mxu0 %v1452
        %v1521 = vpop.f32.mrf.mxu0
        %v1522 = vadd.f32 0.0, %v1521
        %v1523 = vpop.f32.mrf.mxu0
        %v1524 = vadd.f32 0.0, %v1523
        %1525 = vmatmul.bf16.gmra.mxu0 %v1453
        %v1526 = vpop.f32.mrf.mxu0
        %v1527 = vadd.f32 0.0, %v1526
        %v1528 = vpop.f32.mrf.mxu0
        %v1529 = vadd.f32 0.0, %v1528
        %1530 = vmatmul.bf16.gmra.mxu0 %v1454
        %v1531 = vpop.f32.mrf.mxu0
        %v1532 = vadd.f32 0.0, %v1531
        %v1533 = vpop.f32.mrf.mxu0
        %v1534 = vadd.f32 0.0, %v1533
        %1535 = vdwg.mxu0
        %v1536 = vadd.f32 %v1327, %v1517
        %v1537 = vadd.f32 %v1329, %v1519
        %v1538 = vadd.f32 %v1332, %v1522
        %v1539 = vadd.f32 %v1334, %v1524
        %v1540 = vadd.f32 %v1337, %v1527
        %v1541 = vadd.f32 %v1339, %v1529
        %v1542 = vadd.f32 %v1342, %v1532
        %v1543 = vadd.f32 %v1344, %v1534
        %v1544 = vsel %vm1023, 1, 0
        %v1545 = vsel %vm1024, 1, 0
        %v1546 = vsel %vm1025, 1, 0
        %v1547 = vsel %vm1026, 1, 0
        %v1548 = vsel %vm1027, 1, 0
        %v1549 = vsel %vm1028, 1, 0
        %v1550 = vsel %vm1029, 1, 0
        %v1551 = vsel %vm1030, 1, 0
        %vm1552 = vcmp.eq.s32.totalorder %v1544, 1
        %vm1553 = vcmp.eq.s32.totalorder %v1545, 1
        %vm1554 = vcmp.eq.s32.totalorder %v1546, 1
        %vm1555 = vcmp.eq.s32.totalorder %v1547, 1
        %vm1556 = vcmp.eq.s32.totalorder %v1548, 1
        %vm1557 = vcmp.eq.s32.totalorder %v1549, 1
        %vm1558 = vcmp.eq.s32.totalorder %v1550, 1
        %vm1559 = vcmp.eq.s32.totalorder %v1551, 1
        %vm1560 = vmpackc.low %vm1552, %vm1552
        %vm1561 = vmpackc.low %vm1553, %vm1553
        %vm1562 = vmpackc.low %vm1554, %vm1554
        %vm1563 = vmpackc.low %vm1555, %vm1555
        %vm1564 = vmpackc.low %vm1556, %vm1556
        %vm1565 = vmpackc.low %vm1557, %vm1557
        %vm1566 = vmpackc.low %vm1558, %vm1558
        %vm1567 = vmpackc.low %vm1559, %vm1559
        %v1568 = vsel %vm1560, %v1008, 0
        %v1569 = vsel %vm1561, %v1009, 0
        %v1570 = vsel %vm1562, %v1010, 0
        %v1571 = vsel %vm1563, %v1011, 0
        %v1572 = vsel %vm1564, %v1012, 0
        %v1573 = vsel %vm1565, %v1013, 0
        %v1574 = vsel %vm1566, %v1014, 0
        %v1575 = vsel %vm1567, %v1007, 0
        %s1576 = scalar_lea.vmem %s2, 192
        %v1577 = vld [vmem:[%s1576] sm:$0xf]
        %v1578 = vld [vmem:[%s1576 + $0x4] sm:$0xf]
        %v1579 = vld [vmem:[%s1576 + $0x8] sm:$0xf]
        %v1580 = vld [vmem:[%s1576 + $0xc] sm:$0xf]
        %v1581 = vld [vmem:[%s1576 + $0x10] sm:$0xf]
        %v1582 = vld [vmem:[%s1576 + $0x14] sm:$0xf]
        %v1583 = vld [vmem:[%s1576 + $0x18] sm:$0xf]
        %v1584 = vld [vmem:[%s1576 + $0x1c] sm:$0xf]
        %v1585 = vld [vmem:[%s1576 + $0x20] sm:$0xf]
        %v1586 = vld [vmem:[%s1576 + $0x24] sm:$0xf]
        %v1587 = vld [vmem:[%s1576 + $0x28] sm:$0xf]
        %v1588 = vld [vmem:[%s1576 + $0x2c] sm:$0xf]
        %v1589 = vld [vmem:[%s1576 + $0x30] sm:$0xf]
        %v1590 = vld [vmem:[%s1576 + $0x34] sm:$0xf]
        %v1591 = vld [vmem:[%s1576 + $0x38] sm:$0xf]
        %v1592 = vld [vmem:[%s1576 + $0x3c] sm:$0xf]
        %v1601 = vunpack.c.l.b16 %v1568
        %v1602 = vunpack.c.l.b16 %v1569
        %v1603 = vunpack.c.l.b16 %v1570
        %v1604 = vunpack.c.l.b16 %v1571
        %v1605 = vunpack.c.l.b16 %v1572
        %v1606 = vunpack.c.l.b16 %v1573
        %v1607 = vunpack.c.l.b16 %v1574
        %v1608 = vunpack.c.l.b16 %v1575
        %v1609 = vpack.c.b16 %v1602, %v1601
        %v1610 = vpack.c.b16 %v1604, %v1603
        %v1611 = vpack.c.b16 %v1606, %v1605
        %v1612 = vpack.c.b16 %v1608, %v1607
        %v1633 = vunpack.c.l.b16 %v1577
        %v1634 = vunpack.c.l.b16 %v1578
        %v1635 = vunpack.c.l.b16 %v1579
        %v1636 = vunpack.c.l.b16 %v1580
        %v1637 = vunpack.c.l.b16 %v1581
        %v1638 = vunpack.c.l.b16 %v1582
        %v1639 = vunpack.c.l.b16 %v1583
        %v1640 = vunpack.c.l.b16 %v1584
        %v1641 = vunpack.c.l.b16 %v1585
        %v1642 = vunpack.c.l.b16 %v1586
        %v1643 = vunpack.c.l.b16 %v1587
        %v1644 = vunpack.c.l.b16 %v1588
        %v1645 = vunpack.c.l.b16 %v1589
        %v1646 = vunpack.c.l.b16 %v1590
        %v1647 = vunpack.c.l.b16 %v1591
        %v1648 = vunpack.c.l.b16 %v1592
        %v1649 = vpack.c.b16 %v1634, %v1633
        %v1650 = vpack.c.b16 %v1636, %v1635
        %v1651 = vpack.c.b16 %v1638, %v1637
        %v1652 = vpack.c.b16 %v1640, %v1639
        %v1653 = vpack.c.b16 %v1642, %v1641
        %v1654 = vpack.c.b16 %v1644, %v1643
        %v1655 = vpack.c.b16 %v1646, %v1645
        %v1656 = vpack.c.b16 %v1648, %v1647
        %1665 = vmatpush.bf16.msra.mxu0 %v1656
        %1666 = vmatpush.bf16.msra.mxu0 %v1655
        %1667 = vmatpush.bf16.msra.mxu0 %v1654
        %1668 = vmatpush.bf16.msra.mxu0 %v1653
        %1669 = vmatpush.bf16.msra.mxu0 %v1652
        %1670 = vmatpush.bf16.msra.mxu0 %v1651
        %1671 = vmatpush.bf16.msra.mxu0 %v1650
        %1672 = vmatpush.bf16.msra.mxu0 %v1649
        %1673 = vmatmul.bf16.gmra.mxu0 %v1609
        %v1674 = vpop.f32.mrf.mxu0
        %v1675 = vadd.f32 0.0, %v1674
        %v1676 = vpop.f32.mrf.mxu0
        %v1677 = vadd.f32 0.0, %v1676
        %1678 = vmatmul.bf16.gmra.mxu0 %v1610
        %v1679 = vpop.f32.mrf.mxu0
        %v1680 = vadd.f32 0.0, %v1679
        %v1681 = vpop.f32.mrf.mxu0
        %v1682 = vadd.f32 0.0, %v1681
        %1683 = vmatmul.bf16.gmra.mxu0 %v1611
        %v1684 = vpop.f32.mrf.mxu0
        %v1685 = vadd.f32 0.0, %v1684
        %v1686 = vpop.f32.mrf.mxu0
        %v1687 = vadd.f32 0.0, %v1686
        %1688 = vmatmul.bf16.gmra.mxu0 %v1612
        %v1689 = vpop.f32.mrf.mxu0
        %v1690 = vadd.f32 0.0, %v1689
        %v1691 = vpop.f32.mrf.mxu0
        %v1692 = vadd.f32 0.0, %v1691
        %1693 = vdwg.mxu0
        %v1694 = vadd.f32 %v1536, %v1675
        %v1695 = vadd.f32 %v1537, %v1677
        %v1696 = vadd.f32 %v1538, %v1680
        %v1697 = vadd.f32 %v1539, %v1682
        %v1698 = vadd.f32 %v1540, %v1685
        %v1699 = vadd.f32 %v1541, %v1687
        %v1700 = vadd.f32 %v1542, %v1690
        %v1701 = vadd.f32 %v1543, %v1692
        %v1702 = vpack.c.bf16 %v942, %v940
        %v1703 = vpack.c.bf16 %v947, %v945
        %v1704 = vpack.c.bf16 %v952, %v950
        %v1705 = vpack.c.bf16 %v957, %v955
        %s1706 = scalar_lea.vmem %s2, 256
        %v1707 = vld [vmem:[%s1706] sm:$0xf]
        %v1708 = vld [vmem:[%s1706 + $0x4] sm:$0xf]
        %v1709 = vld [vmem:[%s1706 + $0x8] sm:$0xf]
        %v1710 = vld [vmem:[%s1706 + $0xc] sm:$0xf]
        %v1711 = vld [vmem:[%s1706 + $0x10] sm:$0xf]
        %v1712 = vld [vmem:[%s1706 + $0x14] sm:$0xf]
        %v1713 = vld [vmem:[%s1706 + $0x18] sm:$0xf]
        %v1714 = vld [vmem:[%s1706 + $0x1c] sm:$0xf]
        %v1715 = vld [vmem:[%s1706 + $0x20] sm:$0xf]
        %v1716 = vld [vmem:[%s1706 + $0x24] sm:$0xf]
        %v1717 = vld [vmem:[%s1706 + $0x28] sm:$0xf]
        %v1718 = vld [vmem:[%s1706 + $0x2c] sm:$0xf]
        %v1719 = vld [vmem:[%s1706 + $0x30] sm:$0xf]
        %v1720 = vld [vmem:[%s1706 + $0x34] sm:$0xf]
        %v1721 = vld [vmem:[%s1706 + $0x38] sm:$0xf]
        %v1722 = vld [vmem:[%s1706 + $0x3c] sm:$0xf]
        %v1739 = vunpack.c.l.b16 %v1707
        %v1740 = vunpack.c.l.b16 %v1708
        %v1741 = vunpack.c.l.b16 %v1709
        %v1742 = vunpack.c.l.b16 %v1710
        %v1743 = vunpack.c.l.b16 %v1711
        %v1744 = vunpack.c.l.b16 %v1712
        %v1745 = vunpack.c.l.b16 %v1713
        %v1746 = vunpack.c.l.b16 %v1714
        %v1747 = vunpack.c.l.b16 %v1715
        %v1748 = vunpack.c.l.b16 %v1716
        %v1749 = vunpack.c.l.b16 %v1717
        %v1750 = vunpack.c.l.b16 %v1718
        %v1751 = vunpack.c.l.b16 %v1719
        %v1752 = vunpack.c.l.b16 %v1720
        %v1753 = vunpack.c.l.b16 %v1721
        %v1754 = vunpack.c.l.b16 %v1722
        %v1755 = vpack.c.b16 %v1740, %v1739
        %v1756 = vpack.c.b16 %v1742, %v1741
        %v1757 = vpack.c.b16 %v1744, %v1743
        %v1758 = vpack.c.b16 %v1746, %v1745
        %v1759 = vpack.c.b16 %v1748, %v1747
        %v1760 = vpack.c.b16 %v1750, %v1749
        %v1761 = vpack.c.b16 %v1752, %v1751
        %v1762 = vpack.c.b16 %v1754, %v1753
        %1771 = vmatpush.bf16.msra.mxu0 %v1762
        %1772 = vmatpush.bf16.msra.mxu0 %v1761
        %1773 = vmatpush.bf16.msra.mxu0 %v1760
        %1774 = vmatpush.bf16.msra.mxu0 %v1759
        %1775 = vmatpush.bf16.msra.mxu0 %v1758
        %1776 = vmatpush.bf16.msra.mxu0 %v1757
        %1777 = vmatpush.bf16.msra.mxu0 %v1756
        %1778 = vmatpush.bf16.msra.mxu0 %v1755
        %1779 = vmatmul.bf16.gmra.mxu0 %v1702
        %v1780 = vpop.f32.mrf.mxu0
        %v1781 = vadd.f32 0.0, %v1780
        %v1782 = vpop.f32.mrf.mxu0
        %v1783 = vadd.f32 0.0, %v1782
        %1784 = vmatmul.bf16.gmra.mxu0 %v1703
        %v1785 = vpop.f32.mrf.mxu0
        %v1786 = vadd.f32 0.0, %v1785
        %v1787 = vpop.f32.mrf.mxu0
        %v1788 = vadd.f32 0.0, %v1787
        %1789 = vmatmul.bf16.gmra.mxu0 %v1704
        %v1790 = vpop.f32.mrf.mxu0
        %v1791 = vadd.f32 0.0, %v1790
        %v1792 = vpop.f32.mrf.mxu0
        %v1793 = vadd.f32 0.0, %v1792
        %1794 = vmatmul.bf16.gmra.mxu0 %v1705
        %v1795 = vpop.f32.mrf.mxu0
        %v1796 = vadd.f32 0.0, %v1795
        %v1797 = vpop.f32.mrf.mxu0
        %v1798 = vadd.f32 0.0, %v1797
        %1799 = vdwg.mxu0
        %v1800 = vadd.f32 %v1694, %v1781
        %v1801 = vadd.f32 %v1695, %v1783
        %v1802 = vadd.f32 %v1696, %v1786
        %v1803 = vadd.f32 %v1697, %v1788
        %v1804 = vadd.f32 %v1698, %v1791
        %v1805 = vadd.f32 %v1699, %v1793
        %v1806 = vadd.f32 %v1700, %v1796
        %v1807 = vadd.f32 %v1701, %v1798
        %v1808 = vsel %vm1370, 1, 0
        %v1809 = vsel %vm1371, 1, 0
        %v1810 = vsel %vm1372, 1, 0
        %v1811 = vsel %vm1373, 1, 0
        %v1812 = vsel %vm1374, 1, 0
        %v1813 = vsel %vm1375, 1, 0
        %v1814 = vsel %vm1376, 1, 0
        %v1815 = vsel %vm1377, 1, 0
        %vm1816 = vcmp.eq.s32.totalorder %v1808, 1
        %vm1817 = vcmp.eq.s32.totalorder %v1809, 1
        %vm1818 = vcmp.eq.s32.totalorder %v1810, 1
        %vm1819 = vcmp.eq.s32.totalorder %v1811, 1
        %vm1820 = vcmp.eq.s32.totalorder %v1812, 1
        %vm1821 = vcmp.eq.s32.totalorder %v1813, 1
        %vm1822 = vcmp.eq.s32.totalorder %v1814, 1
        %vm1823 = vcmp.eq.s32.totalorder %v1815, 1
        %vm1824 = vmpackc.low %vm1816, %vm1816
        %vm1825 = vmpackc.low %vm1817, %vm1817
        %vm1826 = vmpackc.low %vm1818, %vm1818
        %vm1827 = vmpackc.low %vm1819, %vm1819
        %vm1828 = vmpackc.low %vm1820, %vm1820
        %vm1829 = vmpackc.low %vm1821, %vm1821
        %vm1830 = vmpackc.low %vm1822, %vm1822
        %vm1831 = vmpackc.low %vm1823, %vm1823
        %v1832 = vsel %vm1824, %v1363, 0
        %v1833 = vsel %vm1825, %v1364, 0
        %v1834 = vsel %vm1826, %v1365, 0
        %v1835 = vsel %vm1827, %v1366, 0
        %v1836 = vsel %vm1828, %v1367, 0
        %v1837 = vsel %vm1829, %v1368, 0
        %v1838 = vsel %vm1830, %v1369, 0
        %v1839 = vsel %vm1831, %v1362, 0
        %s1840 = scalar_lea.vmem %s2, 320
        %v1841 = vld [vmem:[%s1840] sm:$0xf]
        %v1842 = vld [vmem:[%s1840 + $0x4] sm:$0xf]
        %v1843 = vld [vmem:[%s1840 + $0x8] sm:$0xf]
        %v1844 = vld [vmem:[%s1840 + $0xc] sm:$0xf]
        %v1845 = vld [vmem:[%s1840 + $0x10] sm:$0xf]
        %v1846 = vld [vmem:[%s1840 + $0x14] sm:$0xf]
        %v1847 = vld [vmem:[%s1840 + $0x18] sm:$0xf]
        %v1848 = vld [vmem:[%s1840 + $0x1c] sm:$0xf]
        %v1849 = vld [vmem:[%s1840 + $0x20] sm:$0xf]
        %v1850 = vld [vmem:[%s1840 + $0x24] sm:$0xf]
        %v1851 = vld [vmem:[%s1840 + $0x28] sm:$0xf]
        %v1852 = vld [vmem:[%s1840 + $0x2c] sm:$0xf]
        %v1853 = vld [vmem:[%s1840 + $0x30] sm:$0xf]
        %v1854 = vld [vmem:[%s1840 + $0x34] sm:$0xf]
        %v1855 = vld [vmem:[%s1840 + $0x38] sm:$0xf]
        %v1856 = vld [vmem:[%s1840 + $0x3c] sm:$0xf]
        %v1865 = vunpack.c.l.b16 %v1832
        %v1866 = vunpack.c.l.b16 %v1833
        %v1867 = vunpack.c.l.b16 %v1834
        %v1868 = vunpack.c.l.b16 %v1835
        %v1869 = vunpack.c.l.b16 %v1836
        %v1870 = vunpack.c.l.b16 %v1837
        %v1871 = vunpack.c.l.b16 %v1838
        %v1872 = vunpack.c.l.b16 %v1839
        %v1873 = vpack.c.b16 %v1866, %v1865
        %v1874 = vpack.c.b16 %v1868, %v1867
        %v1875 = vpack.c.b16 %v1870, %v1869
        %v1876 = vpack.c.b16 %v1872, %v1871
        %v1897 = vunpack.c.l.b16 %v1841
        %v1898 = vunpack.c.l.b16 %v1842
        %v1899 = vunpack.c.l.b16 %v1843
        %v1900 = vunpack.c.l.b16 %v1844
        %v1901 = vunpack.c.l.b16 %v1845
        %v1902 = vunpack.c.l.b16 %v1846
        %v1903 = vunpack.c.l.b16 %v1847
        %v1904 = vunpack.c.l.b16 %v1848
        %v1905 = vunpack.c.l.b16 %v1849
        %v1906 = vunpack.c.l.b16 %v1850
        %v1907 = vunpack.c.l.b16 %v1851
        %v1908 = vunpack.c.l.b16 %v1852
        %v1909 = vunpack.c.l.b16 %v1853
        %v1910 = vunpack.c.l.b16 %v1854
        %v1911 = vunpack.c.l.b16 %v1855
        %v1912 = vunpack.c.l.b16 %v1856
        %v1913 = vpack.c.b16 %v1898, %v1897
        %v1914 = vpack.c.b16 %v1900, %v1899
        %v1915 = vpack.c.b16 %v1902, %v1901
        %v1916 = vpack.c.b16 %v1904, %v1903
        %v1917 = vpack.c.b16 %v1906, %v1905
        %v1918 = vpack.c.b16 %v1908, %v1907
        %v1919 = vpack.c.b16 %v1910, %v1909
        %v1920 = vpack.c.b16 %v1912, %v1911
        %1929 = vmatpush.bf16.msra.mxu0 %v1920
        %1930 = vmatpush.bf16.msra.mxu0 %v1919
        %1931 = vmatpush.bf16.msra.mxu0 %v1918
        %1932 = vmatpush.bf16.msra.mxu0 %v1917
        %1933 = vmatpush.bf16.msra.mxu0 %v1916
        %1934 = vmatpush.bf16.msra.mxu0 %v1915
        %1935 = vmatpush.bf16.msra.mxu0 %v1914
        %1936 = vmatpush.bf16.msra.mxu0 %v1913
        %1937 = vmatmul.bf16.gmra.mxu0 %v1873
        %v1938 = vpop.f32.mrf.mxu0
        %v1939 = vadd.f32 0.0, %v1938
        %v1940 = vpop.f32.mrf.mxu0
        %v1941 = vadd.f32 0.0, %v1940
        %1942 = vmatmul.bf16.gmra.mxu0 %v1874
        %v1943 = vpop.f32.mrf.mxu0
        %v1944 = vadd.f32 0.0, %v1943
        %v1945 = vpop.f32.mrf.mxu0
        %v1946 = vadd.f32 0.0, %v1945
        %1947 = vmatmul.bf16.gmra.mxu0 %v1875
        %v1948 = vpop.f32.mrf.mxu0
        %v1949 = vadd.f32 0.0, %v1948
        %v1950 = vpop.f32.mrf.mxu0
        %v1951 = vadd.f32 0.0, %v1950
        %1952 = vmatmul.bf16.gmra.mxu0 %v1876
        %v1953 = vpop.f32.mrf.mxu0
        %v1954 = vadd.f32 0.0, %v1953
        %v1955 = vpop.f32.mrf.mxu0
        %v1956 = vadd.f32 0.0, %v1955
        %1957 = vdwg.mxu0
        %v1958 = vadd.f32 %v1800, %v1939
        %v1959 = vadd.f32 %v1801, %v1941
        %v1960 = vadd.f32 %v1802, %v1944
        %v1961 = vadd.f32 %v1803, %v1946
        %v1962 = vadd.f32 %v1804, %v1949
        %v1963 = vadd.f32 %v1805, %v1951
        %v1964 = vadd.f32 %v1806, %v1954
        %v1965 = vadd.f32 %v1807, %v1956
        %vm1966 = vcmp.lt.s32.totalorder %v974, 7
        %vm1967 = vcmp.lt.s32.totalorder %v975, 7
        %vm1968 = vcmp.lt.s32.totalorder %v976, 7
        %vm1969 = vcmp.lt.s32.totalorder %v977, 7
        %vm1970 = vcmp.lt.s32.totalorder %v978, 7
        %vm1971 = vcmp.lt.s32.totalorder %v979, 7
        %vm1972 = vcmp.lt.s32.totalorder %v980, 7
        %vm1973 = vcmp.lt.s32.totalorder %v981, 7
        %vm1974 = vmand %vm1966, %vm1023
        %vm1975 = vmand %vm1967, %vm1024
        %vm1976 = vmand %vm1968, %vm1025
        %vm1977 = vmand %vm1969, %vm1026
        %vm1978 = vmand %vm1970, %vm1027
        %vm1979 = vmand %vm1971, %vm1028
        %vm1980 = vmand %vm1972, %vm1029
        %vm1981 = vmand %vm1973, %vm1030
        %v1982 = vsel %vm1974, 1, 0
        %v1983 = vsel %vm1975, 1, 0
        %v1984 = vsel %vm1976, 1, 0
        %v1985 = vsel %vm1977, 1, 0
        %v1986 = vsel %vm1978, 1, 0
        %v1987 = vsel %vm1979, 1, 0
        %v1988 = vsel %vm1980, 1, 0
        %v1989 = vsel %vm1981, 1, 0
        %vm1990 = vcmp.eq.s32.totalorder %v1982, 1
        %vm1991 = vcmp.eq.s32.totalorder %v1983, 1
        %vm1992 = vcmp.eq.s32.totalorder %v1984, 1
        %vm1993 = vcmp.eq.s32.totalorder %v1985, 1
        %vm1994 = vcmp.eq.s32.totalorder %v1986, 1
        %vm1995 = vcmp.eq.s32.totalorder %v1987, 1
        %vm1996 = vcmp.eq.s32.totalorder %v1988, 1
        %vm1997 = vcmp.eq.s32.totalorder %v1989, 1
        %vm1998 = vmpackc.low %vm1990, %vm1990
        %vm1999 = vmpackc.low %vm1991, %vm1991
        %vm2000 = vmpackc.low %vm1992, %vm1992
        %vm2001 = vmpackc.low %vm1993, %vm1993
        %vm2002 = vmpackc.low %vm1994, %vm1994
        %vm2003 = vmpackc.low %vm1995, %vm1995
        %vm2004 = vmpackc.low %vm1996, %vm1996
        %vm2005 = vmpackc.low %vm1997, %vm1997
        %v2006 = vsel %vm1998, %v1009, 0
        %v2007 = vsel %vm1999, %v1010, 0
        %v2008 = vsel %vm2000, %v1011, 0
        %v2009 = vsel %vm2001, %v1012, 0
        %v2010 = vsel %vm2002, %v1013, 0
        %v2011 = vsel %vm2003, %v1014, 0
        %v2012 = vsel %vm2004, %v1007, 0
        %v2013 = vsel %vm2005, %v1008, 0
        %s2014 = scalar_lea.vmem %s2, 384
        %v2015 = vld [vmem:[%s2014] sm:$0xf]
        %v2016 = vld [vmem:[%s2014 + $0x4] sm:$0xf]
        %v2017 = vld [vmem:[%s2014 + $0x8] sm:$0xf]
        %v2018 = vld [vmem:[%s2014 + $0xc] sm:$0xf]
        %v2019 = vld [vmem:[%s2014 + $0x10] sm:$0xf]
        %v2020 = vld [vmem:[%s2014 + $0x14] sm:$0xf]
        %v2021 = vld [vmem:[%s2014 + $0x18] sm:$0xf]
        %v2022 = vld [vmem:[%s2014 + $0x1c] sm:$0xf]
        %v2023 = vld [vmem:[%s2014 + $0x20] sm:$0xf]
        %v2024 = vld [vmem:[%s2014 + $0x24] sm:$0xf]
        %v2025 = vld [vmem:[%s2014 + $0x28] sm:$0xf]
        %v2026 = vld [vmem:[%s2014 + $0x2c] sm:$0xf]
        %v2027 = vld [vmem:[%s2014 + $0x30] sm:$0xf]
        %v2028 = vld [vmem:[%s2014 + $0x34] sm:$0xf]
        %v2029 = vld [vmem:[%s2014 + $0x38] sm:$0xf]
        %v2030 = vld [vmem:[%s2014 + $0x3c] sm:$0xf]
        %v2039 = vunpack.c.l.b16 %v2006
        %v2040 = vunpack.c.l.b16 %v2007
        %v2041 = vunpack.c.l.b16 %v2008
        %v2042 = vunpack.c.l.b16 %v2009
        %v2043 = vunpack.c.l.b16 %v2010
        %v2044 = vunpack.c.l.b16 %v2011
        %v2045 = vunpack.c.l.b16 %v2012
        %v2046 = vunpack.c.l.b16 %v2013
        %v2047 = vpack.c.b16 %v2040, %v2039
        %v2048 = vpack.c.b16 %v2042, %v2041
        %v2049 = vpack.c.b16 %v2044, %v2043
        %v2050 = vpack.c.b16 %v2046, %v2045
        %v2071 = vunpack.c.l.b16 %v2015
        %v2072 = vunpack.c.l.b16 %v2016
        %v2073 = vunpack.c.l.b16 %v2017
        %v2074 = vunpack.c.l.b16 %v2018
        %v2075 = vunpack.c.l.b16 %v2019
        %v2076 = vunpack.c.l.b16 %v2020
        %v2077 = vunpack.c.l.b16 %v2021
        %v2078 = vunpack.c.l.b16 %v2022
        %v2079 = vunpack.c.l.b16 %v2023
        %v2080 = vunpack.c.l.b16 %v2024
        %v2081 = vunpack.c.l.b16 %v2025
        %v2082 = vunpack.c.l.b16 %v2026
        %v2083 = vunpack.c.l.b16 %v2027
        %v2084 = vunpack.c.l.b16 %v2028
        %v2085 = vunpack.c.l.b16 %v2029
        %v2086 = vunpack.c.l.b16 %v2030
        %v2087 = vpack.c.b16 %v2072, %v2071
        %v2088 = vpack.c.b16 %v2074, %v2073
        %v2089 = vpack.c.b16 %v2076, %v2075
        %v2090 = vpack.c.b16 %v2078, %v2077
        %v2091 = vpack.c.b16 %v2080, %v2079
        %v2092 = vpack.c.b16 %v2082, %v2081
        %v2093 = vpack.c.b16 %v2084, %v2083
        %v2094 = vpack.c.b16 %v2086, %v2085
        %2103 = vmatpush.bf16.msra.mxu0 %v2094
        %2104 = vmatpush.bf16.msra.mxu0 %v2093
        %2105 = vmatpush.bf16.msra.mxu0 %v2092
        %2106 = vmatpush.bf16.msra.mxu0 %v2091
        %2107 = vmatpush.bf16.msra.mxu0 %v2090
        %2108 = vmatpush.bf16.msra.mxu0 %v2089
        %2109 = vmatpush.bf16.msra.mxu0 %v2088
        %2110 = vmatpush.bf16.msra.mxu0 %v2087
        %2111 = vmatmul.bf16.gmra.mxu0 %v2047
        %v2112 = vpop.f32.mrf.mxu0
        %v2113 = vadd.f32 0.0, %v2112
        %v2114 = vpop.f32.mrf.mxu0
        %v2115 = vadd.f32 0.0, %v2114
        %2116 = vmatmul.bf16.gmra.mxu0 %v2048
        %v2117 = vpop.f32.mrf.mxu0
        %v2118 = vadd.f32 0.0, %v2117
        %v2119 = vpop.f32.mrf.mxu0
        %v2120 = vadd.f32 0.0, %v2119
        %2121 = vmatmul.bf16.gmra.mxu0 %v2049
        %v2122 = vpop.f32.mrf.mxu0
        %v2123 = vadd.f32 0.0, %v2122
        %v2124 = vpop.f32.mrf.mxu0
        %v2125 = vadd.f32 0.0, %v2124
        %2126 = vmatmul.bf16.gmra.mxu0 %v2050
        %v2127 = vpop.f32.mrf.mxu0
        %v2128 = vadd.f32 0.0, %v2127
        %v2129 = vpop.f32.mrf.mxu0
        %v2130 = vadd.f32 0.0, %v2129
        %2131 = vdwg.mxu0
        %v2132 = vadd.f32 %v1958, %v2113
        %v2133 = vadd.f32 %v1959, %v2115
        %v2134 = vadd.f32 %v1960, %v2118
        %v2135 = vadd.f32 %v1961, %v2120
        %v2136 = vadd.f32 %v1962, %v2123
        %v2137 = vadd.f32 %v1963, %v2125
        %v2138 = vadd.f32 %v1964, %v2128
        %v2139 = vadd.f32 %v1965, %v2130
        %v2140 = vsel %vm1966, 1, 0
        %v2141 = vsel %vm1967, 1, 0
        %v2142 = vsel %vm1968, 1, 0
        %v2143 = vsel %vm1969, 1, 0
        %v2144 = vsel %vm1970, 1, 0
        %v2145 = vsel %vm1971, 1, 0
        %v2146 = vsel %vm1972, 1, 0
        %v2147 = vsel %vm1973, 1, 0
        %vm2148 = vcmp.eq.s32.totalorder %v2140, 1
        %vm2149 = vcmp.eq.s32.totalorder %v2141, 1
        %vm2150 = vcmp.eq.s32.totalorder %v2142, 1
        %vm2151 = vcmp.eq.s32.totalorder %v2143, 1
        %vm2152 = vcmp.eq.s32.totalorder %v2144, 1
        %vm2153 = vcmp.eq.s32.totalorder %v2145, 1
        %vm2154 = vcmp.eq.s32.totalorder %v2146, 1
        %vm2155 = vcmp.eq.s32.totalorder %v2147, 1
        %vm2156 = vmpackc.low %vm2148, %vm2148
        %vm2157 = vmpackc.low %vm2149, %vm2149
        %vm2158 = vmpackc.low %vm2150, %vm2150
        %vm2159 = vmpackc.low %vm2151, %vm2151
        %vm2160 = vmpackc.low %vm2152, %vm2152
        %vm2161 = vmpackc.low %vm2153, %vm2153
        %vm2162 = vmpackc.low %vm2154, %vm2154
        %vm2163 = vmpackc.low %vm2155, %vm2155
        %v2164 = vsel %vm2156, %v1089, 0
        %v2165 = vsel %vm2157, %v1090, 0
        %v2166 = vsel %vm2158, %v1091, 0
        %v2167 = vsel %vm2159, %v1092, 0
        %v2168 = vsel %vm2160, %v1093, 0
        %v2169 = vsel %vm2161, %v1094, 0
        %v2170 = vsel %vm2162, %v1087, 0
        %v2171 = vsel %vm2163, %v1088, 0
        %s2172 = scalar_lea.vmem %s2, 448
        %v2173 = vld [vmem:[%s2172] sm:$0xf]
        %v2174 = vld [vmem:[%s2172 + $0x4] sm:$0xf]
        %v2175 = vld [vmem:[%s2172 + $0x8] sm:$0xf]
        %v2176 = vld [vmem:[%s2172 + $0xc] sm:$0xf]
        %v2177 = vld [vmem:[%s2172 + $0x10] sm:$0xf]
        %v2178 = vld [vmem:[%s2172 + $0x14] sm:$0xf]
        %v2179 = vld [vmem:[%s2172 + $0x18] sm:$0xf]
        %v2180 = vld [vmem:[%s2172 + $0x1c] sm:$0xf]
        %v2181 = vld [vmem:[%s2172 + $0x20] sm:$0xf]
        %v2182 = vld [vmem:[%s2172 + $0x24] sm:$0xf]
        %v2183 = vld [vmem:[%s2172 + $0x28] sm:$0xf]
        %v2184 = vld [vmem:[%s2172 + $0x2c] sm:$0xf]
        %v2185 = vld [vmem:[%s2172 + $0x30] sm:$0xf]
        %v2186 = vld [vmem:[%s2172 + $0x34] sm:$0xf]
        %v2187 = vld [vmem:[%s2172 + $0x38] sm:$0xf]
        %v2188 = vld [vmem:[%s2172 + $0x3c] sm:$0xf]
        %v2197 = vunpack.c.l.b16 %v2164
        %v2198 = vunpack.c.l.b16 %v2165
        %v2199 = vunpack.c.l.b16 %v2166
        %v2200 = vunpack.c.l.b16 %v2167
        %v2201 = vunpack.c.l.b16 %v2168
        %v2202 = vunpack.c.l.b16 %v2169
        %v2203 = vunpack.c.l.b16 %v2170
        %v2204 = vunpack.c.l.b16 %v2171
        %v2205 = vpack.c.b16 %v2198, %v2197
        %v2206 = vpack.c.b16 %v2200, %v2199
        %v2207 = vpack.c.b16 %v2202, %v2201
        %v2208 = vpack.c.b16 %v2204, %v2203
        %v2229 = vunpack.c.l.b16 %v2173
        %v2230 = vunpack.c.l.b16 %v2174
        %v2231 = vunpack.c.l.b16 %v2175
        %v2232 = vunpack.c.l.b16 %v2176
        %v2233 = vunpack.c.l.b16 %v2177
        %v2234 = vunpack.c.l.b16 %v2178
        %v2235 = vunpack.c.l.b16 %v2179
        %v2236 = vunpack.c.l.b16 %v2180
        %v2237 = vunpack.c.l.b16 %v2181
        %v2238 = vunpack.c.l.b16 %v2182
        %v2239 = vunpack.c.l.b16 %v2183
        %v2240 = vunpack.c.l.b16 %v2184
        %v2241 = vunpack.c.l.b16 %v2185
        %v2242 = vunpack.c.l.b16 %v2186
        %v2243 = vunpack.c.l.b16 %v2187
        %v2244 = vunpack.c.l.b16 %v2188
        %v2245 = vpack.c.b16 %v2230, %v2229
        %v2246 = vpack.c.b16 %v2232, %v2231
        %v2247 = vpack.c.b16 %v2234, %v2233
        %v2248 = vpack.c.b16 %v2236, %v2235
        %v2249 = vpack.c.b16 %v2238, %v2237
        %v2250 = vpack.c.b16 %v2240, %v2239
        %v2251 = vpack.c.b16 %v2242, %v2241
        %v2252 = vpack.c.b16 %v2244, %v2243
        %2261 = vmatpush.bf16.msra.mxu0 %v2252
        %2262 = vmatpush.bf16.msra.mxu0 %v2251
        %2263 = vmatpush.bf16.msra.mxu0 %v2250
        %2264 = vmatpush.bf16.msra.mxu0 %v2249
        %2265 = vmatpush.bf16.msra.mxu0 %v2248
        %2266 = vmatpush.bf16.msra.mxu0 %v2247
        %2267 = vmatpush.bf16.msra.mxu0 %v2246
        %2268 = vmatpush.bf16.msra.mxu0 %v2245
        %2269 = vmatmul.bf16.gmra.mxu0 %v2205
        %v2270 = vpop.f32.mrf.mxu0
        %v2271 = vadd.f32 0.0, %v2270
        %v2272 = vpop.f32.mrf.mxu0
        %v2273 = vadd.f32 0.0, %v2272
        %2274 = vmatmul.bf16.gmra.mxu0 %v2206
        %v2275 = vpop.f32.mrf.mxu0
        %v2276 = vadd.f32 0.0, %v2275
        %v2277 = vpop.f32.mrf.mxu0
        %v2278 = vadd.f32 0.0, %v2277
        %2279 = vmatmul.bf16.gmra.mxu0 %v2207
        %v2280 = vpop.f32.mrf.mxu0
        %v2281 = vadd.f32 0.0, %v2280
        %v2282 = vpop.f32.mrf.mxu0
        %v2283 = vadd.f32 0.0, %v2282
        %2284 = vmatmul.bf16.gmra.mxu0 %v2208
        %v2285 = vpop.f32.mrf.mxu0
        %v2286 = vadd.f32 0.0, %v2285
        %v2287 = vpop.f32.mrf.mxu0
        %v2288 = vadd.f32 0.0, %v2287
        %2289 = vdwg.mxu0
        %v2290 = vadd.f32 %v2132, %v2271
        %v2291 = vadd.f32 %v2133, %v2273
        %v2292 = vadd.f32 %v2134, %v2276
        %v2293 = vadd.f32 %v2135, %v2278
        %v2294 = vadd.f32 %v2136, %v2281
        %v2295 = vadd.f32 %v2137, %v2283
        %v2296 = vadd.f32 %v2138, %v2286
        %v2297 = vadd.f32 %v2139, %v2288
        %vm2298 = vmand %vm1966, %vm1370
        %vm2299 = vmand %vm1967, %vm1371
        %vm2300 = vmand %vm1968, %vm1372
        %vm2301 = vmand %vm1969, %vm1373
        %vm2302 = vmand %vm1970, %vm1374
        %vm2303 = vmand %vm1971, %vm1375
        %vm2304 = vmand %vm1972, %vm1376
        %vm2305 = vmand %vm1973, %vm1377
        %v2306 = vsel %vm2298, 1, 0
        %v2307 = vsel %vm2299, 1, 0
        %v2308 = vsel %vm2300, 1, 0
        %v2309 = vsel %vm2301, 1, 0
        %v2310 = vsel %vm2302, 1, 0
        %v2311 = vsel %vm2303, 1, 0
        %v2312 = vsel %vm2304, 1, 0
        %v2313 = vsel %vm2305, 1, 0
        %vm2314 = vcmp.eq.s32.totalorder %v2306, 1
        %vm2315 = vcmp.eq.s32.totalorder %v2307, 1
        %vm2316 = vcmp.eq.s32.totalorder %v2308, 1
        %vm2317 = vcmp.eq.s32.totalorder %v2309, 1
        %vm2318 = vcmp.eq.s32.totalorder %v2310, 1
        %vm2319 = vcmp.eq.s32.totalorder %v2311, 1
        %vm2320 = vcmp.eq.s32.totalorder %v2312, 1
        %vm2321 = vcmp.eq.s32.totalorder %v2313, 1
        %vm2322 = vmpackc.low %vm2314, %vm2314
        %vm2323 = vmpackc.low %vm2315, %vm2315
        %vm2324 = vmpackc.low %vm2316, %vm2316
        %vm2325 = vmpackc.low %vm2317, %vm2317
        %vm2326 = vmpackc.low %vm2318, %vm2318
        %vm2327 = vmpackc.low %vm2319, %vm2319
        %vm2328 = vmpackc.low %vm2320, %vm2320
        %vm2329 = vmpackc.low %vm2321, %vm2321
        %v2330 = vsel %vm2322, %v1364, 0
        %v2331 = vsel %vm2323, %v1365, 0
        %v2332 = vsel %vm2324, %v1366, 0
        %v2333 = vsel %vm2325, %v1367, 0
        %v2334 = vsel %vm2326, %v1368, 0
        %v2335 = vsel %vm2327, %v1369, 0
        %v2336 = vsel %vm2328, %v1362, 0
        %v2337 = vsel %vm2329, %v1363, 0
        %s2338 = scalar_lea.vmem %s2, 512
        %v2339 = vld [vmem:[%s2338] sm:$0xf]
        %v2340 = vld [vmem:[%s2338 + $0x4] sm:$0xf]
        %v2341 = vld [vmem:[%s2338 + $0x8] sm:$0xf]
        %v2342 = vld [vmem:[%s2338 + $0xc] sm:$0xf]
        %v2343 = vld [vmem:[%s2338 + $0x10] sm:$0xf]
        %v2344 = vld [vmem:[%s2338 + $0x14] sm:$0xf]
        %v2345 = vld [vmem:[%s2338 + $0x18] sm:$0xf]
        %v2346 = vld [vmem:[%s2338 + $0x1c] sm:$0xf]
        %v2347 = vld [vmem:[%s2338 + $0x20] sm:$0xf]
        %v2348 = vld [vmem:[%s2338 + $0x24] sm:$0xf]
        %v2349 = vld [vmem:[%s2338 + $0x28] sm:$0xf]
        %v2350 = vld [vmem:[%s2338 + $0x2c] sm:$0xf]
        %v2351 = vld [vmem:[%s2338 + $0x30] sm:$0xf]
        %v2352 = vld [vmem:[%s2338 + $0x34] sm:$0xf]
        %v2353 = vld [vmem:[%s2338 + $0x38] sm:$0xf]
        %v2354 = vld [vmem:[%s2338 + $0x3c] sm:$0xf]
        %v2363 = vunpack.c.l.b16 %v2330
        %v2364 = vunpack.c.l.b16 %v2331
        %v2365 = vunpack.c.l.b16 %v2332
        %v2366 = vunpack.c.l.b16 %v2333
        %v2367 = vunpack.c.l.b16 %v2334
        %v2368 = vunpack.c.l.b16 %v2335
        %v2369 = vunpack.c.l.b16 %v2336
        %v2370 = vunpack.c.l.b16 %v2337
        %v2371 = vpack.c.b16 %v2364, %v2363
        %v2372 = vpack.c.b16 %v2366, %v2365
        %v2373 = vpack.c.b16 %v2368, %v2367
        %v2374 = vpack.c.b16 %v2370, %v2369
        %v2395 = vunpack.c.l.b16 %v2339
        %v2396 = vunpack.c.l.b16 %v2340
        %v2397 = vunpack.c.l.b16 %v2341
        %v2398 = vunpack.c.l.b16 %v2342
        %v2399 = vunpack.c.l.b16 %v2343
        %v2400 = vunpack.c.l.b16 %v2344
        %v2401 = vunpack.c.l.b16 %v2345
        %v2402 = vunpack.c.l.b16 %v2346
        %v2403 = vunpack.c.l.b16 %v2347
        %v2404 = vunpack.c.l.b16 %v2348
        %v2405 = vunpack.c.l.b16 %v2349
        %v2406 = vunpack.c.l.b16 %v2350
        %v2407 = vunpack.c.l.b16 %v2351
        %v2408 = vunpack.c.l.b16 %v2352
        %v2409 = vunpack.c.l.b16 %v2353
        %v2410 = vunpack.c.l.b16 %v2354
        %v2411 = vpack.c.b16 %v2396, %v2395
        %v2412 = vpack.c.b16 %v2398, %v2397
        %v2413 = vpack.c.b16 %v2400, %v2399
        %v2414 = vpack.c.b16 %v2402, %v2401
        %v2415 = vpack.c.b16 %v2404, %v2403
        %v2416 = vpack.c.b16 %v2406, %v2405
        %v2417 = vpack.c.b16 %v2408, %v2407
        %v2418 = vpack.c.b16 %v2410, %v2409
        %2427 = vmatpush.bf16.msra.mxu0 %v2418
        %2428 = vmatpush.bf16.msra.mxu0 %v2417
        %2429 = vmatpush.bf16.msra.mxu0 %v2416
        %2430 = vmatpush.bf16.msra.mxu0 %v2415
        %2431 = vmatpush.bf16.msra.mxu0 %v2414
        %2432 = vmatpush.bf16.msra.mxu0 %v2413
        %2433 = vmatpush.bf16.msra.mxu0 %v2412
        %2434 = vmatpush.bf16.msra.mxu0 %v2411
        %2435 = vmatmul.bf16.gmra.mxu0 %v2371
        %v2436 = vpop.f32.mrf.mxu0
        %v2437 = vadd.f32 0.0, %v2436
        %v2438 = vpop.f32.mrf.mxu0
        %v2439 = vadd.f32 0.0, %v2438
        %2440 = vmatmul.bf16.gmra.mxu0 %v2372
        %v2441 = vpop.f32.mrf.mxu0
        %v2442 = vadd.f32 0.0, %v2441
        %v2443 = vpop.f32.mrf.mxu0
        %v2444 = vadd.f32 0.0, %v2443
        %2445 = vmatmul.bf16.gmra.mxu0 %v2373
        %v2446 = vpop.f32.mrf.mxu0
        %v2447 = vadd.f32 0.0, %v2446
        %v2448 = vpop.f32.mrf.mxu0
        %v2449 = vadd.f32 0.0, %v2448
        %2450 = vmatmul.bf16.gmra.mxu0 %v2374
        %v2451 = vpop.f32.mrf.mxu0
        %v2452 = vadd.f32 0.0, %v2451
        %v2453 = vpop.f32.mrf.mxu0
        %v2454 = vadd.f32 0.0, %v2453
        %2455 = vdwg.mxu0
        %v2456 = vadd.f32 %v2290, %v2437
        %v2457 = vadd.f32 %v2291, %v2439
        %v2458 = vadd.f32 %v2292, %v2442
        %v2459 = vadd.f32 %v2293, %v2444
        %v2460 = vadd.f32 %v2294, %v2447
        %v2461 = vadd.f32 %v2295, %v2449
        %v2462 = vadd.f32 %v2296, %v2452
        %v2463 = vadd.f32 %v2297, %v2454
        %s2464 = scalar_lea.vmem %s3, 1
        %v2465 = vld [vmem:[%s2464] sm:$0x1]
        %v2467 = vperm.slane %v2465, 0
        %v2469 = vadd.f32 %v2456, %v2467
        %v2470 = vadd.f32 %v2457, %v2467
        %v2471 = vadd.f32 %v2458, %v2467
        %v2472 = vadd.f32 %v2459, %v2467
        %v2473 = vadd.f32 %v2460, %v2467
        %v2474 = vadd.f32 %v2461, %v2467
        %v2475 = vadd.f32 %v2462, %v2467
        %v2476 = vadd.f32 %v2463, %v2467
        %v2477 = vmax.f32 %v2469, 0.0
        %v2478 = vmax.f32 %v2470, 0.0
        %v2479 = vmax.f32 %v2471, 0.0
        %v2480 = vmax.f32 %v2472, 0.0
        %v2481 = vmax.f32 %v2473, 0.0
        %v2482 = vmax.f32 %v2474, 0.0
        %v2483 = vmax.f32 %v2475, 0.0
        %v2484 = vmax.f32 %v2476, 0.0
        %v2485 = vrot.slane %v2477, 1
        %v2486 = vrot.slane %v2478, 1
        %v2487 = vrot.slane %v2479, 1
        %v2488 = vrot.slane %v2480, 1
        %v2489 = vrot.slane %v2481, 1
        %v2490 = vrot.slane %v2482, 1
        %v2491 = vrot.slane %v2483, 1
        %v2492 = vrot.slane %v2484, 1
        %v2493 = vsel %vm628, %v2491, %v2492
        %v2494 = vsel %vm628, %v2490, %v2491
        %v2495 = vsel %vm628, %v2489, %v2490
        %v2496 = vsel %vm628, %v2488, %v2489
        %v2497 = vsel %vm628, %v2487, %v2488
        %v2498 = vsel %vm628, %v2486, %v2487
        %v2499 = vsel %vm628, %v2485, %v2486
        %v2500 = vsel %vm628, %v2492, %v2485
        %v2501 = vmax.f32 %v2477, %v2499
        %v2502 = vmax.f32 %v2478, %v2498
        %v2503 = vmax.f32 %v2479, %v2497
        %v2504 = vmax.f32 %v2480, %v2496
        %v2505 = vmax.f32 %v2481, %v2495
        %v2506 = vmax.f32 %v2482, %v2494
        %v2507 = vmax.f32 %v2483, %v2493
        %v2508 = vmax.f32 %v2484, %v2500
        %v2509 = vmax.f32 %v2501, %v2502
        %v2510 = vmax.f32 %v2502, %v2503
        %v2511 = vmax.f32 %v2503, %v2504
        %v2512 = vmax.f32 %v2504, %v2505
        %v2513 = vmax.f32 %v2505, %v2506
        %v2514 = vmax.f32 %v2506, %v2507
        %v2515 = vmax.f32 %v2507, %v2508
        %v2516 = vmax.f32 %v2508, %v2501
        %v2517 = vpack.c.bf16 %v2509, %v2509
        %v2518 = vpack.c.bf16 %v2510, %v2510
        %v2519 = vpack.c.bf16 %v2511, %v2511
        %v2520 = vpack.c.bf16 %v2512, %v2512
        %v2521 = vpack.c.bf16 %v2513, %v2513
        %v2522 = vpack.c.bf16 %v2514, %v2514
        %v2523 = vpack.c.bf16 %v2515, %v2515
        %v2524 = vpack.c.bf16 %v2516, %v2516
        %v2525 = vld [vmem:[%s5] sm:$0xf]
        %v2526 = vld [vmem:[%s5 + $0x4] sm:$0xf]
        %v2529 = vunpack.c.l.b16 %v2525
        %v2530 = vunpack.c.l.b16 %v2526
        %v2531 = vpack.c.b16 %v2530, %v2529
        %v2540 = vunpack.c.l.b16 %v2517
        %v2541 = vunpack.c.l.b16 %v2518
        %v2542 = vunpack.c.l.b16 %v2519
        %v2543 = vunpack.c.l.b16 %v2520
        %v2544 = vunpack.c.l.b16 %v2521
        %v2545 = vunpack.c.l.b16 %v2522
        %v2546 = vunpack.c.l.b16 %v2523
        %v2547 = vunpack.c.l.b16 %v2524
        %v2548 = vpack.c.b16 %v2541, %v2540
        %v2549 = vpack.c.b16 %v2543, %v2542
        %v2550 = vpack.c.b16 %v2545, %v2544
        %v2551 = vpack.c.b16 %v2547, %v2546
        %vm2556 = vcmask 523264
        %v2558 = vsel %vm2556, %v2531, 0
        %2560 = vmatpush.bf16.msra.mxu0 0
        %2561 = vmatpush.bf16.msra.mxu0 0
        %2562 = vmatpush.bf16.msra.mxu0 0
        %2563 = vmatpush.bf16.msra.mxu0 0
        %2564 = vmatpush.bf16.msra.mxu0 %v2551
        %2565 = vmatpush.bf16.msra.mxu0 %v2550
        %2566 = vmatpush.bf16.msra.mxu0 %v2549
        %2567 = vmatpush.bf16.msra.mxu0 %v2548
        %2568 = vmatmul.bf16.gmra.mxu0 %v2558
        %v2569 = vpop.f32.mrf.mxu0
        %v2570 = vadd.f32 0.0, %v2569
        %v2571 = vpop.f32.mrf.mxu0
        %v2572 = vadd.f32 0.0, %v2571
        %2573 = vdwg.mxu0
        %v2574 = vand.u32 %v627, 15
        %v2575 = vand.u32 %v959, 15
        %v2576 = vshra.s32 %v2574, 2
        %v2577 = vshra.s32 %v2575, 2
        %v2578 = vand.u32 %v2574, 3
        %v2579 = vand.u32 %v2575, 3
        %v2580 = vrot.slane %v2570, 3
        %v2581 = vrot.slane %v2572, 3
        %vm2582 = vcmp.lt.s32.totalorder %v627, 5
        %v2583 = vsel %vm2582, %v2580, %v2581
        %v2584 = vsel %vm2582, %v2581, %v2580
        %v2585 = vpack.c.bf16 %v2584, %v2584
        %v2586 = vpack.c.bf16 %v2583, %v2583
        %vm2587 = vcmp.ge.s32.totalorder %v2576, 1
        %vm2588 = vcmp.ge.s32.totalorder %v2577, 1
        %vm2589 = vcmp.ge.s32.totalorder %v2578, 1
        %vm2590 = vcmp.ge.s32.totalorder %v2579, 1
        %vm2591 = vmand %vm2587, %vm2589
        %vm2592 = vmand %vm2588, %vm2590
        %v2593 = vsel %vm2591, 1, 0
        %v2594 = vsel %vm2592, 1, 0
        %vm2595 = vcmp.eq.s32.totalorder %v2593, 1
        %vm2596 = vcmp.eq.s32.totalorder %v2594, 1
        %vm2597 = vmpackc.low %vm2595, %vm2595
        %vm2598 = vmpackc.low %vm2596, %vm2596
        %v2599 = vsel %vm2597, %v2585, 0
        %v2600 = vsel %vm2598, %v2586, 0
        %s2601 = scalar_lea.vmem %s2, 576
        %v2602 = vld [vmem:[%s2601] sm:$0xf]
        %v2603 = vld [vmem:[%s2601 + $0x4] sm:$0xf]
        %v2604 = vld [vmem:[%s2601 + $0x8] sm:$0xf]
        %v2605 = vld [vmem:[%s2601 + $0xc] sm:$0xf]
        %v2606 = vld [vmem:[%s2601 + $0x10] sm:$0xf]
        %v2607 = vld [vmem:[%s2601 + $0x14] sm:$0xf]
        %v2608 = vld [vmem:[%s2601 + $0x18] sm:$0xf]
        %v2609 = vld [vmem:[%s2601 + $0x1c] sm:$0xf]
        %v2610 = vld [vmem:[%s2601 + $0x20] sm:$0xf]
        %v2611 = vld [vmem:[%s2601 + $0x24] sm:$0xf]
        %v2612 = vld [vmem:[%s2601 + $0x28] sm:$0xf]
        %v2613 = vld [vmem:[%s2601 + $0x2c] sm:$0xf]
        %v2614 = vld [vmem:[%s2601 + $0x30] sm:$0xf]
        %v2615 = vld [vmem:[%s2601 + $0x34] sm:$0xf]
        %v2616 = vld [vmem:[%s2601 + $0x38] sm:$0xf]
        %v2617 = vld [vmem:[%s2601 + $0x3c] sm:$0xf]
        %v2618 = vrot.slane %v2570, 4
        %v2619 = vrot.slane %v2572, 4
        %vm2620 = vcmp.lt.s32.totalorder %v627, 4
        %v2621 = vsel %vm2620, %v2618, %v2619
        %v2622 = vsel %vm2620, %v2619, %v2618
        %v2623 = vpack.c.bf16 %v2622, %v2622
        %v2624 = vpack.c.bf16 %v2621, %v2621
        %v2625 = vsel %vm2587, 1, 0
        %v2626 = vsel %vm2588, 1, 0
        %vm2627 = vcmp.eq.s32.totalorder %v2625, 1
        %vm2628 = vcmp.eq.s32.totalorder %v2626, 1
        %vm2629 = vmpackc.low %vm2627, %vm2627
        %vm2630 = vmpackc.low %vm2628, %vm2628
        %v2631 = vsel %vm2629, %v2623, 0
        %v2632 = vsel %vm2630, %v2624, 0
        %s2633 = scalar_lea.vmem %s2, 640
        %v2634 = vld [vmem:[%s2633] sm:$0xf]
        %v2635 = vld [vmem:[%s2633 + $0x4] sm:$0xf]
        %v2636 = vld [vmem:[%s2633 + $0x8] sm:$0xf]
        %v2637 = vld [vmem:[%s2633 + $0xc] sm:$0xf]
        %v2638 = vld [vmem:[%s2633 + $0x10] sm:$0xf]
        %v2639 = vld [vmem:[%s2633 + $0x14] sm:$0xf]
        %v2640 = vld [vmem:[%s2633 + $0x18] sm:$0xf]
        %v2641 = vld [vmem:[%s2633 + $0x1c] sm:$0xf]
        %v2642 = vld [vmem:[%s2633 + $0x20] sm:$0xf]
        %v2643 = vld [vmem:[%s2633 + $0x24] sm:$0xf]
        %v2644 = vld [vmem:[%s2633 + $0x28] sm:$0xf]
        %v2645 = vld [vmem:[%s2633 + $0x2c] sm:$0xf]
        %v2646 = vld [vmem:[%s2633 + $0x30] sm:$0xf]
        %v2647 = vld [vmem:[%s2633 + $0x34] sm:$0xf]
        %v2648 = vld [vmem:[%s2633 + $0x38] sm:$0xf]
        %v2649 = vld [vmem:[%s2633 + $0x3c] sm:$0xf]
        %v2652 = vunpack.c.l.b16 %v2631
        %v2653 = vunpack.c.l.b16 %v2632
        %v2654 = vpack.c.b16 %v2653, %v2652
        %v2672 = vunpack.c.l.b16 %v2634
        %v2673 = vunpack.c.l.b16 %v2635
        %v2674 = vunpack.c.l.b16 %v2636
        %v2675 = vunpack.c.l.b16 %v2637
        %v2676 = vunpack.c.l.b16 %v2638
        %v2677 = vunpack.c.l.b16 %v2639
        %v2678 = vunpack.c.l.b16 %v2640
        %v2679 = vunpack.c.l.b16 %v2641
        %v2680 = vunpack.c.l.b16 %v2642
        %v2681 = vunpack.c.l.b16 %v2643
        %v2682 = vunpack.c.l.b16 %v2644
        %v2683 = vunpack.c.l.b16 %v2645
        %v2684 = vunpack.c.l.b16 %v2646
        %v2685 = vunpack.c.l.b16 %v2647
        %v2686 = vunpack.c.l.b16 %v2648
        %v2687 = vunpack.c.l.b16 %v2649
        %v2688 = vpack.c.b16 %v2673, %v2672
        %v2689 = vpack.c.b16 %v2675, %v2674
        %v2690 = vpack.c.b16 %v2677, %v2676
        %v2691 = vpack.c.b16 %v2679, %v2678
        %v2692 = vpack.c.b16 %v2681, %v2680
        %v2693 = vpack.c.b16 %v2683, %v2682
        %v2694 = vpack.c.b16 %v2685, %v2684
        %v2695 = vpack.c.b16 %v2687, %v2686
        %2704 = vmatpush.bf16.msra.mxu0 %v2695
        %2705 = vmatpush.bf16.msra.mxu0 %v2694
        %2706 = vmatpush.bf16.msra.mxu0 %v2693
        %2707 = vmatpush.bf16.msra.mxu0 %v2692
        %2708 = vmatpush.bf16.msra.mxu0 %v2691
        %2709 = vmatpush.bf16.msra.mxu0 %v2690
        %2710 = vmatpush.bf16.msra.mxu0 %v2689
        %2711 = vmatpush.bf16.msra.mxu0 %v2688
        %2712 = vmatmul.bf16.gmra.mxu0 %v2654
        %v2713 = vpop.f32.mrf.mxu0
        %v2714 = vadd.f32 0.0, %v2713
        %v2715 = vpop.f32.mrf.mxu0
        %v2716 = vadd.f32 0.0, %v2715
        %2717 = vdwg.mxu0
        %v2720 = vunpack.c.l.b16 %v2599
        %v2721 = vunpack.c.l.b16 %v2600
        %v2722 = vpack.c.b16 %v2721, %v2720
        %v2740 = vunpack.c.l.b16 %v2602
        %v2741 = vunpack.c.l.b16 %v2603
        %v2742 = vunpack.c.l.b16 %v2604
        %v2743 = vunpack.c.l.b16 %v2605
        %v2744 = vunpack.c.l.b16 %v2606
        %v2745 = vunpack.c.l.b16 %v2607
        %v2746 = vunpack.c.l.b16 %v2608
        %v2747 = vunpack.c.l.b16 %v2609
        %v2748 = vunpack.c.l.b16 %v2610
        %v2749 = vunpack.c.l.b16 %v2611
        %v2750 = vunpack.c.l.b16 %v2612
        %v2751 = vunpack.c.l.b16 %v2613
        %v2752 = vunpack.c.l.b16 %v2614
        %v2753 = vunpack.c.l.b16 %v2615
        %v2754 = vunpack.c.l.b16 %v2616
        %v2755 = vunpack.c.l.b16 %v2617
        %v2756 = vpack.c.b16 %v2741, %v2740
        %v2757 = vpack.c.b16 %v2743, %v2742
        %v2758 = vpack.c.b16 %v2745, %v2744
        %v2759 = vpack.c.b16 %v2747, %v2746
        %v2760 = vpack.c.b16 %v2749, %v2748
        %v2761 = vpack.c.b16 %v2751, %v2750
        %v2762 = vpack.c.b16 %v2753, %v2752
        %v2763 = vpack.c.b16 %v2755, %v2754
        %2772 = vmatpush.bf16.msra.mxu0 %v2763
        %2773 = vmatpush.bf16.msra.mxu0 %v2762
        %2774 = vmatpush.bf16.msra.mxu0 %v2761
        %2775 = vmatpush.bf16.msra.mxu0 %v2760
        %2776 = vmatpush.bf16.msra.mxu0 %v2759
        %2777 = vmatpush.bf16.msra.mxu0 %v2758
        %2778 = vmatpush.bf16.msra.mxu0 %v2757
        %2779 = vmatpush.bf16.msra.mxu0 %v2756
        %2780 = vmatmul.bf16.gmra.mxu0 %v2722
        %v2781 = vpop.f32.mrf.mxu0
        %v2782 = vadd.f32 %v2714, %v2781
        %v2783 = vpop.f32.mrf.mxu0
        %v2784 = vadd.f32 %v2716, %v2783
        %2785 = vdwg.mxu0
        %v2786 = vrot.slane %v2570, 5
        %v2787 = vrot.slane %v2572, 5
        %vm2788 = vcmp.lt.s32.totalorder %v627, 3
        %v2789 = vsel %vm2788, %v2786, %v2787
        %v2790 = vsel %vm2788, %v2787, %v2786
        %v2791 = vpack.c.bf16 %v2790, %v2790
        %v2792 = vpack.c.bf16 %v2789, %v2789
        %vm2793 = vcmp.lt.s32.totalorder %v2578, 3
        %vm2794 = vcmp.lt.s32.totalorder %v2579, 3
        %vm2795 = vmand %vm2587, %vm2793
        %vm2796 = vmand %vm2588, %vm2794
        %v2797 = vsel %vm2795, 1, 0
        %v2798 = vsel %vm2796, 1, 0
        %vm2799 = vcmp.eq.s32.totalorder %v2797, 1
        %vm2800 = vcmp.eq.s32.totalorder %v2798, 1
        %vm2801 = vmpackc.low %vm2799, %vm2799
        %vm2802 = vmpackc.low %vm2800, %vm2800
        %v2803 = vsel %vm2801, %v2791, 0
        %v2804 = vsel %vm2802, %v2792, 0
        %s2805 = scalar_lea.vmem %s2, 704
        %v2806 = vld [vmem:[%s2805] sm:$0xf]
        %v2807 = vld [vmem:[%s2805 + $0x4] sm:$0xf]
        %v2808 = vld [vmem:[%s2805 + $0x8] sm:$0xf]
        %v2809 = vld [vmem:[%s2805 + $0xc] sm:$0xf]
        %v2810 = vld [vmem:[%s2805 + $0x10] sm:$0xf]
        %v2811 = vld [vmem:[%s2805 + $0x14] sm:$0xf]
        %v2812 = vld [vmem:[%s2805 + $0x18] sm:$0xf]
        %v2813 = vld [vmem:[%s2805 + $0x1c] sm:$0xf]
        %v2814 = vld [vmem:[%s2805 + $0x20] sm:$0xf]
        %v2815 = vld [vmem:[%s2805 + $0x24] sm:$0xf]
        %v2816 = vld [vmem:[%s2805 + $0x28] sm:$0xf]
        %v2817 = vld [vmem:[%s2805 + $0x2c] sm:$0xf]
        %v2818 = vld [vmem:[%s2805 + $0x30] sm:$0xf]
        %v2819 = vld [vmem:[%s2805 + $0x34] sm:$0xf]
        %v2820 = vld [vmem:[%s2805 + $0x38] sm:$0xf]
        %v2821 = vld [vmem:[%s2805 + $0x3c] sm:$0xf]
        %v2824 = vunpack.c.l.b16 %v2803
        %v2825 = vunpack.c.l.b16 %v2804
        %v2826 = vpack.c.b16 %v2825, %v2824
        %v2844 = vunpack.c.l.b16 %v2806
        %v2845 = vunpack.c.l.b16 %v2807
        %v2846 = vunpack.c.l.b16 %v2808
        %v2847 = vunpack.c.l.b16 %v2809
        %v2848 = vunpack.c.l.b16 %v2810
        %v2849 = vunpack.c.l.b16 %v2811
        %v2850 = vunpack.c.l.b16 %v2812
        %v2851 = vunpack.c.l.b16 %v2813
        %v2852 = vunpack.c.l.b16 %v2814
        %v2853 = vunpack.c.l.b16 %v2815
        %v2854 = vunpack.c.l.b16 %v2816
        %v2855 = vunpack.c.l.b16 %v2817
        %v2856 = vunpack.c.l.b16 %v2818
        %v2857 = vunpack.c.l.b16 %v2819
        %v2858 = vunpack.c.l.b16 %v2820
        %v2859 = vunpack.c.l.b16 %v2821
        %v2860 = vpack.c.b16 %v2845, %v2844
        %v2861 = vpack.c.b16 %v2847, %v2846
        %v2862 = vpack.c.b16 %v2849, %v2848
        %v2863 = vpack.c.b16 %v2851, %v2850
        %v2864 = vpack.c.b16 %v2853, %v2852
        %v2865 = vpack.c.b16 %v2855, %v2854
        %v2866 = vpack.c.b16 %v2857, %v2856
        %v2867 = vpack.c.b16 %v2859, %v2858
        %2876 = vmatpush.bf16.msra.mxu0 %v2867
        %2877 = vmatpush.bf16.msra.mxu0 %v2866
        %2878 = vmatpush.bf16.msra.mxu0 %v2865
        %2879 = vmatpush.bf16.msra.mxu0 %v2864
        %2880 = vmatpush.bf16.msra.mxu0 %v2863
        %2881 = vmatpush.bf16.msra.mxu0 %v2862
        %2882 = vmatpush.bf16.msra.mxu0 %v2861
        %2883 = vmatpush.bf16.msra.mxu0 %v2860
        %2884 = vmatmul.bf16.gmra.mxu0 %v2826
        %v2885 = vpop.f32.mrf.mxu0
        %v2886 = vadd.f32 0.0, %v2885
        %v2887 = vpop.f32.mrf.mxu0
        %v2888 = vadd.f32 0.0, %v2887
        %2889 = vdwg.mxu0
        %v2890 = vadd.f32 %v2782, %v2886
        %v2891 = vadd.f32 %v2784, %v2888
        %v2892 = vrot.slane %v2570, 7
        %v2893 = vrot.slane %v2572, 7
        %v2894 = vsel %vm998, %v2892, %v2893
        %v2895 = vsel %vm998, %v2893, %v2892
        %v2896 = vpack.c.bf16 %v2895, %v2895
        %v2897 = vpack.c.bf16 %v2894, %v2894
        %v2898 = vsel %vm2589, 1, 0
        %v2899 = vsel %vm2590, 1, 0
        %vm2900 = vcmp.eq.s32.totalorder %v2898, 1
        %vm2901 = vcmp.eq.s32.totalorder %v2899, 1
        %vm2902 = vmpackc.low %vm2900, %vm2900
        %vm2903 = vmpackc.low %vm2901, %vm2901
        %v2904 = vsel %vm2902, %v2896, 0
        %v2905 = vsel %vm2903, %v2897, 0
        %s2906 = scalar_lea.vmem %s2, 768
        %v2907 = vld [vmem:[%s2906] sm:$0xf]
        %v2908 = vld [vmem:[%s2906 + $0x4] sm:$0xf]
        %v2909 = vld [vmem:[%s2906 + $0x8] sm:$0xf]
        %v2910 = vld [vmem:[%s2906 + $0xc] sm:$0xf]
        %v2911 = vld [vmem:[%s2906 + $0x10] sm:$0xf]
        %v2912 = vld [vmem:[%s2906 + $0x14] sm:$0xf]
        %v2913 = vld [vmem:[%s2906 + $0x18] sm:$0xf]
        %v2914 = vld [vmem:[%s2906 + $0x1c] sm:$0xf]
        %v2915 = vld [vmem:[%s2906 + $0x20] sm:$0xf]
        %v2916 = vld [vmem:[%s2906 + $0x24] sm:$0xf]
        %v2917 = vld [vmem:[%s2906 + $0x28] sm:$0xf]
        %v2918 = vld [vmem:[%s2906 + $0x2c] sm:$0xf]
        %v2919 = vld [vmem:[%s2906 + $0x30] sm:$0xf]
        %v2920 = vld [vmem:[%s2906 + $0x34] sm:$0xf]
        %v2921 = vld [vmem:[%s2906 + $0x38] sm:$0xf]
        %v2922 = vld [vmem:[%s2906 + $0x3c] sm:$0xf]
        %v2925 = vunpack.c.l.b16 %v2904
        %v2926 = vunpack.c.l.b16 %v2905
        %v2927 = vpack.c.b16 %v2926, %v2925
        %v2945 = vunpack.c.l.b16 %v2907
        %v2946 = vunpack.c.l.b16 %v2908
        %v2947 = vunpack.c.l.b16 %v2909
        %v2948 = vunpack.c.l.b16 %v2910
        %v2949 = vunpack.c.l.b16 %v2911
        %v2950 = vunpack.c.l.b16 %v2912
        %v2951 = vunpack.c.l.b16 %v2913
        %v2952 = vunpack.c.l.b16 %v2914
        %v2953 = vunpack.c.l.b16 %v2915
        %v2954 = vunpack.c.l.b16 %v2916
        %v2955 = vunpack.c.l.b16 %v2917
        %v2956 = vunpack.c.l.b16 %v2918
        %v2957 = vunpack.c.l.b16 %v2919
        %v2958 = vunpack.c.l.b16 %v2920
        %v2959 = vunpack.c.l.b16 %v2921
        %v2960 = vunpack.c.l.b16 %v2922
        %v2961 = vpack.c.b16 %v2946, %v2945
        %v2962 = vpack.c.b16 %v2948, %v2947
        %v2963 = vpack.c.b16 %v2950, %v2949
        %v2964 = vpack.c.b16 %v2952, %v2951
        %v2965 = vpack.c.b16 %v2954, %v2953
        %v2966 = vpack.c.b16 %v2956, %v2955
        %v2967 = vpack.c.b16 %v2958, %v2957
        %v2968 = vpack.c.b16 %v2960, %v2959
        %2977 = vmatpush.bf16.msra.mxu0 %v2968
        %2978 = vmatpush.bf16.msra.mxu0 %v2967
        %2979 = vmatpush.bf16.msra.mxu0 %v2966
        %2980 = vmatpush.bf16.msra.mxu0 %v2965
        %2981 = vmatpush.bf16.msra.mxu0 %v2964
        %2982 = vmatpush.bf16.msra.mxu0 %v2963
        %2983 = vmatpush.bf16.msra.mxu0 %v2962
        %2984 = vmatpush.bf16.msra.mxu0 %v2961
        %2985 = vmatmul.bf16.gmra.mxu0 %v2927
        %v2986 = vpop.f32.mrf.mxu0
        %v2987 = vadd.f32 0.0, %v2986
        %v2988 = vpop.f32.mrf.mxu0
        %v2989 = vadd.f32 0.0, %v2988
        %2990 = vdwg.mxu0
        %v2991 = vadd.f32 %v2890, %v2987
        %v2992 = vadd.f32 %v2891, %v2989
        %v2993 = vpack.c.bf16 %v2572, %v2570
        %s2994 = scalar_lea.vmem %s2, 832
        %v2995 = vld [vmem:[%s2994] sm:$0xf]
        %v2996 = vld [vmem:[%s2994 + $0x4] sm:$0xf]
        %v2997 = vld [vmem:[%s2994 + $0x8] sm:$0xf]
        %v2998 = vld [vmem:[%s2994 + $0xc] sm:$0xf]
        %v2999 = vld [vmem:[%s2994 + $0x10] sm:$0xf]
        %v3000 = vld [vmem:[%s2994 + $0x14] sm:$0xf]
        %v3001 = vld [vmem:[%s2994 + $0x18] sm:$0xf]
        %v3002 = vld [vmem:[%s2994 + $0x1c] sm:$0xf]
        %v3003 = vld [vmem:[%s2994 + $0x20] sm:$0xf]
        %v3004 = vld [vmem:[%s2994 + $0x24] sm:$0xf]
        %v3005 = vld [vmem:[%s2994 + $0x28] sm:$0xf]
        %v3006 = vld [vmem:[%s2994 + $0x2c] sm:$0xf]
        %v3007 = vld [vmem:[%s2994 + $0x30] sm:$0xf]
        %v3008 = vld [vmem:[%s2994 + $0x34] sm:$0xf]
        %v3009 = vld [vmem:[%s2994 + $0x38] sm:$0xf]
        %v3010 = vld [vmem:[%s2994 + $0x3c] sm:$0xf]
        %v3027 = vunpack.c.l.b16 %v2995
        %v3028 = vunpack.c.l.b16 %v2996
        %v3029 = vunpack.c.l.b16 %v2997
        %v3030 = vunpack.c.l.b16 %v2998
        %v3031 = vunpack.c.l.b16 %v2999
        %v3032 = vunpack.c.l.b16 %v3000
        %v3033 = vunpack.c.l.b16 %v3001
        %v3034 = vunpack.c.l.b16 %v3002
        %v3035 = vunpack.c.l.b16 %v3003
        %v3036 = vunpack.c.l.b16 %v3004
        %v3037 = vunpack.c.l.b16 %v3005
        %v3038 = vunpack.c.l.b16 %v3006
        %v3039 = vunpack.c.l.b16 %v3007
        %v3040 = vunpack.c.l.b16 %v3008
        %v3041 = vunpack.c.l.b16 %v3009
        %v3042 = vunpack.c.l.b16 %v3010
        %v3043 = vpack.c.b16 %v3028, %v3027
        %v3044 = vpack.c.b16 %v3030, %v3029
        %v3045 = vpack.c.b16 %v3032, %v3031
        %v3046 = vpack.c.b16 %v3034, %v3033
        %v3047 = vpack.c.b16 %v3036, %v3035
        %v3048 = vpack.c.b16 %v3038, %v3037
        %v3049 = vpack.c.b16 %v3040, %v3039
        %v3050 = vpack.c.b16 %v3042, %v3041
        %3059 = vmatpush.bf16.msra.mxu0 %v3050
        %3060 = vmatpush.bf16.msra.mxu0 %v3049
        %3061 = vmatpush.bf16.msra.mxu0 %v3048
        %3062 = vmatpush.bf16.msra.mxu0 %v3047
        %3063 = vmatpush.bf16.msra.mxu0 %v3046
        %3064 = vmatpush.bf16.msra.mxu0 %v3045
        %3065 = vmatpush.bf16.msra.mxu0 %v3044
        %3066 = vmatpush.bf16.msra.mxu0 %v3043
        %3067 = vmatmul.bf16.gmra.mxu0 %v2993
        %v3068 = vpop.f32.mrf.mxu0
        %v3069 = vadd.f32 0.0, %v3068
        %v3070 = vpop.f32.mrf.mxu0
        %v3071 = vadd.f32 0.0, %v3070
        %3072 = vdwg.mxu0
        %v3073 = vadd.f32 %v2991, %v3069
        %v3074 = vadd.f32 %v2992, %v3071
        %v3075 = vrot.slane %v2570, 1
        %v3076 = vrot.slane %v2572, 1
        %v3077 = vsel %vm628, %v3075, %v3076
        %v3078 = vsel %vm628, %v3076, %v3075
        %v3079 = vpack.c.bf16 %v3077, %v3077
        %v3080 = vpack.c.bf16 %v3078, %v3078
        %v3081 = vsel %vm2793, 1, 0
        %v3082 = vsel %vm2794, 1, 0
        %vm3083 = vcmp.eq.s32.totalorder %v3081, 1
        %vm3084 = vcmp.eq.s32.totalorder %v3082, 1
        %vm3085 = vmpackc.low %vm3083, %vm3083
        %vm3086 = vmpackc.low %vm3084, %vm3084
        %v3087 = vsel %vm3085, %v3079, 0
        %v3088 = vsel %vm3086, %v3080, 0
        %s3089 = scalar_lea.vmem %s2, 896
        %v3090 = vld [vmem:[%s3089] sm:$0xf]
        %v3091 = vld [vmem:[%s3089 + $0x4] sm:$0xf]
        %v3092 = vld [vmem:[%s3089 + $0x8] sm:$0xf]
        %v3093 = vld [vmem:[%s3089 + $0xc] sm:$0xf]
        %v3094 = vld [vmem:[%s3089 + $0x10] sm:$0xf]
        %v3095 = vld [vmem:[%s3089 + $0x14] sm:$0xf]
        %v3096 = vld [vmem:[%s3089 + $0x18] sm:$0xf]
        %v3097 = vld [vmem:[%s3089 + $0x1c] sm:$0xf]
        %v3098 = vld [vmem:[%s3089 + $0x20] sm:$0xf]
        %v3099 = vld [vmem:[%s3089 + $0x24] sm:$0xf]
        %v3100 = vld [vmem:[%s3089 + $0x28] sm:$0xf]
        %v3101 = vld [vmem:[%s3089 + $0x2c] sm:$0xf]
        %v3102 = vld [vmem:[%s3089 + $0x30] sm:$0xf]
        %v3103 = vld [vmem:[%s3089 + $0x34] sm:$0xf]
        %v3104 = vld [vmem:[%s3089 + $0x38] sm:$0xf]
        %v3105 = vld [vmem:[%s3089 + $0x3c] sm:$0xf]
        %v3108 = vunpack.c.l.b16 %v3087
        %v3109 = vunpack.c.l.b16 %v3088
        %v3110 = vpack.c.b16 %v3109, %v3108
        %v3128 = vunpack.c.l.b16 %v3090
        %v3129 = vunpack.c.l.b16 %v3091
        %v3130 = vunpack.c.l.b16 %v3092
        %v3131 = vunpack.c.l.b16 %v3093
        %v3132 = vunpack.c.l.b16 %v3094
        %v3133 = vunpack.c.l.b16 %v3095
        %v3134 = vunpack.c.l.b16 %v3096
        %v3135 = vunpack.c.l.b16 %v3097
        %v3136 = vunpack.c.l.b16 %v3098
        %v3137 = vunpack.c.l.b16 %v3099
        %v3138 = vunpack.c.l.b16 %v3100
        %v3139 = vunpack.c.l.b16 %v3101
        %v3140 = vunpack.c.l.b16 %v3102
        %v3141 = vunpack.c.l.b16 %v3103
        %v3142 = vunpack.c.l.b16 %v3104
        %v3143 = vunpack.c.l.b16 %v3105
        %v3144 = vpack.c.b16 %v3129, %v3128
        %v3145 = vpack.c.b16 %v3131, %v3130
        %v3146 = vpack.c.b16 %v3133, %v3132
        %v3147 = vpack.c.b16 %v3135, %v3134
        %v3148 = vpack.c.b16 %v3137, %v3136
        %v3149 = vpack.c.b16 %v3139, %v3138
        %v3150 = vpack.c.b16 %v3141, %v3140
        %v3151 = vpack.c.b16 %v3143, %v3142
        %3160 = vmatpush.bf16.msra.mxu0 %v3151
        %3161 = vmatpush.bf16.msra.mxu0 %v3150
        %3162 = vmatpush.bf16.msra.mxu0 %v3149
        %3163 = vmatpush.bf16.msra.mxu0 %v3148
        %3164 = vmatpush.bf16.msra.mxu0 %v3147
        %3165 = vmatpush.bf16.msra.mxu0 %v3146
        %3166 = vmatpush.bf16.msra.mxu0 %v3145
        %3167 = vmatpush.bf16.msra.mxu0 %v3144
        %3168 = vmatmul.bf16.gmra.mxu0 %v3110
        %v3169 = vpop.f32.mrf.mxu0
        %v3170 = vadd.f32 0.0, %v3169
        %v3171 = vpop.f32.mrf.mxu0
        %v3172 = vadd.f32 0.0, %v3171
        %3173 = vdwg.mxu0
        %v3174 = vadd.f32 %v3073, %v3170
        %v3175 = vadd.f32 %v3074, %v3172
        %vm3176 = vcmp.lt.s32.totalorder %v2576, 3
        %vm3177 = vcmp.lt.s32.totalorder %v2577, 3
        %vm3178 = vmand %vm3176, %vm2589
        %vm3179 = vmand %vm3177, %vm2590
        %v3180 = vsel %vm3178, 1, 0
        %v3181 = vsel %vm3179, 1, 0
        %vm3182 = vcmp.eq.s32.totalorder %v3180, 1
        %vm3183 = vcmp.eq.s32.totalorder %v3181, 1
        %vm3184 = vmpackc.low %vm3182, %vm3182
        %vm3185 = vmpackc.low %vm3183, %vm3183
        %v3186 = vsel %vm3184, %v2586, 0
        %v3187 = vsel %vm3185, %v2585, 0
        %s3188 = scalar_lea.vmem %s2, 960
        %v3189 = vld [vmem:[%s3188] sm:$0xf]
        %v3190 = vld [vmem:[%s3188 + $0x4] sm:$0xf]
        %v3191 = vld [vmem:[%s3188 + $0x8] sm:$0xf]
        %v3192 = vld [vmem:[%s3188 + $0xc] sm:$0xf]
        %v3193 = vld [vmem:[%s3188 + $0x10] sm:$0xf]
        %v3194 = vld [vmem:[%s3188 + $0x14] sm:$0xf]
        %v3195 = vld [vmem:[%s3188 + $0x18] sm:$0xf]
        %v3196 = vld [vmem:[%s3188 + $0x1c] sm:$0xf]
        %v3197 = vld [vmem:[%s3188 + $0x20] sm:$0xf]
        %v3198 = vld [vmem:[%s3188 + $0x24] sm:$0xf]
        %v3199 = vld [vmem:[%s3188 + $0x28] sm:$0xf]
        %v3200 = vld [vmem:[%s3188 + $0x2c] sm:$0xf]
        %v3201 = vld [vmem:[%s3188 + $0x30] sm:$0xf]
        %v3202 = vld [vmem:[%s3188 + $0x34] sm:$0xf]
        %v3203 = vld [vmem:[%s3188 + $0x38] sm:$0xf]
        %v3204 = vld [vmem:[%s3188 + $0x3c] sm:$0xf]
        %v3207 = vunpack.c.l.b16 %v3186
        %v3208 = vunpack.c.l.b16 %v3187
        %v3209 = vpack.c.b16 %v3208, %v3207
        %v3227 = vunpack.c.l.b16 %v3189
        %v3228 = vunpack.c.l.b16 %v3190
        %v3229 = vunpack.c.l.b16 %v3191
        %v3230 = vunpack.c.l.b16 %v3192
        %v3231 = vunpack.c.l.b16 %v3193
        %v3232 = vunpack.c.l.b16 %v3194
        %v3233 = vunpack.c.l.b16 %v3195
        %v3234 = vunpack.c.l.b16 %v3196
        %v3235 = vunpack.c.l.b16 %v3197
        %v3236 = vunpack.c.l.b16 %v3198
        %v3237 = vunpack.c.l.b16 %v3199
        %v3238 = vunpack.c.l.b16 %v3200
        %v3239 = vunpack.c.l.b16 %v3201
        %v3240 = vunpack.c.l.b16 %v3202
        %v3241 = vunpack.c.l.b16 %v3203
        %v3242 = vunpack.c.l.b16 %v3204
        %v3243 = vpack.c.b16 %v3228, %v3227
        %v3244 = vpack.c.b16 %v3230, %v3229
        %v3245 = vpack.c.b16 %v3232, %v3231
        %v3246 = vpack.c.b16 %v3234, %v3233
        %v3247 = vpack.c.b16 %v3236, %v3235
        %v3248 = vpack.c.b16 %v3238, %v3237
        %v3249 = vpack.c.b16 %v3240, %v3239
        %v3250 = vpack.c.b16 %v3242, %v3241
        %3259 = vmatpush.bf16.msra.mxu0 %v3250
        %3260 = vmatpush.bf16.msra.mxu0 %v3249
        %3261 = vmatpush.bf16.msra.mxu0 %v3248
        %3262 = vmatpush.bf16.msra.mxu0 %v3247
        %3263 = vmatpush.bf16.msra.mxu0 %v3246
        %3264 = vmatpush.bf16.msra.mxu0 %v3245
        %3265 = vmatpush.bf16.msra.mxu0 %v3244
        %3266 = vmatpush.bf16.msra.mxu0 %v3243
        %3267 = vmatmul.bf16.gmra.mxu0 %v3209
        %v3268 = vpop.f32.mrf.mxu0
        %v3269 = vadd.f32 0.0, %v3268
        %v3270 = vpop.f32.mrf.mxu0
        %v3271 = vadd.f32 0.0, %v3270
        %3272 = vdwg.mxu0
        %v3273 = vadd.f32 %v3174, %v3269
        %v3274 = vadd.f32 %v3175, %v3271
        %v3275 = vsel %vm3176, 1, 0
        %v3276 = vsel %vm3177, 1, 0
        %vm3277 = vcmp.eq.s32.totalorder %v3275, 1
        %vm3278 = vcmp.eq.s32.totalorder %v3276, 1
        %vm3279 = vmpackc.low %vm3277, %vm3277
        %vm3280 = vmpackc.low %vm3278, %vm3278
        %v3281 = vsel %vm3279, %v2624, 0
        %v3282 = vsel %vm3280, %v2623, 0
        %s3283 = scalar_lea.vmem %s2, 1024
        %v3284 = vld [vmem:[%s3283] sm:$0xf]
        %v3285 = vld [vmem:[%s3283 + $0x4] sm:$0xf]
        %v3286 = vld [vmem:[%s3283 + $0x8] sm:$0xf]
        %v3287 = vld [vmem:[%s3283 + $0xc] sm:$0xf]
        %v3288 = vld [vmem:[%s3283 + $0x10] sm:$0xf]
        %v3289 = vld [vmem:[%s3283 + $0x14] sm:$0xf]
        %v3290 = vld [vmem:[%s3283 + $0x18] sm:$0xf]
        %v3291 = vld [vmem:[%s3283 + $0x1c] sm:$0xf]
        %v3292 = vld [vmem:[%s3283 + $0x20] sm:$0xf]
        %v3293 = vld [vmem:[%s3283 + $0x24] sm:$0xf]
        %v3294 = vld [vmem:[%s3283 + $0x28] sm:$0xf]
        %v3295 = vld [vmem:[%s3283 + $0x2c] sm:$0xf]
        %v3296 = vld [vmem:[%s3283 + $0x30] sm:$0xf]
        %v3297 = vld [vmem:[%s3283 + $0x34] sm:$0xf]
        %v3298 = vld [vmem:[%s3283 + $0x38] sm:$0xf]
        %v3299 = vld [vmem:[%s3283 + $0x3c] sm:$0xf]
        %v3302 = vunpack.c.l.b16 %v3281
        %v3303 = vunpack.c.l.b16 %v3282
        %v3304 = vpack.c.b16 %v3303, %v3302
        %v3322 = vunpack.c.l.b16 %v3284
        %v3323 = vunpack.c.l.b16 %v3285
        %v3324 = vunpack.c.l.b16 %v3286
        %v3325 = vunpack.c.l.b16 %v3287
        %v3326 = vunpack.c.l.b16 %v3288
        %v3327 = vunpack.c.l.b16 %v3289
        %v3328 = vunpack.c.l.b16 %v3290
        %v3329 = vunpack.c.l.b16 %v3291
        %v3330 = vunpack.c.l.b16 %v3292
        %v3331 = vunpack.c.l.b16 %v3293
        %v3332 = vunpack.c.l.b16 %v3294
        %v3333 = vunpack.c.l.b16 %v3295
        %v3334 = vunpack.c.l.b16 %v3296
        %v3335 = vunpack.c.l.b16 %v3297
        %v3336 = vunpack.c.l.b16 %v3298
        %v3337 = vunpack.c.l.b16 %v3299
        %v3338 = vpack.c.b16 %v3323, %v3322
        %v3339 = vpack.c.b16 %v3325, %v3324
        %v3340 = vpack.c.b16 %v3327, %v3326
        %v3341 = vpack.c.b16 %v3329, %v3328
        %v3342 = vpack.c.b16 %v3331, %v3330
        %v3343 = vpack.c.b16 %v3333, %v3332
        %v3344 = vpack.c.b16 %v3335, %v3334
        %v3345 = vpack.c.b16 %v3337, %v3336
        %3354 = vmatpush.bf16.msra.mxu0 %v3345
        %3355 = vmatpush.bf16.msra.mxu0 %v3344
        %3356 = vmatpush.bf16.msra.mxu0 %v3343
        %3357 = vmatpush.bf16.msra.mxu0 %v3342
        %3358 = vmatpush.bf16.msra.mxu0 %v3341
        %3359 = vmatpush.bf16.msra.mxu0 %v3340
        %3360 = vmatpush.bf16.msra.mxu0 %v3339
        %3361 = vmatpush.bf16.msra.mxu0 %v3338
        %3362 = vmatmul.bf16.gmra.mxu0 %v3304
        %v3363 = vpop.f32.mrf.mxu0
        %v3364 = vadd.f32 0.0, %v3363
        %v3365 = vpop.f32.mrf.mxu0
        %v3366 = vadd.f32 0.0, %v3365
        %3367 = vdwg.mxu0
        %v3368 = vadd.f32 %v3273, %v3364
        %v3369 = vadd.f32 %v3274, %v3366
        %vm3370 = vmand %vm3176, %vm2793
        %vm3371 = vmand %vm3177, %vm2794
        %v3372 = vsel %vm3370, 1, 0
        %v3373 = vsel %vm3371, 1, 0
        %vm3374 = vcmp.eq.s32.totalorder %v3372, 1
        %vm3375 = vcmp.eq.s32.totalorder %v3373, 1
        %vm3376 = vmpackc.low %vm3374, %vm3374
        %vm3377 = vmpackc.low %vm3375, %vm3375
        %v3378 = vsel %vm3376, %v2792, 0
        %v3379 = vsel %vm3377, %v2791, 0
        %s3380 = scalar_lea.vmem %s2, 1088
        %v3381 = vld [vmem:[%s3380] sm:$0xf]
        %v3382 = vld [vmem:[%s3380 + $0x4] sm:$0xf]
        %v3383 = vld [vmem:[%s3380 + $0x8] sm:$0xf]
        %v3384 = vld [vmem:[%s3380 + $0xc] sm:$0xf]
        %v3385 = vld [vmem:[%s3380 + $0x10] sm:$0xf]
        %v3386 = vld [vmem:[%s3380 + $0x14] sm:$0xf]
        %v3387 = vld [vmem:[%s3380 + $0x18] sm:$0xf]
        %v3388 = vld [vmem:[%s3380 + $0x1c] sm:$0xf]
        %v3389 = vld [vmem:[%s3380 + $0x20] sm:$0xf]
        %v3390 = vld [vmem:[%s3380 + $0x24] sm:$0xf]
        %v3391 = vld [vmem:[%s3380 + $0x28] sm:$0xf]
        %v3392 = vld [vmem:[%s3380 + $0x2c] sm:$0xf]
        %v3393 = vld [vmem:[%s3380 + $0x30] sm:$0xf]
        %v3394 = vld [vmem:[%s3380 + $0x34] sm:$0xf]
        %v3395 = vld [vmem:[%s3380 + $0x38] sm:$0xf]
        %v3396 = vld [vmem:[%s3380 + $0x3c] sm:$0xf]
        %v3399 = vunpack.c.l.b16 %v3378
        %v3400 = vunpack.c.l.b16 %v3379
        %v3401 = vpack.c.b16 %v3400, %v3399
        %v3419 = vunpack.c.l.b16 %v3381
        %v3420 = vunpack.c.l.b16 %v3382
        %v3421 = vunpack.c.l.b16 %v3383
        %v3422 = vunpack.c.l.b16 %v3384
        %v3423 = vunpack.c.l.b16 %v3385
        %v3424 = vunpack.c.l.b16 %v3386
        %v3425 = vunpack.c.l.b16 %v3387
        %v3426 = vunpack.c.l.b16 %v3388
        %v3427 = vunpack.c.l.b16 %v3389
        %v3428 = vunpack.c.l.b16 %v3390
        %v3429 = vunpack.c.l.b16 %v3391
        %v3430 = vunpack.c.l.b16 %v3392
        %v3431 = vunpack.c.l.b16 %v3393
        %v3432 = vunpack.c.l.b16 %v3394
        %v3433 = vunpack.c.l.b16 %v3395
        %v3434 = vunpack.c.l.b16 %v3396
        %v3435 = vpack.c.b16 %v3420, %v3419
        %v3436 = vpack.c.b16 %v3422, %v3421
        %v3437 = vpack.c.b16 %v3424, %v3423
        %v3438 = vpack.c.b16 %v3426, %v3425
        %v3439 = vpack.c.b16 %v3428, %v3427
        %v3440 = vpack.c.b16 %v3430, %v3429
        %v3441 = vpack.c.b16 %v3432, %v3431
        %v3442 = vpack.c.b16 %v3434, %v3433
        %3451 = vmatpush.bf16.msra.mxu0 %v3442
        %3452 = vmatpush.bf16.msra.mxu0 %v3441
        %3453 = vmatpush.bf16.msra.mxu0 %v3440
        %3454 = vmatpush.bf16.msra.mxu0 %v3439
        %3455 = vmatpush.bf16.msra.mxu0 %v3438
        %3456 = vmatpush.bf16.msra.mxu0 %v3437
        %3457 = vmatpush.bf16.msra.mxu0 %v3436
        %3458 = vmatpush.bf16.msra.mxu0 %v3435
        %3459 = vmatmul.bf16.gmra.mxu0 %v3401
        %v3460 = vpop.f32.mrf.mxu0
        %v3461 = vadd.f32 0.0, %v3460
        %v3462 = vpop.f32.mrf.mxu0
        %v3463 = vadd.f32 0.0, %v3462
        %3464 = vdwg.mxu0
        %v3465 = vadd.f32 %v3368, %v3461
        %v3466 = vadd.f32 %v3369, %v3463
        %s3467 = scalar_lea.vmem %s3, 2
        %v3468 = vld [vmem:[%s3467] sm:$0x1]
        %v3470 = vperm.slane %v3468, 0
        %v3472 = vadd.f32 %v3465, %v3470
        %v3473 = vadd.f32 %v3466, %v3470
        %v3474 = vmax.f32 %v3472, 0.0
        %v3475 = vmax.f32 %v3473, 0.0
        %v3476 = vrot.slane %v3474, 1
        %v3477 = vrot.slane %v3475, 1
        %v3478 = vsel %vm628, %v3476, %v3477
        %v3479 = vsel %vm628, %v3477, %v3476
        %v3480 = vmax.f32 %v3474, %v3478
        %v3481 = vmax.f32 %v3475, %v3479
        %v3482 = vrot.slane %v3480, 4
        %v3483 = vrot.slane %v3481, 4
        %v3484 = vsel %vm2620, %v3482, %v3483
        %v3485 = vsel %vm2620, %v3483, %v3482
        %v3486 = vmax.f32 %v3480, %v3484
        %v3487 = vmax.f32 %v3481, %v3485
        %v3488 = vpack.c.bf16 %v3486, %v3486
        %v3489 = vpack.c.bf16 %v3487, %v3487
        %v3490 = vld [vmem:[%s6] sm:$0xf]
        %v3493 = vunpack.c.l.b16 %v3488
        %v3494 = vunpack.c.l.b16 %v3489
        %v3495 = vpack.c.b16 %v3494, %v3493
        %vm3497 = vcmask 130048
        %v3499 = vsel %vm3497, %v3490, 0
        %3501 = vmatpush.bf16.msra.mxu0 0
        %3502 = vmatpush.bf16.msra.mxu0 0
        %3503 = vmatpush.bf16.msra.mxu0 0
        %3504 = vmatpush.bf16.msra.mxu0 0
        %3505 = vmatpush.bf16.msra.mxu0 0
        %3506 = vmatpush.bf16.msra.mxu0 0
        %3507 = vmatpush.bf16.msra.mxu0 0
        %3508 = vmatpush.bf16.msra.mxu0 %v3495
        %3509 = vmatmul.bf16.gmra.mxu0 %v3499
        %v3510 = vpop.f32.mrf.mxu0
        %v3511 = vadd.f32 0.0, %v3510
        %v3512 = vpop.f32.mrf.mxu0
        %3513 = vdwg.mxu0
        %v3514 = vand.u32 %v627, 7
        %v3515 = vshra.s32 %v3514, 1
        %v3516 = vand.u32 %v3514, 1
        %v3517 = vrot.slane %v3511, 5
        %v3518 = vpack.c.bf16 %v3517, %v3517
        %vm3519 = vcmp.ge.s32.totalorder %v3515, 1
        %vm3520 = vcmp.ge.s32.totalorder %v3516, 1
        %vm3521 = vmand %vm3519, %vm3520
        %v3522 = vsel %vm3521, 1, 0
        %vm3523 = vcmp.eq.s32.totalorder %v3522, 1
        %vm3524 = vmpackc.low %vm3523, %vm3523
        %v3525 = vsel %vm3524, %v3518, 0
        %s3526 = scalar_lea.vmem %s2, 1152
        %v3527 = vld [vmem:[%s3526] sm:$0xf]
        %v3528 = vld [vmem:[%s3526 + $0x4] sm:$0xf]
        %v3529 = vld [vmem:[%s3526 + $0x8] sm:$0xf]
        %v3530 = vld [vmem:[%s3526 + $0xc] sm:$0xf]
        %v3531 = vld [vmem:[%s3526 + $0x10] sm:$0xf]
        %v3532 = vld [vmem:[%s3526 + $0x14] sm:$0xf]
        %v3533 = vld [vmem:[%s3526 + $0x18] sm:$0xf]
        %v3534 = vld [vmem:[%s3526 + $0x1c] sm:$0xf]
        %v3535 = vld [vmem:[%s3526 + $0x20] sm:$0xf]
        %v3536 = vld [vmem:[%s3526 + $0x24] sm:$0xf]
        %v3537 = vld [vmem:[%s3526 + $0x28] sm:$0xf]
        %v3538 = vld [vmem:[%s3526 + $0x2c] sm:$0xf]
        %v3539 = vld [vmem:[%s3526 + $0x30] sm:$0xf]
        %v3540 = vld [vmem:[%s3526 + $0x34] sm:$0xf]
        %v3541 = vld [vmem:[%s3526 + $0x38] sm:$0xf]
        %v3542 = vld [vmem:[%s3526 + $0x3c] sm:$0xf]
        %v3543 = vrot.slane %v3511, 6
        %v3544 = vpack.c.bf16 %v3543, %v3543
        %v3545 = vsel %vm3519, 1, 0
        %vm3546 = vcmp.eq.s32.totalorder %v3545, 1
        %vm3547 = vmpackc.low %vm3546, %vm3546
        %v3548 = vsel %vm3547, %v3544, 0
        %s3549 = scalar_lea.vmem %s2, 1216
        %v3550 = vld [vmem:[%s3549] sm:$0xf]
        %v3551 = vld [vmem:[%s3549 + $0x4] sm:$0xf]
        %v3552 = vld [vmem:[%s3549 + $0x8] sm:$0xf]
        %v3553 = vld [vmem:[%s3549 + $0xc] sm:$0xf]
        %v3554 = vld [vmem:[%s3549 + $0x10] sm:$0xf]
        %v3555 = vld [vmem:[%s3549 + $0x14] sm:$0xf]
        %v3556 = vld [vmem:[%s3549 + $0x18] sm:$0xf]
        %v3557 = vld [vmem:[%s3549 + $0x1c] sm:$0xf]
        %v3558 = vld [vmem:[%s3549 + $0x20] sm:$0xf]
        %v3559 = vld [vmem:[%s3549 + $0x24] sm:$0xf]
        %v3560 = vld [vmem:[%s3549 + $0x28] sm:$0xf]
        %v3561 = vld [vmem:[%s3549 + $0x2c] sm:$0xf]
        %v3562 = vld [vmem:[%s3549 + $0x30] sm:$0xf]
        %v3563 = vld [vmem:[%s3549 + $0x34] sm:$0xf]
        %v3564 = vld [vmem:[%s3549 + $0x38] sm:$0xf]
        %v3565 = vld [vmem:[%s3549 + $0x3c] sm:$0xf]
        %v3582 = vunpack.c.l.b16 %v3550
        %v3583 = vunpack.c.l.b16 %v3551
        %v3584 = vunpack.c.l.b16 %v3552
        %v3585 = vunpack.c.l.b16 %v3553
        %v3586 = vunpack.c.l.b16 %v3554
        %v3587 = vunpack.c.l.b16 %v3555
        %v3588 = vunpack.c.l.b16 %v3556
        %v3589 = vunpack.c.l.b16 %v3557
        %v3590 = vunpack.c.l.b16 %v3558
        %v3591 = vunpack.c.l.b16 %v3559
        %v3592 = vunpack.c.l.b16 %v3560
        %v3593 = vunpack.c.l.b16 %v3561
        %v3594 = vunpack.c.l.b16 %v3562
        %v3595 = vunpack.c.l.b16 %v3563
        %v3596 = vunpack.c.l.b16 %v3564
        %v3597 = vunpack.c.l.b16 %v3565
        %v3598 = vpack.c.b16 %v3583, %v3582
        %v3599 = vpack.c.b16 %v3585, %v3584
        %v3600 = vpack.c.b16 %v3587, %v3586
        %v3601 = vpack.c.b16 %v3589, %v3588
        %v3602 = vpack.c.b16 %v3591, %v3590
        %v3603 = vpack.c.b16 %v3593, %v3592
        %v3604 = vpack.c.b16 %v3595, %v3594
        %v3605 = vpack.c.b16 %v3597, %v3596
        %3614 = vmatpush.bf16.msra.mxu0 %v3605
        %3615 = vmatpush.bf16.msra.mxu0 %v3604
        %3616 = vmatpush.bf16.msra.mxu0 %v3603
        %3617 = vmatpush.bf16.msra.mxu0 %v3602
        %3618 = vmatpush.bf16.msra.mxu0 %v3601
        %3619 = vmatpush.bf16.msra.mxu0 %v3600
        %3620 = vmatpush.bf16.msra.mxu0 %v3599
        %3621 = vmatpush.bf16.msra.mxu0 %v3598
        %3622 = vmatmul.bf16.gmra.mxu0 %v3548
        %v3623 = vpop.f32.mrf.mxu0
        %v3624 = vadd.f32 0.0, %v3623
        %v3625 = vpop.f32.mrf.mxu0
        %3626 = vdwg.mxu0
        %v3643 = vunpack.c.l.b16 %v3527
        %v3644 = vunpack.c.l.b16 %v3528
        %v3645 = vunpack.c.l.b16 %v3529
        %v3646 = vunpack.c.l.b16 %v3530
        %v3647 = vunpack.c.l.b16 %v3531
        %v3648 = vunpack.c.l.b16 %v3532
        %v3649 = vunpack.c.l.b16 %v3533
        %v3650 = vunpack.c.l.b16 %v3534
        %v3651 = vunpack.c.l.b16 %v3535
        %v3652 = vunpack.c.l.b16 %v3536
        %v3653 = vunpack.c.l.b16 %v3537
        %v3654 = vunpack.c.l.b16 %v3538
        %v3655 = vunpack.c.l.b16 %v3539
        %v3656 = vunpack.c.l.b16 %v3540
        %v3657 = vunpack.c.l.b16 %v3541
        %v3658 = vunpack.c.l.b16 %v3542
        %v3659 = vpack.c.b16 %v3644, %v3643
        %v3660 = vpack.c.b16 %v3646, %v3645
        %v3661 = vpack.c.b16 %v3648, %v3647
        %v3662 = vpack.c.b16 %v3650, %v3649
        %v3663 = vpack.c.b16 %v3652, %v3651
        %v3664 = vpack.c.b16 %v3654, %v3653
        %v3665 = vpack.c.b16 %v3656, %v3655
        %v3666 = vpack.c.b16 %v3658, %v3657
        %3675 = vmatpush.bf16.msra.mxu0 %v3666
        %3676 = vmatpush.bf16.msra.mxu0 %v3665
        %3677 = vmatpush.bf16.msra.mxu0 %v3664
        %3678 = vmatpush.bf16.msra.mxu0 %v3663
        %3679 = vmatpush.bf16.msra.mxu0 %v3662
        %3680 = vmatpush.bf16.msra.mxu0 %v3661
        %3681 = vmatpush.bf16.msra.mxu0 %v3660
        %3682 = vmatpush.bf16.msra.mxu0 %v3659
        %3683 = vmatmul.bf16.gmra.mxu0 %v3525
        %v3684 = vpop.f32.mrf.mxu0
        %v3685 = vadd.f32 %v3624, %v3684
        %v3686 = vpop.f32.mrf.mxu0
        %3687 = vdwg.mxu0
        %v3688 = vrot.slane %v3511, 7
        %v3689 = vpack.c.bf16 %v3688, %v3688
        %vm3690 = vcmp.lt.s32.totalorder %v3516, 1
        %vm3691 = vmand %vm3519, %vm3690
        %v3692 = vsel %vm3691, 1, 0
        %vm3693 = vcmp.eq.s32.totalorder %v3692, 1
        %vm3694 = vmpackc.low %vm3693, %vm3693
        %v3695 = vsel %vm3694, %v3689, 0
        %s3696 = scalar_lea.vmem %s2, 1280
        %v3697 = vld [vmem:[%s3696] sm:$0xf]
        %v3698 = vld [vmem:[%s3696 + $0x4] sm:$0xf]
        %v3699 = vld [vmem:[%s3696 + $0x8] sm:$0xf]
        %v3700 = vld [vmem:[%s3696 + $0xc] sm:$0xf]
        %v3701 = vld [vmem:[%s3696 + $0x10] sm:$0xf]
        %v3702 = vld [vmem:[%s3696 + $0x14] sm:$0xf]
        %v3703 = vld [vmem:[%s3696 + $0x18] sm:$0xf]
        %v3704 = vld [vmem:[%s3696 + $0x1c] sm:$0xf]
        %v3705 = vld [vmem:[%s3696 + $0x20] sm:$0xf]
        %v3706 = vld [vmem:[%s3696 + $0x24] sm:$0xf]
        %v3707 = vld [vmem:[%s3696 + $0x28] sm:$0xf]
        %v3708 = vld [vmem:[%s3696 + $0x2c] sm:$0xf]
        %v3709 = vld [vmem:[%s3696 + $0x30] sm:$0xf]
        %v3710 = vld [vmem:[%s3696 + $0x34] sm:$0xf]
        %v3711 = vld [vmem:[%s3696 + $0x38] sm:$0xf]
        %v3712 = vld [vmem:[%s3696 + $0x3c] sm:$0xf]
        %v3729 = vunpack.c.l.b16 %v3697
        %v3730 = vunpack.c.l.b16 %v3698
        %v3731 = vunpack.c.l.b16 %v3699
        %v3732 = vunpack.c.l.b16 %v3700
        %v3733 = vunpack.c.l.b16 %v3701
        %v3734 = vunpack.c.l.b16 %v3702
        %v3735 = vunpack.c.l.b16 %v3703
        %v3736 = vunpack.c.l.b16 %v3704
        %v3737 = vunpack.c.l.b16 %v3705
        %v3738 = vunpack.c.l.b16 %v3706
        %v3739 = vunpack.c.l.b16 %v3707
        %v3740 = vunpack.c.l.b16 %v3708
        %v3741 = vunpack.c.l.b16 %v3709
        %v3742 = vunpack.c.l.b16 %v3710
        %v3743 = vunpack.c.l.b16 %v3711
        %v3744 = vunpack.c.l.b16 %v3712
        %v3745 = vpack.c.b16 %v3730, %v3729
        %v3746 = vpack.c.b16 %v3732, %v3731
        %v3747 = vpack.c.b16 %v3734, %v3733
        %v3748 = vpack.c.b16 %v3736, %v3735
        %v3749 = vpack.c.b16 %v3738, %v3737
        %v3750 = vpack.c.b16 %v3740, %v3739
        %v3751 = vpack.c.b16 %v3742, %v3741
        %v3752 = vpack.c.b16 %v3744, %v3743
        %3761 = vmatpush.bf16.msra.mxu0 %v3752
        %3762 = vmatpush.bf16.msra.mxu0 %v3751
        %3763 = vmatpush.bf16.msra.mxu0 %v3750
        %3764 = vmatpush.bf16.msra.mxu0 %v3749
        %3765 = vmatpush.bf16.msra.mxu0 %v3748
        %3766 = vmatpush.bf16.msra.mxu0 %v3747
        %3767 = vmatpush.bf16.msra.mxu0 %v3746
        %3768 = vmatpush.bf16.msra.mxu0 %v3745
        %3769 = vmatmul.bf16.gmra.mxu0 %v3695
        %v3770 = vpop.f32.mrf.mxu0
        %v3771 = vadd.f32 0.0, %v3770
        %v3772 = vpop.f32.mrf.mxu0
        %3773 = vdwg.mxu0
        %v3774 = vadd.f32 %v3685, %v3771
        %v3775 = vsel %vm3520, 1, 0
        %vm3776 = vcmp.eq.s32.totalorder %v3775, 1
        %vm3777 = vmpackc.low %vm3776, %vm3776
        %v3778 = vsel %vm3777, %v3689, 0
        %s3779 = scalar_lea.vmem %s2, 1344
        %v3780 = vld [vmem:[%s3779] sm:$0xf]
        %v3781 = vld [vmem:[%s3779 + $0x4] sm:$0xf]
        %v3782 = vld [vmem:[%s3779 + $0x8] sm:$0xf]
        %v3783 = vld [vmem:[%s3779 + $0xc] sm:$0xf]
        %v3784 = vld [vmem:[%s3779 + $0x10] sm:$0xf]
        %v3785 = vld [vmem:[%s3779 + $0x14] sm:$0xf]
        %v3786 = vld [vmem:[%s3779 + $0x18] sm:$0xf]
        %v3787 = vld [vmem:[%s3779 + $0x1c] sm:$0xf]
        %v3788 = vld [vmem:[%s3779 + $0x20] sm:$0xf]
        %v3789 = vld [vmem:[%s3779 + $0x24] sm:$0xf]
        %v3790 = vld [vmem:[%s3779 + $0x28] sm:$0xf]
        %v3791 = vld [vmem:[%s3779 + $0x2c] sm:$0xf]
        %v3792 = vld [vmem:[%s3779 + $0x30] sm:$0xf]
        %v3793 = vld [vmem:[%s3779 + $0x34] sm:$0xf]
        %v3794 = vld [vmem:[%s3779 + $0x38] sm:$0xf]
        %v3795 = vld [vmem:[%s3779 + $0x3c] sm:$0xf]
        %v3812 = vunpack.c.l.b16 %v3780
        %v3813 = vunpack.c.l.b16 %v3781
        %v3814 = vunpack.c.l.b16 %v3782
        %v3815 = vunpack.c.l.b16 %v3783
        %v3816 = vunpack.c.l.b16 %v3784
        %v3817 = vunpack.c.l.b16 %v3785
        %v3818 = vunpack.c.l.b16 %v3786
        %v3819 = vunpack.c.l.b16 %v3787
        %v3820 = vunpack.c.l.b16 %v3788
        %v3821 = vunpack.c.l.b16 %v3789
        %v3822 = vunpack.c.l.b16 %v3790
        %v3823 = vunpack.c.l.b16 %v3791
        %v3824 = vunpack.c.l.b16 %v3792
        %v3825 = vunpack.c.l.b16 %v3793
        %v3826 = vunpack.c.l.b16 %v3794
        %v3827 = vunpack.c.l.b16 %v3795
        %v3828 = vpack.c.b16 %v3813, %v3812
        %v3829 = vpack.c.b16 %v3815, %v3814
        %v3830 = vpack.c.b16 %v3817, %v3816
        %v3831 = vpack.c.b16 %v3819, %v3818
        %v3832 = vpack.c.b16 %v3821, %v3820
        %v3833 = vpack.c.b16 %v3823, %v3822
        %v3834 = vpack.c.b16 %v3825, %v3824
        %v3835 = vpack.c.b16 %v3827, %v3826
        %3844 = vmatpush.bf16.msra.mxu0 %v3835
        %3845 = vmatpush.bf16.msra.mxu0 %v3834
        %3846 = vmatpush.bf16.msra.mxu0 %v3833
        %3847 = vmatpush.bf16.msra.mxu0 %v3832
        %3848 = vmatpush.bf16.msra.mxu0 %v3831
        %3849 = vmatpush.bf16.msra.mxu0 %v3830
        %3850 = vmatpush.bf16.msra.mxu0 %v3829
        %3851 = vmatpush.bf16.msra.mxu0 %v3828
        %3852 = vmatmul.bf16.gmra.mxu0 %v3778
        %v3853 = vpop.f32.mrf.mxu0
        %v3854 = vadd.f32 0.0, %v3853
        %v3855 = vpop.f32.mrf.mxu0
        %3856 = vdwg.mxu0
        %v3857 = vadd.f32 %v3774, %v3854
        %v3858 = vpack.c.bf16 %v3511, %v3511
        %s3859 = scalar_lea.vmem %s2, 1408
        %v3860 = vld [vmem:[%s3859] sm:$0xf]
        %v3861 = vld [vmem:[%s3859 + $0x4] sm:$0xf]
        %v3862 = vld [vmem:[%s3859 + $0x8] sm:$0xf]
        %v3863 = vld [vmem:[%s3859 + $0xc] sm:$0xf]
        %v3864 = vld [vmem:[%s3859 + $0x10] sm:$0xf]
        %v3865 = vld [vmem:[%s3859 + $0x14] sm:$0xf]
        %v3866 = vld [vmem:[%s3859 + $0x18] sm:$0xf]
        %v3867 = vld [vmem:[%s3859 + $0x1c] sm:$0xf]
        %v3868 = vld [vmem:[%s3859 + $0x20] sm:$0xf]
        %v3869 = vld [vmem:[%s3859 + $0x24] sm:$0xf]
        %v3870 = vld [vmem:[%s3859 + $0x28] sm:$0xf]
        %v3871 = vld [vmem:[%s3859 + $0x2c] sm:$0xf]
        %v3872 = vld [vmem:[%s3859 + $0x30] sm:$0xf]
        %v3873 = vld [vmem:[%s3859 + $0x34] sm:$0xf]
        %v3874 = vld [vmem:[%s3859 + $0x38] sm:$0xf]
        %v3875 = vld [vmem:[%s3859 + $0x3c] sm:$0xf]
        %v3892 = vunpack.c.l.b16 %v3860
        %v3893 = vunpack.c.l.b16 %v3861
        %v3894 = vunpack.c.l.b16 %v3862
        %v3895 = vunpack.c.l.b16 %v3863
        %v3896 = vunpack.c.l.b16 %v3864
        %v3897 = vunpack.c.l.b16 %v3865
        %v3898 = vunpack.c.l.b16 %v3866
        %v3899 = vunpack.c.l.b16 %v3867
        %v3900 = vunpack.c.l.b16 %v3868
        %v3901 = vunpack.c.l.b16 %v3869
        %v3902 = vunpack.c.l.b16 %v3870
        %v3903 = vunpack.c.l.b16 %v3871
        %v3904 = vunpack.c.l.b16 %v3872
        %v3905 = vunpack.c.l.b16 %v3873
        %v3906 = vunpack.c.l.b16 %v3874
        %v3907 = vunpack.c.l.b16 %v3875
        %v3908 = vpack.c.b16 %v3893, %v3892
        %v3909 = vpack.c.b16 %v3895, %v3894
        %v3910 = vpack.c.b16 %v3897, %v3896
        %v3911 = vpack.c.b16 %v3899, %v3898
        %v3912 = vpack.c.b16 %v3901, %v3900
        %v3913 = vpack.c.b16 %v3903, %v3902
        %v3914 = vpack.c.b16 %v3905, %v3904
        %v3915 = vpack.c.b16 %v3907, %v3906
        %3924 = vmatpush.bf16.msra.mxu0 %v3915
        %3925 = vmatpush.bf16.msra.mxu0 %v3914
        %3926 = vmatpush.bf16.msra.mxu0 %v3913
        %3927 = vmatpush.bf16.msra.mxu0 %v3912
        %3928 = vmatpush.bf16.msra.mxu0 %v3911
        %3929 = vmatpush.bf16.msra.mxu0 %v3910
        %3930 = vmatpush.bf16.msra.mxu0 %v3909
        %3931 = vmatpush.bf16.msra.mxu0 %v3908
        %3932 = vmatmul.bf16.gmra.mxu0 %v3858
        %v3933 = vpop.f32.mrf.mxu0
        %v3934 = vadd.f32 0.0, %v3933
        %v3935 = vpop.f32.mrf.mxu0
        %3936 = vdwg.mxu0
        %v3937 = vadd.f32 %v3857, %v3934
        %v3938 = vrot.slane %v3511, 1
        %v3939 = vpack.c.bf16 %v3938, %v3938
        %v3940 = vsel %vm3690, 1, 0
        %vm3941 = vcmp.eq.s32.totalorder %v3940, 1
        %vm3942 = vmpackc.low %vm3941, %vm3941
        %v3943 = vsel %vm3942, %v3939, 0
        %s3944 = scalar_lea.vmem %s2, 1472
        %v3945 = vld [vmem:[%s3944] sm:$0xf]
        %v3946 = vld [vmem:[%s3944 + $0x4] sm:$0xf]
        %v3947 = vld [vmem:[%s3944 + $0x8] sm:$0xf]
        %v3948 = vld [vmem:[%s3944 + $0xc] sm:$0xf]
        %v3949 = vld [vmem:[%s3944 + $0x10] sm:$0xf]
        %v3950 = vld [vmem:[%s3944 + $0x14] sm:$0xf]
        %v3951 = vld [vmem:[%s3944 + $0x18] sm:$0xf]
        %v3952 = vld [vmem:[%s3944 + $0x1c] sm:$0xf]
        %v3953 = vld [vmem:[%s3944 + $0x20] sm:$0xf]
        %v3954 = vld [vmem:[%s3944 + $0x24] sm:$0xf]
        %v3955 = vld [vmem:[%s3944 + $0x28] sm:$0xf]
        %v3956 = vld [vmem:[%s3944 + $0x2c] sm:$0xf]
        %v3957 = vld [vmem:[%s3944 + $0x30] sm:$0xf]
        %v3958 = vld [vmem:[%s3944 + $0x34] sm:$0xf]
        %v3959 = vld [vmem:[%s3944 + $0x38] sm:$0xf]
        %v3960 = vld [vmem:[%s3944 + $0x3c] sm:$0xf]
        %v3977 = vunpack.c.l.b16 %v3945
        %v3978 = vunpack.c.l.b16 %v3946
        %v3979 = vunpack.c.l.b16 %v3947
        %v3980 = vunpack.c.l.b16 %v3948
        %v3981 = vunpack.c.l.b16 %v3949
        %v3982 = vunpack.c.l.b16 %v3950
        %v3983 = vunpack.c.l.b16 %v3951
        %v3984 = vunpack.c.l.b16 %v3952
        %v3985 = vunpack.c.l.b16 %v3953
        %v3986 = vunpack.c.l.b16 %v3954
        %v3987 = vunpack.c.l.b16 %v3955
        %v3988 = vunpack.c.l.b16 %v3956
        %v3989 = vunpack.c.l.b16 %v3957
        %v3990 = vunpack.c.l.b16 %v3958
        %v3991 = vunpack.c.l.b16 %v3959
        %v3992 = vunpack.c.l.b16 %v3960
        %v3993 = vpack.c.b16 %v3978, %v3977
        %v3994 = vpack.c.b16 %v3980, %v3979
        %v3995 = vpack.c.b16 %v3982, %v3981
        %v3996 = vpack.c.b16 %v3984, %v3983
        %v3997 = vpack.c.b16 %v3986, %v3985
        %v3998 = vpack.c.b16 %v3988, %v3987
        %v3999 = vpack.c.b16 %v3990, %v3989
        %v4000 = vpack.c.b16 %v3992, %v3991
        %4009 = vmatpush.bf16.msra.mxu0 %v4000
        %4010 = vmatpush.bf16.msra.mxu0 %v3999
        %4011 = vmatpush.bf16.msra.mxu0 %v3998
        %4012 = vmatpush.bf16.msra.mxu0 %v3997
        %4013 = vmatpush.bf16.msra.mxu0 %v3996
        %4014 = vmatpush.bf16.msra.mxu0 %v3995
        %4015 = vmatpush.bf16.msra.mxu0 %v3994
        %4016 = vmatpush.bf16.msra.mxu0 %v3993
        %4017 = vmatmul.bf16.gmra.mxu0 %v3943
        %v4018 = vpop.f32.mrf.mxu0
        %v4019 = vadd.f32 0.0, %v4018
        %v4020 = vpop.f32.mrf.mxu0
        %4021 = vdwg.mxu0
        %v4022 = vadd.f32 %v3937, %v4019
        %vm4023 = vcmp.lt.s32.totalorder %v3515, 1
        %vm4024 = vmand %vm4023, %vm3520
        %v4025 = vsel %vm4024, 1, 0
        %vm4026 = vcmp.eq.s32.totalorder %v4025, 1
        %vm4027 = vmpackc.low %vm4026, %vm4026
        %v4028 = vsel %vm4027, %v3939, 0
        %s4029 = scalar_lea.vmem %s2, 1536
        %v4030 = vld [vmem:[%s4029] sm:$0xf]
        %v4031 = vld [vmem:[%s4029 + $0x4] sm:$0xf]
        %v4032 = vld [vmem:[%s4029 + $0x8] sm:$0xf]
        %v4033 = vld [vmem:[%s4029 + $0xc] sm:$0xf]
        %v4034 = vld [vmem:[%s4029 + $0x10] sm:$0xf]
        %v4035 = vld [vmem:[%s4029 + $0x14] sm:$0xf]
        %v4036 = vld [vmem:[%s4029 + $0x18] sm:$0xf]
        %v4037 = vld [vmem:[%s4029 + $0x1c] sm:$0xf]
        %v4038 = vld [vmem:[%s4029 + $0x20] sm:$0xf]
        %v4039 = vld [vmem:[%s4029 + $0x24] sm:$0xf]
        %v4040 = vld [vmem:[%s4029 + $0x28] sm:$0xf]
        %v4041 = vld [vmem:[%s4029 + $0x2c] sm:$0xf]
        %v4042 = vld [vmem:[%s4029 + $0x30] sm:$0xf]
        %v4043 = vld [vmem:[%s4029 + $0x34] sm:$0xf]
        %v4044 = vld [vmem:[%s4029 + $0x38] sm:$0xf]
        %v4045 = vld [vmem:[%s4029 + $0x3c] sm:$0xf]
        %v4062 = vunpack.c.l.b16 %v4030
        %v4063 = vunpack.c.l.b16 %v4031
        %v4064 = vunpack.c.l.b16 %v4032
        %v4065 = vunpack.c.l.b16 %v4033
        %v4066 = vunpack.c.l.b16 %v4034
        %v4067 = vunpack.c.l.b16 %v4035
        %v4068 = vunpack.c.l.b16 %v4036
        %v4069 = vunpack.c.l.b16 %v4037
        %v4070 = vunpack.c.l.b16 %v4038
        %v4071 = vunpack.c.l.b16 %v4039
        %v4072 = vunpack.c.l.b16 %v4040
        %v4073 = vunpack.c.l.b16 %v4041
        %v4074 = vunpack.c.l.b16 %v4042
        %v4075 = vunpack.c.l.b16 %v4043
        %v4076 = vunpack.c.l.b16 %v4044
        %v4077 = vunpack.c.l.b16 %v4045
        %v4078 = vpack.c.b16 %v4063, %v4062
        %v4079 = vpack.c.b16 %v4065, %v4064
        %v4080 = vpack.c.b16 %v4067, %v4066
        %v4081 = vpack.c.b16 %v4069, %v4068
        %v4082 = vpack.c.b16 %v4071, %v4070
        %v4083 = vpack.c.b16 %v4073, %v4072
        %v4084 = vpack.c.b16 %v4075, %v4074
        %v4085 = vpack.c.b16 %v4077, %v4076
        %4094 = vmatpush.bf16.msra.mxu0 %v4085
        %4095 = vmatpush.bf16.msra.mxu0 %v4084
        %4096 = vmatpush.bf16.msra.mxu0 %v4083
        %4097 = vmatpush.bf16.msra.mxu0 %v4082
        %4098 = vmatpush.bf16.msra.mxu0 %v4081
        %4099 = vmatpush.bf16.msra.mxu0 %v4080
        %4100 = vmatpush.bf16.msra.mxu0 %v4079
        %4101 = vmatpush.bf16.msra.mxu0 %v4078
        %4102 = vmatmul.bf16.gmra.mxu0 %v4028
        %v4103 = vpop.f32.mrf.mxu0
        %v4104 = vadd.f32 0.0, %v4103
        %v4105 = vpop.f32.mrf.mxu0
        %4106 = vdwg.mxu0
        %v4107 = vadd.f32 %v4022, %v4104
        %v4108 = vrot.slane %v3511, 2
        %v4109 = vpack.c.bf16 %v4108, %v4108
        %v4110 = vsel %vm4023, 1, 0
        %vm4111 = vcmp.eq.s32.totalorder %v4110, 1
        %vm4112 = vmpackc.low %vm4111, %vm4111
        %v4113 = vsel %vm4112, %v4109, 0
        %s4114 = scalar_lea.vmem %s2, 1600
        %v4115 = vld [vmem:[%s4114] sm:$0xf]
        %v4116 = vld [vmem:[%s4114 + $0x4] sm:$0xf]
        %v4117 = vld [vmem:[%s4114 + $0x8] sm:$0xf]
        %v4118 = vld [vmem:[%s4114 + $0xc] sm:$0xf]
        %v4119 = vld [vmem:[%s4114 + $0x10] sm:$0xf]
        %v4120 = vld [vmem:[%s4114 + $0x14] sm:$0xf]
        %v4121 = vld [vmem:[%s4114 + $0x18] sm:$0xf]
        %v4122 = vld [vmem:[%s4114 + $0x1c] sm:$0xf]
        %v4123 = vld [vmem:[%s4114 + $0x20] sm:$0xf]
        %v4124 = vld [vmem:[%s4114 + $0x24] sm:$0xf]
        %v4125 = vld [vmem:[%s4114 + $0x28] sm:$0xf]
        %v4126 = vld [vmem:[%s4114 + $0x2c] sm:$0xf]
        %v4127 = vld [vmem:[%s4114 + $0x30] sm:$0xf]
        %v4128 = vld [vmem:[%s4114 + $0x34] sm:$0xf]
        %v4129 = vld [vmem:[%s4114 + $0x38] sm:$0xf]
        %v4130 = vld [vmem:[%s4114 + $0x3c] sm:$0xf]
        %v4147 = vunpack.c.l.b16 %v4115
        %v4148 = vunpack.c.l.b16 %v4116
        %v4149 = vunpack.c.l.b16 %v4117
        %v4150 = vunpack.c.l.b16 %v4118
        %v4151 = vunpack.c.l.b16 %v4119
        %v4152 = vunpack.c.l.b16 %v4120
        %v4153 = vunpack.c.l.b16 %v4121
        %v4154 = vunpack.c.l.b16 %v4122
        %v4155 = vunpack.c.l.b16 %v4123
        %v4156 = vunpack.c.l.b16 %v4124
        %v4157 = vunpack.c.l.b16 %v4125
        %v4158 = vunpack.c.l.b16 %v4126
        %v4159 = vunpack.c.l.b16 %v4127
        %v4160 = vunpack.c.l.b16 %v4128
        %v4161 = vunpack.c.l.b16 %v4129
        %v4162 = vunpack.c.l.b16 %v4130
        %v4163 = vpack.c.b16 %v4148, %v4147
        %v4164 = vpack.c.b16 %v4150, %v4149
        %v4165 = vpack.c.b16 %v4152, %v4151
        %v4166 = vpack.c.b16 %v4154, %v4153
        %v4167 = vpack.c.b16 %v4156, %v4155
        %v4168 = vpack.c.b16 %v4158, %v4157
        %v4169 = vpack.c.b16 %v4160, %v4159
        %v4170 = vpack.c.b16 %v4162, %v4161
        %4179 = vmatpush.bf16.msra.mxu0 %v4170
        %4180 = vmatpush.bf16.msra.mxu0 %v4169
        %4181 = vmatpush.bf16.msra.mxu0 %v4168
        %4182 = vmatpush.bf16.msra.mxu0 %v4167
        %4183 = vmatpush.bf16.msra.mxu0 %v4166
        %4184 = vmatpush.bf16.msra.mxu0 %v4165
        %4185 = vmatpush.bf16.msra.mxu0 %v4164
        %4186 = vmatpush.bf16.msra.mxu0 %v4163
        %4187 = vmatmul.bf16.gmra.mxu0 %v4113
        %v4188 = vpop.f32.mrf.mxu0
        %v4189 = vadd.f32 0.0, %v4188
        %v4190 = vpop.f32.mrf.mxu0
        %4191 = vdwg.mxu0
        %v4192 = vadd.f32 %v4107, %v4189
        %v4193 = vrot.slane %v3511, 3
        %v4194 = vpack.c.bf16 %v4193, %v4193
        %vm4195 = vmand %vm4023, %vm3690
        %v4196 = vsel %vm4195, 1, 0
        %vm4197 = vcmp.eq.s32.totalorder %v4196, 1
        %vm4198 = vmpackc.low %vm4197, %vm4197
        %v4199 = vsel %vm4198, %v4194, 0
        %s4200 = scalar_lea.vmem %s2, 1664
        %v4201 = vld [vmem:[%s4200] sm:$0xf]
        %v4202 = vld [vmem:[%s4200 + $0x4] sm:$0xf]
        %v4203 = vld [vmem:[%s4200 + $0x8] sm:$0xf]
        %v4204 = vld [vmem:[%s4200 + $0xc] sm:$0xf]
        %v4205 = vld [vmem:[%s4200 + $0x10] sm:$0xf]
        %v4206 = vld [vmem:[%s4200 + $0x14] sm:$0xf]
        %v4207 = vld [vmem:[%s4200 + $0x18] sm:$0xf]
        %v4208 = vld [vmem:[%s4200 + $0x1c] sm:$0xf]
        %v4209 = vld [vmem:[%s4200 + $0x20] sm:$0xf]
        %v4210 = vld [vmem:[%s4200 + $0x24] sm:$0xf]
        %v4211 = vld [vmem:[%s4200 + $0x28] sm:$0xf]
        %v4212 = vld [vmem:[%s4200 + $0x2c] sm:$0xf]
        %v4213 = vld [vmem:[%s4200 + $0x30] sm:$0xf]
        %v4214 = vld [vmem:[%s4200 + $0x34] sm:$0xf]
        %v4215 = vld [vmem:[%s4200 + $0x38] sm:$0xf]
        %v4216 = vld [vmem:[%s4200 + $0x3c] sm:$0xf]
        %v4233 = vunpack.c.l.b16 %v4201
        %v4234 = vunpack.c.l.b16 %v4202
        %v4235 = vunpack.c.l.b16 %v4203
        %v4236 = vunpack.c.l.b16 %v4204
        %v4237 = vunpack.c.l.b16 %v4205
        %v4238 = vunpack.c.l.b16 %v4206
        %v4239 = vunpack.c.l.b16 %v4207
        %v4240 = vunpack.c.l.b16 %v4208
        %v4241 = vunpack.c.l.b16 %v4209
        %v4242 = vunpack.c.l.b16 %v4210
        %v4243 = vunpack.c.l.b16 %v4211
        %v4244 = vunpack.c.l.b16 %v4212
        %v4245 = vunpack.c.l.b16 %v4213
        %v4246 = vunpack.c.l.b16 %v4214
        %v4247 = vunpack.c.l.b16 %v4215
        %v4248 = vunpack.c.l.b16 %v4216
        %v4249 = vpack.c.b16 %v4234, %v4233
        %v4250 = vpack.c.b16 %v4236, %v4235
        %v4251 = vpack.c.b16 %v4238, %v4237
        %v4252 = vpack.c.b16 %v4240, %v4239
        %v4253 = vpack.c.b16 %v4242, %v4241
        %v4254 = vpack.c.b16 %v4244, %v4243
        %v4255 = vpack.c.b16 %v4246, %v4245
        %v4256 = vpack.c.b16 %v4248, %v4247
        %4265 = vmatpush.bf16.msra.mxu0 %v4256
        %4266 = vmatpush.bf16.msra.mxu0 %v4255
        %4267 = vmatpush.bf16.msra.mxu0 %v4254
        %4268 = vmatpush.bf16.msra.mxu0 %v4253
        %4269 = vmatpush.bf16.msra.mxu0 %v4252
        %4270 = vmatpush.bf16.msra.mxu0 %v4251
        %4271 = vmatpush.bf16.msra.mxu0 %v4250
        %4272 = vmatpush.bf16.msra.mxu0 %v4249
        %4273 = vmatmul.bf16.gmra.mxu0 %v4199
        %v4274 = vpop.f32.mrf.mxu0
        %v4275 = vadd.f32 0.0, %v4274
        %v4276 = vpop.f32.mrf.mxu0
        %4277 = vdwg.mxu0
        %v4278 = vadd.f32 %v4192, %v4275
        %s4279 = scalar_lea.vmem %s3, 3
        %v4280 = vld [vmem:[%s4279] sm:$0x1]
        %v4282 = vperm.slane %v4280, 0
        %v4284 = vadd.f32 %v4278, %v4282
        %v4285 = vmax.f32 %v4284, 0.0
        %vm4286 = vcmp.lt.s32.totalorder %v3514, 4
        %v4287 = vsel %vm4286, 1, 0
        %vm4288 = vcmp.eq.s32.totalorder %v4287, 1
        %v4289 = vsel %vm4288, %v4285, 0.0
        %v4290 = vrot.slane %v4289, 4
        %v4291 = vmax.f32 %v4289, %v4290
        %v4292 = vrot.slane %v4291, 2
        %v4293 = vmax.f32 %v4291, %v4292
        %v4294 = vrot.slane %v4293, 1
        %v4295 = vmax.f32 %v4293, %v4294
        %4296 = vst [vmem:[%s270] sm:$0x1] %v4295
        %s4297 = sand.u32 %s181, 1
        %s4298 = scalar_lea.sflag [#allocation3], %s4297
        %s4299 = sand.u32 %s181, 1
        %s4300 = scalar_lea.vmem [#allocation2], %s4299
        // Predicated region
        $region49: #{meta_template_forward.1} parent=47 // pred_check
          %p4301 = pneg %p191
        $region50: #{meta_template_forward.1} parent=47 // pred_check_branch
          %4303 = sbr.rel (%p4301) target = $region52
        $region51: #{meta_template_forward.1} parent=47 // pred_region
          %4305 = vsyncadd %s4298, 0
          %s4306 = scalar_lea.hbm %s7, %s21
          %s4308 = sshll.u32 %s4300, 4
          %s4309 = int_to_ptr.vmem [resolvable:$true] %s4308
          %s4310 = sshll.u32 %s4306, 4
          %s4311 = int_to_ptr.hbm [resolvable:$true] %s4310
          %4313 = dma.vmem_to_hbm [thread:$0]  %s4309, 16, %s4311, %s4298
        $region52: #{meta_template_forward.1} parent=47 // pred_fallthru
          _
      $region48: #{meta_template_forward.1} parent=5 // pred_fallthru
        _
      %p4314 = scmp.le.s32.totalorder 2, %s16
      // Predicated region
      $region53: #{meta_template_forward.1} parent=5 // pred_check
        %p4315 = pneg %p4314
      $region54: #{meta_template_forward.1} parent=5 // pred_check_branch
        %4317 = sbr.rel (%p4315) target = $region56
      $region55: #{meta_template_forward.1} parent=5 // pred_region
        %s4318 = ssub.s32 %s16, 2
        // Predicated region
        $region57: #{meta_template_forward.1} parent=55 // pred_check
          %p4319 = pneg %p197
        $region58: #{meta_template_forward.1} parent=55 // pred_check_branch
          %4321 = sbr.rel (%p4319) target = $region60
        $region59: #{meta_template_forward.1} parent=55 // pred_region
          %s4322 = sand.u32 %s182, 1
          %s4323 = scalar_lea.sflag [#allocation3], %s4322
          %s4324 = sand.u32 %s182, 1
          %s4325 = scalar_lea.vmem [#allocation2], %s4324
          %4327 = dma.done %s4323, 16
        $region60: #{meta_template_forward.1} parent=55 // pred_fallthru
          _
      $region56: #{meta_template_forward.1} parent=5 // pred_fallthru
        _
    $region6: #{meta_template_forward.1} parent=1 // loop_footer
      %s20 = sadd.s32 1, %s16
    $region7: #{meta_template_forward.1} parent=1 // loop_footer_branch
      %15 = sbr.rel target = $region3
    $region8: #{meta_template_forward.1} parent=1 // loop_exit
      _
    %4328 = vsyncpa [#allocation3], 1
    %s4329 = scalar_lea.sflag [#allocation3], 1
    %4330 = vsyncpa %s4329, 1

</llo_original>
